<compile_context>
chip_gen: v6e
topology: v6e:2x2x1
jax: 0.10.0
libtpu: 0.0.40
codegen_flags: <defaults>
</compile_context>

<pallas_src>
import jax
import jax.numpy as jnp
from jax.experimental import pallas as pl
from jax.experimental.pallas import tpu as pltpu

C_PAD = 128       # internal lane-dense channel width
BN_EPS = 1e-5     # matches torch.nn.BatchNorm1d default


def _round_up(x, m):
    return (x + m - 1) // m * m


def _pad2(w, rows, cols):
    out = jnp.zeros((rows, cols), jnp.float32)
    return out.at[: w.shape[0], : w.shape[1]].set(w.astype(jnp.float32))


# ---------------------------------------------------------------------------
# Fused kernel
# ---------------------------------------------------------------------------
def _make_kernel(*, nnz, tile, n_layers, ne_pad):
    L = n_layers
    T = tile
    inv_n = 1.0 / float(nnz)

    def kernel(x_ref, idxr_ref, idxc_ref,
               w1f_ref, w2f_ref, w1s_ref, w2s_ref, b_ref,
               wp_ref, bp_ref, wb_ref, bb_ref,
               o_ref,
               act_ref, sx_ref, sin_ref, sg_ref, sg2_ref,
               c_ref, mu_ref, istd_ref, ent_ref, cnt_ref):
        p = pl.program_id(0)            # phase: 0 .. L+1
        i = pl.program_id(1)            # nnz tile index
        nt = pl.num_programs(1)

        # ---------------- init (very first grid step) ----------------
        @pl.when((p == 0) & (i == 0))
        def _init():
            sx_ref[...] = jnp.zeros_like(sx_ref)
            sin_ref[...] = jnp.zeros_like(sin_ref)
            sg_ref[...] = jnp.zeros_like(sg_ref)
            sg2_ref[...] = jnp.zeros_like(sg2_ref)

        # ------ finalize stats of layer (p-1) at the start of phases 1..L ------
        @pl.when((i == 0) & (p >= 1) & (p <= L))
        def _finalize_layer():
            # rank-1 mean-over-nonzeros term, computed ONCE per layer and applied as
            # a broadcast bias row across all tiles.
            @pl.when(p == 1)
            def _():
                c_ref[...] = (jnp.dot(sx_ref[...] * inv_n, w2f_ref[...],
                                      preferred_element_type=jnp.float32)
                              + b_ref[0])
            @pl.when(p >= 2)
            def _():
                k = p - 1                               # layer being finalized
                c_ref[...] = (jnp.dot(sin_ref[...] * inv_n, w2s_ref[k - 1],
                                      preferred_element_type=jnp.float32)
                              + b_ref[k])
            mean_g = sg_ref[...] * inv_n
            var_g = jnp.maximum(sg2_ref[...] * inv_n - mean_g * mean_g, 0.0)
            mu_ref[...] = mean_g + c_ref[...]           # BatchNorm batch mean of H
            istd_ref[...] = jax.lax.rsqrt(var_g + BN_EPS)
            # reset streaming accumulators for the next layer
            sin_ref[...] = jnp.zeros_like(sin_ref)
            sg_ref[...] = jnp.zeros_like(sg_ref)
            sg2_ref[...] = jnp.zeros_like(sg2_ref)

        @pl.when((p == L) & (i == 0))
        def _init_pooling():
            ent_ref[...] = jnp.zeros_like(ent_ref)
            cnt_ref[...] = jnp.zeros_like(cnt_ref)

        # -------- phase 0: stream X, layer-0 matmul, accumulate stats --------
        @pl.when(p == 0)
        def _phase_first_layer():
            x = x_ref[...]                                   # (T, Cin), rows zero-padded
            g = jnp.dot(x, w1f_ref[...], preferred_element_type=jnp.float32)
            act_ref[i] = g
            sx_ref[...] += jnp.sum(x, axis=0, keepdims=True)
            sg_ref[...] += jnp.sum(g, axis=0, keepdims=True)
            sg2_ref[...] += jnp.sum(g * g, axis=0, keepdims=True)

        # -- phases 1..L-1: BN+ReLU of layer p-1, matmul of layer p, accumulate stats --
        @pl.when((p >= 1) & (p <= L - 1))
        def _phase_mid_layer():
            rows = jax.lax.broadcasted_iota(jnp.int32, (T, 1), 0) + i * T
            valid = (rows < nnz).astype(jnp.float32)         # mask padded nnz rows
            g_prev = act_ref[i]
            h = g_prev + c_ref[...]
            a = jnp.maximum((h - mu_ref[...]) * istd_ref[...], 0.0) * valid
            g = jnp.dot(a, w1s_ref[p - 1], preferred_element_type=jnp.float32)
            act_ref[i] = g
            sin_ref[...] += jnp.sum(a, axis=0, keepdims=True)
            sg_ref[...] += jnp.sum(g, axis=0, keepdims=True)
            sg2_ref[...] += jnp.sum(g * g, axis=0, keepdims=True)

        # -------- phase L: BN+ReLU of last layer + segment-mean entity pooling --------
        @pl.when(p == L)
        def _phase_pooling():
            rows = jax.lax.broadcasted_iota(jnp.int32, (T, 1), 0) + i * T
            valid = (rows < nnz).astype(jnp.float32)
            g_prev = act_ref[i]
            h = g_prev + c_ref[...]
            a = jnp.maximum((h - mu_ref[...]) * istd_ref[...], 0.0) * valid
            # in-register one-hot (n_entities, T) built from int32 row indices
            ent_iota = jax.lax.broadcasted_iota(jnp.int32, (ne_pad, T), 0)
            cols = jax.lax.broadcasted_iota(jnp.int32, (1, T), 1) + i * T
            validc = (cols < nnz).astype(jnp.float32)
            onehot_t = (ent_iota == idxr_ref[...]).astype(jnp.float32) * validc
            ent_ref[...] += jnp.dot(onehot_t, a, preferred_element_type=jnp.float32)
            cnt_ref[...] += jnp.sum(onehot_t, axis=1, keepdims=True)

            @pl.when(i == nt - 1)
            def _finalize_pooling():
                pooled = ent_ref[...] / jnp.maximum(cnt_ref[...], 1.0)
                ent_ref[...] = (jnp.dot(pooled, wp_ref[...],
                                        preferred_element_type=jnp.float32)
                                + bp_ref[...])

        # ------ phase L+1: broadcast entity embeddings back + output linear ------
        @pl.when(p == L + 1)
        def _phase_broadcast():
            lane_iota = jax.lax.broadcasted_iota(jnp.int32, (T, ne_pad), 1)
            onehot = (lane_iota == idxc_ref[...]).astype(jnp.float32)   # (T, n_ent)
            gathered = jnp.dot(onehot, ent_ref[...],
                               preferred_element_type=jnp.float32)      # (T, C_PAD)
            # lane-dense (T, C_PAD) store: unmasked vst instead of 4-lane masked store
            o_ref[...] = (jnp.dot(gathered, wb_ref[...],
                                  preferred_element_type=jnp.float32)
                          + bb_ref[...])

    return kernel


# ---------------------------------------------------------------------------
# Wrapper: pad/pack params, build BlockSpecs, launch the fused kernel
# ---------------------------------------------------------------------------
def sparse_matrix_autoencoder_forward(x, row_idx, params, n_entities, *, tile_rows=256):
    nnz, cin = x.shape
    L = len(params["equiv"])
    T = tile_rows
    nnz_pad = _round_up(nnz, T)
    n_tiles = nnz_pad // T
    ne_pad = _round_up(max(n_entities, 8), 8)

    # ----- pad parameters to lane-dense 128-wide internal layout (exact: zero pad) -----
    (w1_0, w2_0, b_0) = params["equiv"][0]
    w1f = _pad2(w1_0, cin, C_PAD)
    w2f = _pad2(w2_0, cin, C_PAD)
    if L > 1:
        w1s = jnp.stack([_pad2(w1, C_PAD, C_PAD) for (w1, _, _) in params["equiv"][1:]])
        w2s = jnp.stack([_pad2(w2, C_PAD, C_PAD) for (_, w2, _) in params["equiv"][1:]])
    else:
        w1s = jnp.zeros((1, C_PAD, C_PAD), jnp.float32)   # unused when L == 1
        w2s = jnp.zeros((1, C_PAD, C_PAD), jnp.float32)
    b_all = jnp.stack([_pad2(b, 1, C_PAD) for (_, _, b) in params["equiv"]])  # (L,1,C)
    wp = _pad2(params["wp"], C_PAD, C_PAD)
    bp = _pad2(params["bp"], 1, C_PAD)
    wb = _pad2(params["wb"], C_PAD, C_PAD)     # lane-dense output: pad cols to C_PAD
    bb = _pad2(params["bb"], 1, C_PAD)

    # ----- pad the nnz stream (padded rows are masked out of every statistic) -----
    x_pad = jnp.zeros((nnz_pad, cin), jnp.float32).at[:nnz].set(x.astype(jnp.float32))
    idx = jnp.zeros((nnz_pad,), jnp.int32).at[:nnz].set(row_idx.astype(jnp.int32))
    idx_row = idx.reshape(1, nnz_pad)     # row layout for the pooling scatter
    idx_col = idx.reshape(nnz_pad, 1)     # col layout for the broadcast gather

    n_phases = L + 2
    kernel = _make_kernel(nnz=nnz, tile=T, n_layers=L, ne_pad=ne_pad)

    def _pinned(shape):
        nd = len(shape)
        return pl.BlockSpec(shape, lambda *_, _nd=nd: (0,) * _nd)

    # stream tiles only during the phase that consumes them; pin block 0 otherwise
    x_spec = pl.BlockSpec((T, cin), lambda p, i: (jnp.where(p == 0, i, 0), 0))
    idxr_spec = pl.BlockSpec((1, T), lambda p, i: (0, jnp.where(p == L, i, 0)))
    idxc_spec = pl.BlockSpec((T, 1), lambda p, i: (jnp.where(p == L + 1, i, 0), 0))
    out_spec = pl.BlockSpec((T, C_PAD), lambda p, i: (jnp.where(p == L + 1, i, 0), 0))

    in_specs = [
        x_spec, idxr_spec, idxc_spec,
        _pinned(w1f.shape), _pinned(w2f.shape),
        _pinned(w1s.shape), _pinned(w2s.shape), _pinned(b_all.shape),
        _pinned(wp.shape), _pinned(bp.shape), _pinned(wb.shape), _pinned(bb.shape),
    ]

    scratch_shapes = [
        pltpu.VMEM((n_tiles, T, C_PAD), jnp.float32),   # resident per-layer pre-BN act
        pltpu.VMEM((1, cin), jnp.float32),              # col-sum of x (layer-0 input)
        pltpu.VMEM((1, C_PAD), jnp.float32),            # col-sum of layer input (k>=1)
        pltpu.VMEM((1, C_PAD), jnp.float32),            # col-sum of G
        pltpu.VMEM((1, C_PAD), jnp.float32),            # col-sum of G^2
        pltpu.VMEM((1, C_PAD), jnp.float32),            # c (mean-pool term + bias)
        pltpu.VMEM((1, C_PAD), jnp.float32),            # mu (BN batch mean)
        pltpu.VMEM((1, C_PAD), jnp.float32),            # 1/sqrt(var + eps)
        pltpu.VMEM((ne_pad, C_PAD), jnp.float32),       # entity accumulator / embeddings
        pltpu.VMEM((ne_pad, 1), jnp.float32),           # per-entity nnz counts
    ]

    flops = (2 * nnz_pad * cin * C_PAD
             + 2 * nnz_pad * C_PAD * C_PAD * max(L - 1, 0)
             + 2 * 2 * nnz_pad * ne_pad * C_PAD
             + 2 * ne_pad * C_PAD * C_PAD
             + 2 * nnz_pad * C_PAD * C_PAD)
    bytes_accessed = 4 * (x_pad.size + idx_row.size + idx_col.size + w1f.size
                          + w2f.size + w1s.size + w2s.size + b_all.size + wp.size
                          + bp.size + wb.size + bb.size + nnz_pad * C_PAD)

    y_pad = pl.pallas_call(
        kernel,
        out_shape=jax.ShapeDtypeStruct((nnz_pad, C_PAD), jnp.float32),
        grid=(n_phases, n_tiles),
        in_specs=in_specs,
        out_specs=out_spec,
        scratch_shapes=scratch_shapes,
        compiler_params=pltpu.CompilerParams(
            dimension_semantics=("arbitrary", "arbitrary"),
            vmem_limit_bytes=32 * 1024 * 1024,
        ),
        cost_estimate=pl.CostEstimate(flops=flops, transcendentals=L * C_PAD,
                                      bytes_accessed=bytes_accessed),
    )(x_pad, idx_row, idx_col, w1f, w2f, w1s, w2s, b_all, wp, bp, wb, bb)

    return y_pad[:nnz, :cin]


# ---------------------------------------------------------------------------
# Parameter init + pure-JAX reference (for correctness validation)
# ---------------------------------------------------------------------------
def init_params(key, input_channels, layers, embedding_dim):
    params = {"equiv": []}
    cin = input_channels
    for cout in layers:
        key, k1, k2 = jax.random.split(key, 3)
        w1 = jax.random.normal(k1, (cin, cout), jnp.float32) * (1.0 / jnp.sqrt(cin))
        w2 = jax.random.normal(k2, (cin, cout), jnp.float32) * (1.0 / jnp.sqrt(cin))
        b = jnp.zeros((1, cout), jnp.float32)
        params["equiv"].append((w1, w2, b))
        cin = cout
    key, kp, kb = jax.random.split(key, 3)
    params["wp"] = jax.random.normal(kp, (layers[-1], embedding_dim), jnp.float32) * (
        1.0 / jnp.sqrt(layers[-1]))
    params["bp"] = jnp.zeros((1, embedding_dim), jnp.float32)
    params["wb"] = jax.random.normal(kb, (embedding_dim, input_channels), jnp.float32) * (
        1.0 / jnp.sqrt(embedding_dim))
    params["bb"] = jnp.zeros((1, input_channels), jnp.float32)
    return params


def reference_forward(x, row_idx, params, n_entities):
    a = x
    for (w1, w2, b) in params["equiv"]:
        h = a @ w1 + jnp.mean(a, axis=0, keepdims=True) @ w2 + b
        mu = jnp.mean(h, axis=0, keepdims=True)
        var = jnp.mean((h - mu) ** 2, axis=0, keepdims=True)
        a = jnp.maximum((h - mu) * jax.lax.rsqrt(var + BN_EPS), 0.0)
    onehot = (row_idx[None, :] == jnp.arange(n_entities)[:, None]).astype(jnp.float32)
    counts = jnp.maximum(onehot.sum(axis=1, keepdims=True), 1.0)
    pooled = (onehot @ a) / counts
    emb = pooled @ params["wp"] + params["bp"]
    y = (onehot.T @ emb) @ params["wb"] + params["bb"]
    return y


if __name__ == "__main__":
    key = jax.random.PRNGKey(0)

    # synthetic schema: 1 entity type (8 entities), 1 relation (ent0, ent0)
    n_entities = 8
    nnz = 500                      # deliberately not a multiple of the tile size
    input_channels = 4
    layers = [32, 32, 32]
    embedding_dim = 16

    key, k_idx, k_val = jax.random.split(key, 3)
    row_idx = jax.random.randint(k_idx, (nnz,), 0, n_entities)          # row entity per nnz
    x = jax.random.normal(k_val, (nnz, input_channels), jnp.float32)    # sparse values
    params = init_params(key, input_channels, layers, embedding_dim)

    y = sparse_matrix_autoencoder_forward(x, row_idx, params, n_entities, tile_rows=256)
    y = jax.block_until_ready(y)

    y_ref = reference_forward(x, row_idx, params, n_entities)
    y_ref = jax.block_until_ready(y_ref)

    assert y.shape == (nnz, input_channels), y.shape
    assert bool(jnp.all(jnp.isfinite(y)))
    max_err = float(jnp.max(jnp.abs(y - y_ref)))
    assert max_err < 1e-2, f"kernel/reference mismatch, max abs err = {max_err}"
    print("KERNEL_OK")
</pallas_src>

<mosaic_0001>
module attributes {stable_mosaic.version = 11 : i64} {
  func.func @kernel(%arg0: i32, %arg1: i32, %arg2: memref<256x4xf32, #tpu.memory_space<vmem>>, %arg3: memref<1x256xi32, #tpu.memory_space<vmem>>, %arg4: memref<256x1xi32, #tpu.memory_space<vmem>>, %arg5: memref<4x128xf32, #tpu.memory_space<vmem>>, %arg6: memref<4x128xf32, #tpu.memory_space<vmem>>, %arg7: memref<2x128x128xf32, #tpu.memory_space<vmem>>, %arg8: memref<2x128x128xf32, #tpu.memory_space<vmem>>, %arg9: memref<3x1x128xf32, #tpu.memory_space<vmem>>, %arg10: memref<128x128xf32, #tpu.memory_space<vmem>>, %arg11: memref<1x128xf32, #tpu.memory_space<vmem>>, %arg12: memref<128x128xf32, #tpu.memory_space<vmem>>, %arg13: memref<1x128xf32, #tpu.memory_space<vmem>>, %arg14: memref<256x128xf32, #tpu.memory_space<vmem>>, %arg15: memref<2x256x128xf32, #tpu.memory_space<vmem>>, %arg16: memref<1x4xf32, #tpu.memory_space<vmem>>, %arg17: memref<1x128xf32, #tpu.memory_space<vmem>>, %arg18: memref<1x128xf32, #tpu.memory_space<vmem>>, %arg19: memref<1x128xf32, #tpu.memory_space<vmem>>, %arg20: memref<1x128xf32, #tpu.memory_space<vmem>>, %arg21: memref<1x128xf32, #tpu.memory_space<vmem>>, %arg22: memref<1x128xf32, #tpu.memory_space<vmem>>, %arg23: memref<8x128xf32, #tpu.memory_space<vmem>>, %arg24: memref<8x1xf32, #tpu.memory_space<vmem>>) attributes {dimension_semantics = [#tpu.dimension_semantics<arbitrary>, #tpu.dimension_semantics<arbitrary>], iteration_bounds = array<i64: 5, 2>, scalar_prefetch = 0 : i64, scratch_operands = 10 : i64, tpu.core_type = #tpu.core_type<tc>, window_params = [{transform_indices = @transform_0, window_bounds = array<i64: 256, 4>}, {transform_indices = @transform_1, window_bounds = array<i64: 1, 256>}, {transform_indices = @transform_2, window_bounds = array<i64: 256, 1>}, {pipeline_mode = #tpu.pipeline_mode<synchronous>, transform_indices = @transform_3, window_bounds = array<i64: 4, 128>}, {pipeline_mode = #tpu.pipeline_mode<synchronous>, transform_indices = @transform_4, window_bounds = array<i64: 4, 128>}, {pipeline_mode = #tpu.pipeline_mode<synchronous>, transform_indices = @transform_5, window_bounds = array<i64: 2, 128, 128>}, {pipeline_mode = #tpu.pipeline_mode<synchronous>, transform_indices = @transform_6, window_bounds = array<i64: 2, 128, 128>}, {pipeline_mode = #tpu.pipeline_mode<synchronous>, transform_indices = @transform_7, window_bounds = array<i64: 3, 1, 128>}, {pipeline_mode = #tpu.pipeline_mode<synchronous>, transform_indices = @transform_8, window_bounds = array<i64: 128, 128>}, {pipeline_mode = #tpu.pipeline_mode<synchronous>, transform_indices = @transform_9, window_bounds = array<i64: 1, 128>}, {pipeline_mode = #tpu.pipeline_mode<synchronous>, transform_indices = @transform_10, window_bounds = array<i64: 128, 128>}, {pipeline_mode = #tpu.pipeline_mode<synchronous>, transform_indices = @transform_11, window_bounds = array<i64: 1, 128>}, {transform_indices = @transform_12, window_bounds = array<i64: 256, 128>}]} {
    %c0_i32 = arith.constant 0 : i32
    %0 = arith.cmpi eq, %arg0, %c0_i32 : i32
    %c0_i32_0 = arith.constant 0 : i32
    %1 = arith.cmpi eq, %arg1, %c0_i32_0 : i32
    %2 = arith.andi %0, %1 : i1
    %3 = arith.extui %2 : i1 to i32
    %c0_i32_1 = arith.constant 0 : i32
    %4 = arith.cmpi ne, %3, %c0_i32_1 : i32
    scf.if %4 {
      %cst = arith.constant 0.000000e+00 : f32
      %31 = vector.broadcast %cst : f32 to vector<1x4xf32>
      %c0 = arith.constant 0 : index
      %c0_14 = arith.constant 0 : index
      %32 = vector.load %arg16[%c0, %c0_14] : memref<1x4xf32, #tpu.memory_space<vmem>>, vector<1x4xf32>
      tpu.vector_store %arg16[%c0, %c0_14], %31 {strides = array<i32>} : memref<1x4xf32, #tpu.memory_space<vmem>>, vector<1x4xf32>,
      %cst_15 = arith.constant 0.000000e+00 : f32
      %33 = vector.broadcast %cst_15 : f32 to vector<1x128xf32>
      %c0_16 = arith.constant 0 : index
      %c0_17 = arith.constant 0 : index
      %34 = vector.load %arg17[%c0_16, %c0_17] : memref<1x128xf32, #tpu.memory_space<vmem>>, vector<1x128xf32>
      tpu.vector_store %arg17[%c0_16, %c0_17], %33 {strides = array<i32>} : memref<1x128xf32, #tpu.memory_space<vmem>>, vector<1x128xf32>,
      %cst_18 = arith.constant 0.000000e+00 : f32
      %35 = vector.broadcast %cst_18 : f32 to vector<1x128xf32>
      %c0_19 = arith.constant 0 : index
      %c0_20 = arith.constant 0 : index
      %36 = vector.load %arg18[%c0_19, %c0_20] : memref<1x128xf32, #tpu.memory_space<vmem>>, vector<1x128xf32>
      tpu.vector_store %arg18[%c0_19, %c0_20], %35 {strides = array<i32>} : memref<1x128xf32, #tpu.memory_space<vmem>>, vector<1x128xf32>,
      %cst_21 = arith.constant 0.000000e+00 : f32
      %37 = vector.broadcast %cst_21 : f32 to vector<1x128xf32>
      %c0_22 = arith.constant 0 : index
      %c0_23 = arith.constant 0 : index
      %38 = vector.load %arg19[%c0_22, %c0_23] : memref<1x128xf32, #tpu.memory_space<vmem>>, vector<1x128xf32>
      tpu.vector_store %arg19[%c0_22, %c0_23], %37 {strides = array<i32>} : memref<1x128xf32, #tpu.memory_space<vmem>>, vector<1x128xf32>,
    } else {
    }
    %c0_i32_2 = arith.constant 0 : i32
    %5 = arith.cmpi eq, %arg1, %c0_i32_2 : i32
    %c1_i32 = arith.constant 1 : i32
    %6 = arith.cmpi sge, %arg0, %c1_i32 : i32
    %7 = arith.andi %5, %6 : i1
    %c3_i32 = arith.constant 3 : i32
    %8 = arith.cmpi sle, %arg0, %c3_i32 : i32
    %9 = arith.andi %7, %8 : i1
    %10 = arith.extui %9 : i1 to i32
    %c0_i32_3 = arith.constant 0 : i32
    %11 = arith.cmpi ne, %10, %c0_i32_3 : i32
    scf.if %11 {
      %c1_i32_14 = arith.constant 1 : i32
      %31 = arith.cmpi eq, %arg0, %c1_i32_14 : i32
      %32 = arith.extui %31 : i1 to i32
      %c0_i32_15 = arith.constant 0 : i32
      %33 = arith.cmpi ne, %32, %c0_i32_15 : i32
      scf.if %33 {
        %c0_39 = arith.constant 0 : index
        %c0_40 = arith.constant 0 : index
        %60 = vector.load %arg16[%c0_39, %c0_40] : memref<1x4xf32, #tpu.memory_space<vmem>>, vector<1x4xf32>
        %cst_41 = arith.constant 2.000000e-03 : f32
        %61 = vector.broadcast %cst_41 : f32 to vector<1x4xf32>
        %62 = arith.mulf %60, %61 : vector<1x4xf32>
        %c0_42 = arith.constant 0 : index
        %c0_43 = arith.constant 0 : index
        %63 = vector.load %arg6[%c0_42, %c0_43] : memref<4x128xf32, #tpu.memory_space<vmem>>, vector<4x128xf32>
        %cst_44 = arith.constant dense<0.000000e+00> : vector<1x128xf32>
        %64 = tpu.matmul %62, %63, %cst_44 {dimension_numbers = #tpu.dot_dimension_numbers<[1], [0], [0], [1], [0, 0, 1, 1], [], []>} : vector<1x4xf32>, vector<4x128xf32>, vector<1x128xf32> -> vector<1x128xf32>
        %c0_45 = arith.constant 0 : index
        %c0_46 = arith.constant 0 : index
        %c0_47 = arith.constant 0 : index
        %65 = vector.load %arg9[%c0_45, %c0_46, %c0_47] : memref<3x1x128xf32, #tpu.memory_space<vmem>>, vector<1x1x128xf32>
        %66 = vector.shape_cast %65 : vector<1x1x128xf32> to vector<1x128xf32>
        %67 = arith.addf %64, %66 : vector<1x128xf32>
        %c0_48 = arith.constant 0 : index
        %c0_49 = arith.constant 0 : index
        %68 = vector.load %arg20[%c0_48, %c0_49] : memref<1x128xf32, #tpu.memory_space<vmem>>, vector<1x128xf32>
        tpu.vector_store %arg20[%c0_48, %c0_49], %67 {strides = array<i32>} : memref<1x128xf32, #tpu.memory_space<vmem>>, vector<1x128xf32>,
      } else {
      }
      %c2_i32_16 = arith.constant 2 : i32
      %34 = arith.cmpi sge, %arg0, %c2_i32_16 : i32
      %35 = arith.extui %34 : i1 to i32
      %c0_i32_17 = arith.constant 0 : i32
      %36 = arith.cmpi ne, %35, %c0_i32_17 : i32
      scf.if %36 {
        %c1_i32_39 = arith.constant 1 : i32
        %60 = arith.subi %arg0, %c1_i32_39 : i32
        %c0_40 = arith.constant 0 : index
        %c0_41 = arith.constant 0 : index
        %61 = vector.load %arg17[%c0_40, %c0_41] : memref<1x128xf32, #tpu.memory_space<vmem>>, vector<1x128xf32>
        %cst_42 = arith.constant 2.000000e-03 : f32
        %62 = vector.broadcast %cst_42 : f32 to vector<1x128xf32>
        %63 = arith.mulf %61, %62 : vector<1x128xf32>
        %c1_i32_43 = arith.constant 1 : i32
        %64 = arith.subi %60, %c1_i32_43 : i32
        %65 = arith.index_cast %64 : i32 to index
        %c0_44 = arith.constant 0 : index
        %c0_45 = arith.constant 0 : index
        %66 = vector.load %arg8[%65, %c0_44, %c0_45] : memref<2x128x128xf32, #tpu.memory_space<vmem>>, vector<1x128x128xf32>
        %67 = vector.shape_cast %66 : vector<1x128x128xf32> to vector<128x128xf32>
        %cst_46 = arith.constant dense<0.000000e+00> : vector<1x128xf32>
        %68 = tpu.matmul %63, %67, %cst_46 {dimension_numbers = #tpu.dot_dimension_numbers<[1], [0], [0], [1], [0, 0, 1, 1], [], []>} : vector<1x128xf32>, vector<128x128xf32>, vector<1x128xf32> -> vector<1x128xf32>
        %69 = arith.index_cast %60 : i32 to index
        %c0_47 = arith.constant 0 : index
        %c0_48 = arith.constant 0 : index
        %70 = vector.load %arg9[%69, %c0_47, %c0_48] : memref<3x1x128xf32, #tpu.memory_space<vmem>>, vector<1x1x128xf32>
        %71 = vector.shape_cast %70 : vector<1x1x128xf32> to vector<1x128xf32>
        %72 = arith.addf %68, %71 : vector<1x128xf32>
        %c0_49 = arith.constant 0 : index
        %c0_50 = arith.constant 0 : index
        %73 = vector.load %arg20[%c0_49, %c0_50] : memref<1x128xf32, #tpu.memory_space<vmem>>, vector<1x128xf32>
        tpu.vector_store %arg20[%c0_49, %c0_50], %72 {strides = array<i32>} : memref<1x128xf32, #tpu.memory_space<vmem>>, vector<1x128xf32>,
      } else {
      }
      %c0 = arith.constant 0 : index
      %c0_18 = arith.constant 0 : index
      %37 = vector.load %arg18[%c0, %c0_18] : memref<1x128xf32, #tpu.memory_space<vmem>>, vector<1x128xf32>
      %cst = arith.constant 2.000000e-03 : f32
      %38 = vector.broadcast %cst : f32 to vector<1x128xf32>
      %39 = arith.mulf %37, %38 : vector<1x128xf32>
      %c0_19 = arith.constant 0 : index
      %c0_20 = arith.constant 0 : index
      %40 = vector.load %arg19[%c0_19, %c0_20] : memref<1x128xf32, #tpu.memory_space<vmem>>, vector<1x128xf32>
      %cst_21 = arith.constant 2.000000e-03 : f32
      %41 = vector.broadcast %cst_21 : f32 to vector<1x128xf32>
      %42 = arith.mulf %40, %41 : vector<1x128xf32>
      %43 = arith.mulf %39, %39 : vector<1x128xf32>
      %44 = arith.subf %42, %43 : vector<1x128xf32>
      %cst_22 = arith.constant 0.000000e+00 : f32
      %45 = vector.broadcast %cst_22 : f32 to vector<1x128xf32>
      %46 = arith.maximumf %44, %45 : vector<1x128xf32>
      %c0_23 = arith.constant 0 : index
      %c0_24 = arith.constant 0 : index
      %47 = vector.load %arg20[%c0_23, %c0_24] : memref<1x128xf32, #tpu.memory_space<vmem>>, vector<1x128xf32>
      %48 = arith.addf %39, %47 : vector<1x128xf32>
      %c0_25 = arith.constant 0 : index
      %c0_26 = arith.constant 0 : index
      %49 = vector.load %arg21[%c0_25, %c0_26] : memref<1x128xf32, #tpu.memory_space<vmem>>, vector<1x128xf32>
      tpu.vector_store %arg21[%c0_25, %c0_26], %48 {strides = array<i32>} : memref<1x128xf32, #tpu.memory_space<vmem>>, vector<1x128xf32>,
      %cst_27 = arith.constant 9.99999974E-6 : f32
      %50 = vector.broadcast %cst_27 : f32 to vector<1x128xf32>
      %51 = arith.addf %46, %50 : vector<1x128xf32>
      %52 = math.rsqrt %51 : vector<1x128xf32>
      %c0_28 = arith.constant 0 : index
      %c0_29 = arith.constant 0 : index
      %53 = vector.load %arg22[%c0_28, %c0_29] : memref<1x128xf32, #tpu.memory_space<vmem>>, vector<1x128xf32>
      tpu.vector_store %arg22[%c0_28, %c0_29], %52 {strides = array<i32>} : memref<1x128xf32, #tpu.memory_space<vmem>>, vector<1x128xf32>,
      %cst_30 = arith.constant 0.000000e+00 : f32
      %54 = vector.broadcast %cst_30 : f32 to vector<1x128xf32>
      %c0_31 = arith.constant 0 : index
      %c0_32 = arith.constant 0 : index
      %55 = vector.load %arg17[%c0_31, %c0_32] : memref<1x128xf32, #tpu.memory_space<vmem>>, vector<1x128xf32>
      tpu.vector_store %arg17[%c0_31, %c0_32], %54 {strides = array<i32>} : memref<1x128xf32, #tpu.memory_space<vmem>>, vector<1x128xf32>,
      %cst_33 = arith.constant 0.000000e+00 : f32
      %56 = vector.broadcast %cst_33 : f32 to vector<1x128xf32>
      %c0_34 = arith.constant 0 : index
      %c0_35 = arith.constant 0 : index
      %57 = vector.load %arg18[%c0_34, %c0_35] : memref<1x128xf32, #tpu.memory_space<vmem>>, vector<1x128xf32>
      tpu.vector_store %arg18[%c0_34, %c0_35], %56 {strides = array<i32>} : memref<1x128xf32, #tpu.memory_space<vmem>>, vector<1x128xf32>,
      %cst_36 = arith.constant 0.000000e+00 : f32
      %58 = vector.broadcast %cst_36 : f32 to vector<1x128xf32>
      %c0_37 = arith.constant 0 : index
      %c0_38 = arith.constant 0 : index
      %59 = vector.load %arg19[%c0_37, %c0_38] : memref<1x128xf32, #tpu.memory_space<vmem>>, vector<1x128xf32>
      tpu.vector_store %arg19[%c0_37, %c0_38], %58 {strides = array<i32>} : memref<1x128xf32, #tpu.memory_space<vmem>>, vector<1x128xf32>,
    } else {
    }
    %c3_i32_4 = arith.constant 3 : i32
    %12 = arith.cmpi eq, %arg0, %c3_i32_4 : i32
    %c0_i32_5 = arith.constant 0 : i32
    %13 = arith.cmpi eq, %arg1, %c0_i32_5 : i32
    %14 = arith.andi %12, %13 : i1
    %15 = arith.extui %14 : i1 to i32
    %c0_i32_6 = arith.constant 0 : i32
    %16 = arith.cmpi ne, %15, %c0_i32_6 : i32
    scf.if %16 {
      %cst = arith.constant 0.000000e+00 : f32
      %31 = vector.broadcast %cst : f32 to vector<8x128xf32>
      %c0 = arith.constant 0 : index
      %c0_14 = arith.constant 0 : index
      %32 = vector.load %arg23[%c0, %c0_14] : memref<8x128xf32, #tpu.memory_space<vmem>>, vector<8x128xf32>
      tpu.vector_store %arg23[%c0, %c0_14], %31 {strides = array<i32>} : memref<8x128xf32, #tpu.memory_space<vmem>>, vector<8x128xf32>,
      %cst_15 = arith.constant 0.000000e+00 : f32
      %33 = vector.broadcast %cst_15 : f32 to vector<8x1xf32>
      %c0_16 = arith.constant 0 : index
      %c0_17 = arith.constant 0 : index
      %34 = vector.load %arg24[%c0_16, %c0_17] : memref<8x1xf32, #tpu.memory_space<vmem>>, vector<8x1xf32>
      tpu.vector_store %arg24[%c0_16, %c0_17], %33 {strides = array<i32>} : memref<8x1xf32, #tpu.memory_space<vmem>>, vector<8x1xf32>,
    } else {
    }
    %c0_i32_7 = arith.constant 0 : i32
    %17 = arith.cmpi eq, %arg0, %c0_i32_7 : i32
    %18 = arith.extui %17 : i1 to i32
    %c0_i32_8 = arith.constant 0 : i32
    %19 = arith.cmpi ne, %18, %c0_i32_8 : i32
    scf.if %19 {
      %c0 = arith.constant 0 : index
      %c0_14 = arith.constant 0 : index
      %31 = vector.load %arg2[%c0, %c0_14] : memref<256x4xf32, #tpu.memory_space<vmem>>, vector<256x4xf32>
      %c0_15 = arith.constant 0 : index
      %c0_16 = arith.constant 0 : index
      %32 = vector.load %arg5[%c0_15, %c0_16] : memref<4x128xf32, #tpu.memory_space<vmem>>, vector<4x128xf32>
      %cst = arith.constant dense<0.000000e+00> : vector<256x128xf32>
      %33 = tpu.matmul %31, %32, %cst {dimension_numbers = #tpu.dot_dimension_numbers<[1], [0], [0], [1], [0, 0, 1, 1], [], []>} : vector<256x4xf32>, vector<4x128xf32>, vector<256x128xf32> -> vector<256x128xf32>
      %34 = arith.index_cast %arg1 : i32 to index
      %c0_17 = arith.constant 0 : index
      %c0_18 = arith.constant 0 : index
      %35 = vector.load %arg15[%34, %c0_17, %c0_18] : memref<2x256x128xf32, #tpu.memory_space<vmem>>, vector<1x256x128xf32>
      %36 = vector.shape_cast %35 : vector<1x256x128xf32> to vector<256x128xf32>
      %37 = vector.shape_cast %33 : vector<256x128xf32> to vector<1x256x128xf32>
      tpu.vector_store %arg15[%34, %c0_17, %c0_18], %37 {strides = array<i32>} : memref<2x256x128xf32, #tpu.memory_space<vmem>>, vector<1x256x128xf32>,
      %c0_19 = arith.constant 0 : index
      %c0_20 = arith.constant 0 : index
      %38 = vector.load %arg16[%c0_19, %c0_20] : memref<1x4xf32, #tpu.memory_space<vmem>>, vector<1x4xf32>
      %cst_21 = arith.constant dense<0.000000e+00> : vector<4xf32>
      %39 = vector.multi_reduction <add>, %31, %cst_21 [0] : vector<256x4xf32> to vector<4xf32>
      %40 = vector.shape_cast %39 : vector<4xf32> to vector<1x4xf32>
      %41 = arith.addf %38, %40 : vector<1x4xf32>
      %c0_22 = arith.constant 0 : index
      %c0_23 = arith.constant 0 : index
      %42 = vector.load %arg16[%c0_22, %c0_23] : memref<1x4xf32, #tpu.memory_space<vmem>>, vector<1x4xf32>
      tpu.vector_store %arg16[%c0_22, %c0_23], %41 {strides = array<i32>} : memref<1x4xf32, #tpu.memory_space<vmem>>, vector<1x4xf32>,
      %c0_24 = arith.constant 0 : index
      %c0_25 = arith.constant 0 : index
      %43 = vector.load %arg18[%c0_24, %c0_25] : memref<1x128xf32, #tpu.memory_space<vmem>>, vector<1x128xf32>
      %cst_26 = arith.constant dense<0.000000e+00> : vector<128xf32>
      %44 = vector.multi_reduction <add>, %33, %cst_26 [0] : vector<256x128xf32> to vector<128xf32>
      %45 = vector.shape_cast %44 : vector<128xf32> to vector<1x128xf32>
      %46 = arith.addf %43, %45 : vector<1x128xf32>
      %c0_27 = arith.constant 0 : index
      %c0_28 = arith.constant 0 : index
      %47 = vector.load %arg18[%c0_27, %c0_28] : memref<1x128xf32, #tpu.memory_space<vmem>>, vector<1x128xf32>
      tpu.vector_store %arg18[%c0_27, %c0_28], %46 {strides = array<i32>} : memref<1x128xf32, #tpu.memory_space<vmem>>, vector<1x128xf32>,
      %c0_29 = arith.constant 0 : index
      %c0_30 = arith.constant 0 : index
      %48 = vector.load %arg19[%c0_29, %c0_30] : memref<1x128xf32, #tpu.memory_space<vmem>>, vector<1x128xf32>
      %49 = arith.mulf %33, %33 : vector<256x128xf32>
      %cst_31 = arith.constant dense<0.000000e+00> : vector<128xf32>
      %50 = vector.multi_reduction <add>, %49, %cst_31 [0] : vector<256x128xf32> to vector<128xf32>
      %51 = vector.shape_cast %50 : vector<128xf32> to vector<1x128xf32>
      %52 = arith.addf %48, %51 : vector<1x128xf32>
      %c0_32 = arith.constant 0 : index
      %c0_33 = arith.constant 0 : index
      %53 = vector.load %arg19[%c0_32, %c0_33] : memref<1x128xf32, #tpu.memory_space<vmem>>, vector<1x128xf32>
      tpu.vector_store %arg19[%c0_32, %c0_33], %52 {strides = array<i32>} : memref<1x128xf32, #tpu.memory_space<vmem>>, vector<1x128xf32>,
    } else {
    }
    %c1_i32_9 = arith.constant 1 : i32
    %20 = arith.cmpi sge, %arg0, %c1_i32_9 : i32
    %c2_i32 = arith.constant 2 : i32
    %21 = arith.cmpi sle, %arg0, %c2_i32 : i32
    %22 = arith.andi %20, %21 : i1
    %23 = arith.extui %22 : i1 to i32
    %c0_i32_10 = arith.constant 0 : i32
    %24 = arith.cmpi ne, %23, %c0_i32_10 : i32
    scf.if %24 {
      %31 = tpu.iota {dimensions = array<i32: 0>} : vector<256x1xi32>
      %c256_i32 = arith.constant 256 : i32
      %32 = arith.muli %arg1, %c256_i32 : i32
      %33 = vector.broadcast %32 : i32 to vector<256x1xi32>
      %34 = arith.addi %31, %33 : vector<256x1xi32>
      %c500_i32 = arith.constant 500 : i32
      %35 = vector.broadcast %c500_i32 : i32 to vector<256x1xi32>
      %36 = arith.cmpi slt, %34, %35 : vector<256x1xi32>
      %37 = arith.extui %36 : vector<256x1xi1> to vector<256x1xi32>
      %38 = arith.sitofp %37 : vector<256x1xi32> to vector<256x1xf32>
      %39 = arith.index_cast %arg1 : i32 to index
      %c0 = arith.constant 0 : index
      %c0_14 = arith.constant 0 : index
      %40 = vector.load %arg15[%39, %c0, %c0_14] : memref<2x256x128xf32, #tpu.memory_space<vmem>>, vector<1x256x128xf32>
      %41 = vector.shape_cast %40 : vector<1x256x128xf32> to vector<256x128xf32>
      %c0_15 = arith.constant 0 : index
      %c0_16 = arith.constant 0 : index
      %42 = vector.load %arg20[%c0_15, %c0_16] : memref<1x128xf32, #tpu.memory_space<vmem>>, vector<1x128xf32>
      %43 = vector.broadcast %42 : vector<1x128xf32> to vector<256x128xf32>
      %44 = arith.addf %41, %43 : vector<256x128xf32>
      %c0_17 = arith.constant 0 : index
      %c0_18 = arith.constant 0 : index
      %45 = vector.load %arg21[%c0_17, %c0_18] : memref<1x128xf32, #tpu.memory_space<vmem>>, vector<1x128xf32>
      %46 = vector.broadcast %45 : vector<1x128xf32> to vector<256x128xf32>
      %47 = arith.subf %44, %46 : vector<256x128xf32>
      %c0_19 = arith.constant 0 : index
      %c0_20 = arith.constant 0 : index
      %48 = vector.load %arg22[%c0_19, %c0_20] : memref<1x128xf32, #tpu.memory_space<vmem>>, vector<1x128xf32>
      %49 = vector.broadcast %48 : vector<1x128xf32> to vector<256x128xf32>
      %50 = arith.mulf %47, %49 : vector<256x128xf32>
      %cst = arith.constant 0.000000e+00 : f32
      %51 = vector.broadcast %cst : f32 to vector<256x128xf32>
      %52 = arith.maximumf %50, %51 : vector<256x128xf32>
      %53 = vector.broadcast %38 : vector<256x1xf32> to vector<256x128xf32>
      %54 = arith.mulf %52, %53 : vector<256x128xf32>
      %c1_i32_21 = arith.constant 1 : i32
      %55 = arith.subi %arg0, %c1_i32_21 : i32
      %56 = arith.index_cast %55 : i32 to index
      %c0_22 = arith.constant 0 : index
      %c0_23 = arith.constant 0 : index
      %57 = vector.load %arg7[%56, %c0_22, %c0_23] : memref<2x128x128xf32, #tpu.memory_space<vmem>>, vector<1x128x128xf32>
      %58 = vector.shape_cast %57 : vector<1x128x128xf32> to vector<128x128xf32>
      %cst_24 = arith.constant dense<0.000000e+00> : vector<256x128xf32>
      %59 = tpu.matmul %54, %58, %cst_24 {dimension_numbers = #tpu.dot_dimension_numbers<[1], [0], [0], [1], [0, 0, 1, 1], [], []>} : vector<256x128xf32>, vector<128x128xf32>, vector<256x128xf32> -> vector<256x128xf32>
      %60 = arith.index_cast %arg1 : i32 to index
      %c0_25 = arith.constant 0 : index
      %c0_26 = arith.constant 0 : index
      %61 = vector.load %arg15[%60, %c0_25, %c0_26] : memref<2x256x128xf32, #tpu.memory_space<vmem>>, vector<1x256x128xf32>
      %62 = vector.shape_cast %61 : vector<1x256x128xf32> to vector<256x128xf32>
      %63 = vector.shape_cast %59 : vector<256x128xf32> to vector<1x256x128xf32>
      tpu.vector_store %arg15[%60, %c0_25, %c0_26], %63 {strides = array<i32>} : memref<2x256x128xf32, #tpu.memory_space<vmem>>, vector<1x256x128xf32>,
      %c0_27 = arith.constant 0 : index
      %c0_28 = arith.constant 0 : index
      %64 = vector.load %arg17[%c0_27, %c0_28] : memref<1x128xf32, #tpu.memory_space<vmem>>, vector<1x128xf32>
      %cst_29 = arith.constant dense<0.000000e+00> : vector<128xf32>
      %65 = vector.multi_reduction <add>, %54, %cst_29 [0] : vector<256x128xf32> to vector<128xf32>
      %66 = vector.shape_cast %65 : vector<128xf32> to vector<1x128xf32>
      %67 = arith.addf %64, %66 : vector<1x128xf32>
      %c0_30 = arith.constant 0 : index
      %c0_31 = arith.constant 0 : index
      %68 = vector.load %arg17[%c0_30, %c0_31] : memref<1x128xf32, #tpu.memory_space<vmem>>, vector<1x128xf32>
      tpu.vector_store %arg17[%c0_30, %c0_31], %67 {strides = array<i32>} : memref<1x128xf32, #tpu.memory_space<vmem>>, vector<1x128xf32>,
      %c0_32 = arith.constant 0 : index
      %c0_33 = arith.constant 0 : index
      %69 = vector.load %arg18[%c0_32, %c0_33] : memref<1x128xf32, #tpu.memory_space<vmem>>, vector<1x128xf32>
      %cst_34 = arith.constant dense<0.000000e+00> : vector<128xf32>
      %70 = vector.multi_reduction <add>, %59, %cst_34 [0] : vector<256x128xf32> to vector<128xf32>
      %71 = vector.shape_cast %70 : vector<128xf32> to vector<1x128xf32>
      %72 = arith.addf %69, %71 : vector<1x128xf32>
      %c0_35 = arith.constant 0 : index
      %c0_36 = arith.constant 0 : index
      %73 = vector.load %arg18[%c0_35, %c0_36] : memref<1x128xf32, #tpu.memory_space<vmem>>, vector<1x128xf32>
      tpu.vector_store %arg18[%c0_35, %c0_36], %72 {strides = array<i32>} : memref<1x128xf32, #tpu.memory_space<vmem>>, vector<1x128xf32>,
      %c0_37 = arith.constant 0 : index
      %c0_38 = arith.constant 0 : index
      %74 = vector.load %arg19[%c0_37, %c0_38] : memref<1x128xf32, #tpu.memory_space<vmem>>, vector<1x128xf32>
      %75 = arith.mulf %59, %59 : vector<256x128xf32>
      %cst_39 = arith.constant dense<0.000000e+00> : vector<128xf32>
      %76 = vector.multi_reduction <add>, %75, %cst_39 [0] : vector<256x128xf32> to vector<128xf32>
      %77 = vector.shape_cast %76 : vector<128xf32> to vector<1x128xf32>
      %78 = arith.addf %74, %77 : vector<1x128xf32>
      %c0_40 = arith.constant 0 : index
      %c0_41 = arith.constant 0 : index
      %79 = vector.load %arg19[%c0_40, %c0_41] : memref<1x128xf32, #tpu.memory_space<vmem>>, vector<1x128xf32>
      tpu.vector_store %arg19[%c0_40, %c0_41], %78 {strides = array<i32>} : memref<1x128xf32, #tpu.memory_space<vmem>>, vector<1x128xf32>,
    } else {
    }
    %c3_i32_11 = arith.constant 3 : i32
    %25 = arith.cmpi eq, %arg0, %c3_i32_11 : i32
    %26 = arith.extui %25 : i1 to i32
    %c0_i32_12 = arith.constant 0 : i32
    %27 = arith.cmpi ne, %26, %c0_i32_12 : i32
    scf.if %27 {
      %31 = tpu.iota {dimensions = array<i32: 0>} : vector<256x1xi32>
      %c256_i32 = arith.constant 256 : i32
      %32 = arith.muli %arg1, %c256_i32 : i32
      %33 = vector.broadcast %32 : i32 to vector<256x1xi32>
      %34 = arith.addi %31, %33 : vector<256x1xi32>
      %c500_i32 = arith.constant 500 : i32
      %35 = vector.broadcast %c500_i32 : i32 to vector<256x1xi32>
      %36 = arith.cmpi slt, %34, %35 : vector<256x1xi32>
      %37 = arith.extui %36 : vector<256x1xi1> to vector<256x1xi32>
      %38 = arith.sitofp %37 : vector<256x1xi32> to vector<256x1xf32>
      %39 = arith.index_cast %arg1 : i32 to index
      %c0 = arith.constant 0 : index
      %c0_14 = arith.constant 0 : index
      %40 = vector.load %arg15[%39, %c0, %c0_14] : memref<2x256x128xf32, #tpu.memory_space<vmem>>, vector<1x256x128xf32>
      %41 = vector.shape_cast %40 : vector<1x256x128xf32> to vector<256x128xf32>
      %c0_15 = arith.constant 0 : index
      %c0_16 = arith.constant 0 : index
      %42 = vector.load %arg20[%c0_15, %c0_16] : memref<1x128xf32, #tpu.memory_space<vmem>>, vector<1x128xf32>
      %43 = vector.broadcast %42 : vector<1x128xf32> to vector<256x128xf32>
      %44 = arith.addf %41, %43 : vector<256x128xf32>
      %c0_17 = arith.constant 0 : index
      %c0_18 = arith.constant 0 : index
      %45 = vector.load %arg21[%c0_17, %c0_18] : memref<1x128xf32, #tpu.memory_space<vmem>>, vector<1x128xf32>
      %46 = vector.broadcast %45 : vector<1x128xf32> to vector<256x128xf32>
      %47 = arith.subf %44, %46 : vector<256x128xf32>
      %c0_19 = arith.constant 0 : index
      %c0_20 = arith.constant 0 : index
      %48 = vector.load %arg22[%c0_19, %c0_20] : memref<1x128xf32, #tpu.memory_space<vmem>>, vector<1x128xf32>
      %49 = vector.broadcast %48 : vector<1x128xf32> to vector<256x128xf32>
      %50 = arith.mulf %47, %49 : vector<256x128xf32>
      %cst = arith.constant 0.000000e+00 : f32
      %51 = vector.broadcast %cst : f32 to vector<256x128xf32>
      %52 = arith.maximumf %50, %51 : vector<256x128xf32>
      %53 = vector.broadcast %38 : vector<256x1xf32> to vector<256x128xf32>
      %54 = arith.mulf %52, %53 : vector<256x128xf32>
      %55 = tpu.iota {dimensions = array<i32: 0>} : vector<8x256xi32>
      %56 = tpu.iota {dimensions = array<i32: 1>} : vector<1x256xi32>
      %c256_i32_21 = arith.constant 256 : i32
      %57 = arith.muli %arg1, %c256_i32_21 : i32
      %58 = vector.broadcast %57 : i32 to vector<1x256xi32>
      %59 = arith.addi %56, %58 : vector<1x256xi32>
      %c500_i32_22 = arith.constant 500 : i32
      %60 = vector.broadcast %c500_i32_22 : i32 to vector<1x256xi32>
      %61 = arith.cmpi slt, %59, %60 : vector<1x256xi32>
      %62 = arith.extui %61 : vector<1x256xi1> to vector<1x256xi32>
      %63 = arith.sitofp %62 : vector<1x256xi32> to vector<1x256xf32>
      %c0_23 = arith.constant 0 : index
      %c0_24 = arith.constant 0 : index
      %64 = vector.load %arg3[%c0_23, %c0_24] : memref<1x256xi32, #tpu.memory_space<vmem>>, vector<1x256xi32>
      %65 = vector.broadcast %64 : vector<1x256xi32> to vector<8x256xi32>
      %66 = arith.cmpi eq, %55, %65 : vector<8x256xi32>
      %67 = arith.extui %66 : vector<8x256xi1> to vector<8x256xi32>
      %68 = arith.sitofp %67 : vector<8x256xi32> to vector<8x256xf32>
      %69 = vector.broadcast %63 : vector<1x256xf32> to vector<8x256xf32>
      %70 = arith.mulf %68, %69 : vector<8x256xf32>
      %c0_25 = arith.constant 0 : index
      %c0_26 = arith.constant 0 : index
      %71 = vector.load %arg23[%c0_25, %c0_26] : memref<8x128xf32, #tpu.memory_space<vmem>>, vector<8x128xf32>
      %cst_27 = arith.constant dense<0.000000e+00> : vector<8x128xf32>
      %72 = tpu.matmul %70, %54, %cst_27 {dimension_numbers = #tpu.dot_dimension_numbers<[1], [0], [0], [1], [0, 0, 1, 1], [], []>} : vector<8x256xf32>, vector<256x128xf32>, vector<8x128xf32> -> vector<8x128xf32>
      %73 = arith.addf %71, %72 : vector<8x128xf32>
      %c0_28 = arith.constant 0 : index
      %c0_29 = arith.constant 0 : index
      %74 = vector.load %arg23[%c0_28, %c0_29] : memref<8x128xf32, #tpu.memory_space<vmem>>, vector<8x128xf32>
      tpu.vector_store %arg23[%c0_28, %c0_29], %73 {strides = array<i32>} : memref<8x128xf32, #tpu.memory_space<vmem>>, vector<8x128xf32>,
      %c0_30 = arith.constant 0 : index
      %c0_31 = arith.constant 0 : index
      %75 = vector.load %arg24[%c0_30, %c0_31] : memref<8x1xf32, #tpu.memory_space<vmem>>, vector<8x1xf32>
      %cst_32 = arith.constant dense<0.000000e+00> : vector<8xf32>
      %76 = vector.multi_reduction <add>, %70, %cst_32 [1] : vector<8x256xf32> to vector<8xf32>
      %77 = vector.shape_cast %76 : vector<8xf32> to vector<8x1xf32>
      %78 = arith.addf %75, %77 : vector<8x1xf32>
      %c0_33 = arith.constant 0 : index
      %c0_34 = arith.constant 0 : index
      %79 = vector.load %arg24[%c0_33, %c0_34] : memref<8x1xf32, #tpu.memory_space<vmem>>, vector<8x1xf32>
      tpu.vector_store %arg24[%c0_33, %c0_34], %78 {strides = array<i32>} : memref<8x1xf32, #tpu.memory_space<vmem>>, vector<8x1xf32>,
      %c1_i32_35 = arith.constant 1 : i32
      %80 = arith.cmpi eq, %arg1, %c1_i32_35 : i32
      %81 = arith.extui %80 : i1 to i32
      %c0_i32_36 = arith.constant 0 : i32
      %82 = arith.cmpi ne, %81, %c0_i32_36 : i32
      scf.if %82 {
        %c0_37 = arith.constant 0 : index
        %c0_38 = arith.constant 0 : index
        %83 = vector.load %arg23[%c0_37, %c0_38] : memref<8x128xf32, #tpu.memory_space<vmem>>, vector<8x128xf32>
        %c0_39 = arith.constant 0 : index
        %c0_40 = arith.constant 0 : index
        %84 = vector.load %arg24[%c0_39, %c0_40] : memref<8x1xf32, #tpu.memory_space<vmem>>, vector<8x1xf32>
        %cst_41 = arith.constant 1.000000e+00 : f32
        %85 = vector.broadcast %cst_41 : f32 to vector<8x1xf32>
        %86 = arith.maximumf %84, %85 : vector<8x1xf32>
        %87 = vector.broadcast %86 : vector<8x1xf32> to vector<8x128xf32>
        %88 = arith.divf %83, %87 : vector<8x128xf32>
        %c0_42 = arith.constant 0 : index
        %c0_43 = arith.constant 0 : index
        %89 = vector.load %arg10[%c0_42, %c0_43] : memref<128x128xf32, #tpu.memory_space<vmem>>, vector<128x128xf32>
        %cst_44 = arith.constant dense<0.000000e+00> : vector<8x128xf32>
        %90 = tpu.matmul %88, %89, %cst_44 {dimension_numbers = #tpu.dot_dimension_numbers<[1], [0], [0], [1], [0, 0, 1, 1], [], []>} : vector<8x128xf32>, vector<128x128xf32>, vector<8x128xf32> -> vector<8x128xf32>
        %c0_45 = arith.constant 0 : index
        %c0_46 = arith.constant 0 : index
        %91 = vector.load %arg11[%c0_45, %c0_46] : memref<1x128xf32, #tpu.memory_space<vmem>>, vector<1x128xf32>
        %92 = vector.broadcast %91 : vector<1x128xf32> to vector<8x128xf32>
        %93 = arith.addf %90, %92 : vector<8x128xf32>
        %c0_47 = arith.constant 0 : index
        %c0_48 = arith.constant 0 : index
        %94 = vector.load %arg23[%c0_47, %c0_48] : memref<8x128xf32, #tpu.memory_space<vmem>>, vector<8x128xf32>
        tpu.vector_store %arg23[%c0_47, %c0_48], %93 {strides = array<i32>} : memref<8x128xf32, #tpu.memory_space<vmem>>, vector<8x128xf32>,
      } else {
      }
    } else {
    }
    %c4_i32 = arith.constant 4 : i32
    %28 = arith.cmpi eq, %arg0, %c4_i32 : i32
    %29 = arith.extui %28 : i1 to i32
    %c0_i32_13 = arith.constant 0 : i32
    %30 = arith.cmpi ne, %29, %c0_i32_13 : i32
    scf.if %30 {
      %31 = tpu.iota {dimensions = array<i32: 1>} : vector<256x8xi32>
      %c0 = arith.constant 0 : index
      %c0_14 = arith.constant 0 : index
      %32 = vector.load %arg4[%c0, %c0_14] : memref<256x1xi32, #tpu.memory_space<vmem>>, vector<256x1xi32>
      %33 = vector.broadcast %32 : vector<256x1xi32> to vector<256x8xi32>
      %34 = arith.cmpi eq, %31, %33 : vector<256x8xi32>
      %35 = arith.extui %34 : vector<256x8xi1> to vector<256x8xi32>
      %36 = arith.sitofp %35 : vector<256x8xi32> to vector<256x8xf32>
      %c0_15 = arith.constant 0 : index
      %c0_16 = arith.constant 0 : index
      %37 = vector.load %arg23[%c0_15, %c0_16] : memref<8x128xf32, #tpu.memory_space<vmem>>, vector<8x128xf32>
      %cst = arith.constant dense<0.000000e+00> : vector<256x128xf32>
      %38 = tpu.matmul %36, %37, %cst {dimension_numbers = #tpu.dot_dimension_numbers<[1], [0], [0], [1], [0, 0, 1, 1], [], []>} : vector<256x8xf32>, vector<8x128xf32>, vector<256x128xf32> -> vector<256x128xf32>
      %c0_17 = arith.constant 0 : index
      %c0_18 = arith.constant 0 : index
      %39 = vector.load %arg12[%c0_17, %c0_18] : memref<128x128xf32, #tpu.memory_space<vmem>>, vector<128x128xf32>
      %cst_19 = arith.constant dense<0.000000e+00> : vector<256x128xf32>
      %40 = tpu.matmul %38, %39, %cst_19 {dimension_numbers = #tpu.dot_dimension_numbers<[1], [0], [0], [1], [0, 0, 1, 1], [], []>} : vector<256x128xf32>, vector<128x128xf32>, vector<256x128xf32> -> vector<256x128xf32>
      %c0_20 = arith.constant 0 : index
      %c0_21 = arith.constant 0 : index
      %41 = vector.load %arg13[%c0_20, %c0_21] : memref<1x128xf32, #tpu.memory_space<vmem>>, vector<1x128xf32>
      %42 = vector.broadcast %41 : vector<1x128xf32> to vector<256x128xf32>
      %43 = arith.addf %40, %42 : vector<256x128xf32>
      %c0_22 = arith.constant 0 : index
      %c0_23 = arith.constant 0 : index
      %44 = vector.load %arg14[%c0_22, %c0_23] : memref<256x128xf32, #tpu.memory_space<vmem>>, vector<256x128xf32>
      tpu.vector_store %arg14[%c0_22, %c0_23], %43 {strides = array<i32>} : memref<256x128xf32, #tpu.memory_space<vmem>>, vector<256x128xf32>,
    } else {
    }
    return
  }
  func.func @transform_0(%arg0: i32, %arg1: i32) -> (i32, i32) {
    %c0_i32 = arith.constant 0 : i32
    %0 = arith.cmpi eq, %arg0, %c0_i32 : i32
    %c0_i32_0 = arith.constant 0 : i32
    %1 = arith.select %0, %arg1, %c0_i32_0 : i32
    %c0_i32_1 = arith.constant 0 : i32
    %c0_i32_2 = arith.constant 0 : i32
    return %1, %c0_i32_1 : i32, i32
  }
  func.func @transform_1(%arg0: i32, %arg1: i32) -> (i32, i32) {
    %c3_i32 = arith.constant 3 : i32
    %0 = arith.cmpi eq, %arg0, %c3_i32 : i32
    %c0_i32 = arith.constant 0 : i32
    %1 = arith.select %0, %arg1, %c0_i32 : i32
    %c0_i32_0 = arith.constant 0 : i32
    %c0_i32_1 = arith.constant 0 : i32
    return %c0_i32_0, %1 : i32, i32
  }
  func.func @transform_2(%arg0: i32, %arg1: i32) -> (i32, i32) {
    %c4_i32 = arith.constant 4 : i32
    %0 = arith.cmpi eq, %arg0, %c4_i32 : i32
    %c0_i32 = arith.constant 0 : i32
    %1 = arith.select %0, %arg1, %c0_i32 : i32
    %c0_i32_0 = arith.constant 0 : i32
    %c0_i32_1 = arith.constant 0 : i32
    return %1, %c0_i32_0 : i32, i32
  }
  func.func @transform_3(%arg0: i32, %arg1: i32) -> (i32, i32) {
    %c0_i32 = arith.constant 0 : i32
    %c0_i32_0 = arith.constant 0 : i32
    %c0_i32_1 = arith.constant 0 : i32
    return %c0_i32, %c0_i32_0 : i32, i32
  }
  func.func @transform_4(%arg0: i32, %arg1: i32) -> (i32, i32) {
    %c0_i32 = arith.constant 0 : i32
    %c0_i32_0 = arith.constant 0 : i32
    %c0_i32_1 = arith.constant 0 : i32
    return %c0_i32, %c0_i32_0 : i32, i32
  }
  func.func @transform_5(%arg0: i32, %arg1: i32) -> (i32, i32, i32) {
    %c0_i32 = arith.constant 0 : i32
    %c0_i32_0 = arith.constant 0 : i32
    %c0_i32_1 = arith.constant 0 : i32
    %c0_i32_2 = arith.constant 0 : i32
    return %c0_i32, %c0_i32_0, %c0_i32_1 : i32, i32, i32
  }
  func.func @transform_6(%arg0: i32, %arg1: i32) -> (i32, i32, i32) {
    %c0_i32 = arith.constant 0 : i32
    %c0_i32_0 = arith.constant 0 : i32
    %c0_i32_1 = arith.constant 0 : i32
    %c0_i32_2 = arith.constant 0 : i32
    return %c0_i32, %c0_i32_0, %c0_i32_1 : i32, i32, i32
  }
  func.func @transform_7(%arg0: i32, %arg1: i32) -> (i32, i32, i32) {
    %c0_i32 = arith.constant 0 : i32
    %c0_i32_0 = arith.constant 0 : i32
    %c0_i32_1 = arith.constant 0 : i32
    %c0_i32_2 = arith.constant 0 : i32
    return %c0_i32, %c0_i32_0, %c0_i32_1 : i32, i32, i32
  }
  func.func @transform_8(%arg0: i32, %arg1: i32) -> (i32, i32) {
    %c0_i32 = arith.constant 0 : i32
    %c0_i32_0 = arith.constant 0 : i32
    %c0_i32_1 = arith.constant 0 : i32
    return %c0_i32, %c0_i32_0 : i32, i32
  }
  func.func @transform_9(%arg0: i32, %arg1: i32) -> (i32, i32) {
    %c0_i32 = arith.constant 0 : i32
    %c0_i32_0 = arith.constant 0 : i32
    %c0_i32_1 = arith.constant 0 : i32
    return %c0_i32, %c0_i32_0 : i32, i32
  }
  func.func @transform_10(%arg0: i32, %arg1: i32) -> (i32, i32) {
    %c0_i32 = arith.constant 0 : i32
    %c0_i32_0 = arith.constant 0 : i32
    %c0_i32_1 = arith.constant 0 : i32
    return %c0_i32, %c0_i32_0 : i32, i32
  }
  func.func @transform_11(%arg0: i32, %arg1: i32) -> (i32, i32) {
    %c0_i32 = arith.constant 0 : i32
    %c0_i32_0 = arith.constant 0 : i32
    %c0_i32_1 = arith.constant 0 : i32
    return %c0_i32, %c0_i32_0 : i32, i32
  }
  func.func @transform_12(%arg0: i32, %arg1: i32) -> (i32, i32) {
    %c4_i32 = arith.constant 4 : i32
    %0 = arith.cmpi eq, %arg0, %c4_i32 : i32
    %c0_i32 = arith.constant 0 : i32
    %1 = arith.select %0, %arg1, %c0_i32 : i32
    %c0_i32_0 = arith.constant 0 : i32
    %c0_i32_1 = arith.constant 0 : i32
    return %1, %c0_i32_0 : i32, i32
  }
}

</mosaic_0001>

<llo_original>
// kernel: tpu_custom_call.1
$region0: #{tpu_custom_call.1}
  #allocation0 [shape = 'u32[]', space=smem, size = 0x4, offset = 0x4, fixed_abs, tag = 'smem constant byte address 0x4 - core index']
  #allocation1 [shape = 'u32[144,128]{1,0:T(1,128)}', space=vmem, size = 0x12000, scoped, tag = 'internal scratch']
  #allocation2 [shape = 'f32[2,256,128]{2,1,0:T(8,128)}', space=vmem, size = 0x40000, scoped, tag = 'scratch operand']
  #allocation3 [shape = 'f32[1,4]{1,0:T(1,128)}', space=vmem, size = 0x200, scoped, tag = 'scratch operand']
  #allocation4 [shape = 'f32[1,128]{1,0:T(1,128)}', space=vmem, size = 0x200, scoped, tag = 'scratch operand']
  #allocation5 [shape = 'f32[1,128]{1,0:T(1,128)}', space=vmem, size = 0x200, scoped, tag = 'scratch operand']
  #allocation6 [shape = 'f32[1,128]{1,0:T(1,128)}', space=vmem, size = 0x200, scoped, tag = 'scratch operand']
  #allocation7 [shape = 'f32[1,128]{1,0:T(1,128)}', space=vmem, size = 0x200, scoped, tag = 'scratch operand']
  #allocation8 [shape = 'f32[1,128]{1,0:T(1,128)}', space=vmem, size = 0x200, scoped, tag = 'scratch operand']
  #allocation9 [shape = 'f32[1,128]{1,0:T(1,128)}', space=vmem, size = 0x200, scoped, tag = 'scratch operand']
  #allocation10 [shape = 'f32[8,128]{1,0:T(8,128)}', space=vmem, size = 0x1000, scoped, tag = 'scratch operand']
  #allocation11 [shape = 'f32[8,1]{1,0:T(8,128)}', space=vmem, size = 0x1000, scoped, tag = 'scratch operand']
  %s0 = inlined_call_operand.vmem [shape: f32[512,4], index: 0, kind: input, shape index: {}]
  %s1 = inlined_call_operand.vmem [shape: s32[1,512], index: 1, kind: input, shape index: {}]
  %s2 = inlined_call_operand.vmem [shape: s32[512,1], index: 2, kind: input, shape index: {}]
  %s3 = inlined_call_operand.vmem [shape: f32[4,128], index: 3, kind: input, shape index: {}]
  %s4 = inlined_call_operand.vmem [shape: f32[4,128], index: 4, kind: input, shape index: {}]
  %s5 = inlined_call_operand.vmem [shape: f32[2,128,128], index: 5, kind: input, shape index: {}]
  %s6 = inlined_call_operand.vmem [shape: f32[2,128,128], index: 6, kind: input, shape index: {}]
  %s7 = inlined_call_operand.vmem [shape: f32[3,1,128], index: 7, kind: input, shape index: {}]
  %s8 = inlined_call_operand.vmem [shape: f32[128,128], index: 8, kind: input, shape index: {}]
  %s9 = inlined_call_operand.vmem [shape: f32[1,128], index: 9, kind: input, shape index: {}]
  %s10 = inlined_call_operand.vmem [shape: f32[128,128], index: 10, kind: input, shape index: {}]
  %s11 = inlined_call_operand.vmem [shape: f32[1,128], index: 11, kind: input, shape index: {}]
  %s12 = inlined_call_operand.hbm [shape: f32[512,128], index: 12, kind: output, shape index: {}]
  %s13 = sld [smem:[#allocation0]]
  $region121: #{tpu_custom_call.1} parent=0
    _
  %s15 = ssub.s32 1, %s13
  %s16 = scalar_select 0, %s15, %s13
  $region1: #{tpu_custom_call.1} parent=0
    #allocation12 [shape = 'u8[262144]{0}', space=vmem, size = 0x40000, scoped, tag = 'output window, operand 0']
    #allocation13 [shape = 's32[2]{0}', space=sflag, size = 0x8, scoped, tag = 'scoped memory for tpu_custom_call.1']
    %17 = vsyncpa [#allocation13], 0
    %s18 = scalar_lea.sflag [#allocation13], 1
    %19 = vsyncpa %s18, 0
    loop: start=0, step=1, limit=12
    $region2: #{tpu_custom_call.1} parent=1 // loop_pre_header
      _
    $region3: #{tpu_custom_call.1} parent=1 // loop_header
      %s21 = sphi 0, %s25
      %p22 = scmp.ge.s32.totalorder %s21, 12
      %s28 = sphi 0, %s40
      %s29 = sphi 0, %s36
      %s30 = sphi 0, %s28
      %s31 = sphi 0, %s29
      %s32 = sphi 0, %s30
      %s33 = sphi 0, %s31
      %s47 = sphi 0, %s49
      %s50 = sphi 0, %s47
      %s51 = sphi 0, %s50
      %s67 = sphi 0, %s51
      %s77 = sphi 0, %s79
      %s80 = sphi 0, %s77
      %s81 = sphi 0, %s80
      %s97 = sphi 0, %s81
      %s107 = sphi 0, %s109
      %s110 = sphi 0, %s107
      %s111 = sphi 0, %s110
      %s127 = sphi 0, %s111
      %s131 = sphi 0, %s131
      %s133 = sphi 0, %s131
      %s134 = sphi 0, %s133
      %s148 = sphi 0, %s134
      %s152 = sphi 0, %s152
      %s154 = sphi 0, %s152
      %s155 = sphi 0, %s154
      %s169 = sphi 0, %s155
      %s173 = sphi 0, %s173
      %s175 = sphi 0, %s173
      %s176 = sphi 0, %s175
      %s190 = sphi 0, %s176
      %s194 = sphi 0, %s194
      %s196 = sphi 0, %s194
      %s197 = sphi 0, %s196
      %s211 = sphi 0, %s197
      %s215 = sphi 0, %s215
      %s217 = sphi 0, %s215
      %s218 = sphi 0, %s217
      %s232 = sphi 0, %s218
      %s236 = sphi 0, %s236
      %s238 = sphi 0, %s236
      %s239 = sphi 0, %s238
      %s253 = sphi 0, %s239
      %s257 = sphi 0, %s257
      %s259 = sphi 0, %s257
      %s260 = sphi 0, %s259
      %s274 = sphi 0, %s260
      %s278 = sphi 0, %s278
      %s280 = sphi 0, %s278
      %s281 = sphi 0, %s280
      %s295 = sphi 0, %s281
      %s299 = sphi 0, %s299
      %s301 = sphi 0, %s299
      %s302 = sphi 0, %s301
      %s316 = sphi 0, %s302
      %s326 = sphi 0, %s328
      %s329 = sphi 0, %s326
      %s330 = sphi 0, %s329
      %s346 = sphi 0, %s330
    $region4: #{tpu_custom_call.1} parent=1 // loop_header_branch
      %24 = sbr.rel (%p22) target = $region8
    $region5: #{tpu_custom_call.1} parent=1 // loop_body
      %s26 = ssub.s32 %s21, 1
      %s27 = ssub.s32 %s21, 2
      %s34 = sadd.s32 1, %s29
      %p35 = scmp.ge.s32.totalorder %s34, 2
      %s36 = scalar_select %p35, 0, %s34
      %s37 = sadd.s32 1, %s28
      %s38 = scalar_select %p35, %s37, %s28
      %p39 = scmp.ge.s32.totalorder %s38, 5
      %s40 = scalar_select %p39, 0, %s38
      %p41 = scmp.eq.s32.totalorder %s28, 0
      %s42 = scalar_select %p41, %s29, 0
      %p43 = scmp.eq.s32.totalorder %s40, 0
      %s44 = scalar_select %p43, %s36, 0
      %s45 = ssub.s32 %s42, %s44
      %p46 = scmp.eq.s32.totalorder %s45, 0
      %s48 = sadd.s32 %s47, 1
      %s49 = scalar_select %p46, %s47, %s48
      %p52 = pneg %p46
      %p53 = scmp.eq.s32.totalorder %s21, 9
      %p54 = por %p52, %p53
      %p55 = scmp.ne.s32.totalorder %s47, %s50
      %p56 = scmp.eq.s32.totalorder %s21, 0
      %p57 = por %p55, %p56
      %p58 = scmp.ne.s32.totalorder %s47, %s50
      %p59 = scmp.eq.s32.totalorder %s26, 9
      %p60 = por %p58, %p59
      %p61 = scmp.ne.s32.totalorder %s50, %s51
      %p62 = scmp.eq.s32.totalorder %s26, 0
      %p63 = por %p61, %p62
      %p64 = scmp.ne.s32.totalorder %s50, %s51
      %p65 = scmp.eq.s32.totalorder %s27, 9
      %p66 = por %p64, %p65
      %p68 = scmp.ne.s32.totalorder %s51, %s67
      %p69 = scmp.eq.s32.totalorder %s27, 0
      %p70 = por %p68, %p69
      %p71 = scmp.eq.s32.totalorder %s28, 3
      %s72 = scalar_select %p71, %s29, 0
      %p73 = scmp.eq.s32.totalorder %s40, 3
      %s74 = scalar_select %p73, %s36, 0
      %s75 = ssub.s32 %s72, %s74
      %p76 = scmp.eq.s32.totalorder %s75, 0
      %s78 = sadd.s32 %s77, 1
      %s79 = scalar_select %p76, %s77, %s78
      %p82 = pneg %p76
      %p83 = scmp.eq.s32.totalorder %s21, 9
      %p84 = por %p82, %p83
      %p85 = scmp.ne.s32.totalorder %s77, %s80
      %p86 = scmp.eq.s32.totalorder %s21, 0
      %p87 = por %p85, %p86
      %p88 = scmp.ne.s32.totalorder %s77, %s80
      %p89 = scmp.eq.s32.totalorder %s26, 9
      %p90 = por %p88, %p89
      %p91 = scmp.ne.s32.totalorder %s80, %s81
      %p92 = scmp.eq.s32.totalorder %s26, 0
      %p93 = por %p91, %p92
      %p94 = scmp.ne.s32.totalorder %s80, %s81
      %p95 = scmp.eq.s32.totalorder %s27, 9
      %p96 = por %p94, %p95
      %p98 = scmp.ne.s32.totalorder %s81, %s97
      %p99 = scmp.eq.s32.totalorder %s27, 0
      %p100 = por %p98, %p99
      %p101 = scmp.eq.s32.totalorder %s28, 4
      %s102 = scalar_select %p101, %s29, 0
      %p103 = scmp.eq.s32.totalorder %s40, 4
      %s104 = scalar_select %p103, %s36, 0
      %s105 = ssub.s32 %s102, %s104
      %p106 = scmp.eq.s32.totalorder %s105, 0
      %s108 = sadd.s32 %s107, 1
      %s109 = scalar_select %p106, %s107, %s108
      %p112 = pneg %p106
      %p113 = scmp.eq.s32.totalorder %s21, 9
      %p114 = por %p112, %p113
      %p115 = scmp.ne.s32.totalorder %s107, %s110
      %p116 = scmp.eq.s32.totalorder %s21, 0
      %p117 = por %p115, %p116
      %p118 = scmp.ne.s32.totalorder %s107, %s110
      %p119 = scmp.eq.s32.totalorder %s26, 9
      %p120 = por %p118, %p119
      %p121 = scmp.ne.s32.totalorder %s110, %s111
      %p122 = scmp.eq.s32.totalorder %s26, 0
      %p123 = por %p121, %p122
      %p124 = scmp.ne.s32.totalorder %s110, %s111
      %p125 = scmp.eq.s32.totalorder %s27, 9
      %p126 = por %p124, %p125
      %p128 = scmp.ne.s32.totalorder %s111, %s127
      %p129 = scmp.eq.s32.totalorder %s27, 0
      %p130 = por %p128, %p129
      %s132 = sadd.s32 %s131, 1
      %p135 = scmp.eq.s32.totalorder %s21, 9
      %p136 = scmp.ne.s32.totalorder %s131, %s133
      %p137 = scmp.eq.s32.totalorder %s21, 0
      %p138 = por %p136, %p137
      %p139 = scmp.ne.s32.totalorder %s131, %s133
      %p140 = scmp.eq.s32.totalorder %s26, 9
      %p141 = por %p139, %p140
      %p142 = scmp.ne.s32.totalorder %s133, %s134
      %p143 = scmp.eq.s32.totalorder %s26, 0
      %p144 = por %p142, %p143
      %p145 = scmp.ne.s32.totalorder %s133, %s134
      %p146 = scmp.eq.s32.totalorder %s27, 9
      %p147 = por %p145, %p146
      %p149 = scmp.ne.s32.totalorder %s134, %s148
      %p150 = scmp.eq.s32.totalorder %s27, 0
      %p151 = por %p149, %p150
      %s153 = sadd.s32 %s152, 1
      %p156 = scmp.eq.s32.totalorder %s21, 9
      %p157 = scmp.ne.s32.totalorder %s152, %s154
      %p158 = scmp.eq.s32.totalorder %s21, 0
      %p159 = por %p157, %p158
      %p160 = scmp.ne.s32.totalorder %s152, %s154
      %p161 = scmp.eq.s32.totalorder %s26, 9
      %p162 = por %p160, %p161
      %p163 = scmp.ne.s32.totalorder %s154, %s155
      %p164 = scmp.eq.s32.totalorder %s26, 0
      %p165 = por %p163, %p164
      %p166 = scmp.ne.s32.totalorder %s154, %s155
      %p167 = scmp.eq.s32.totalorder %s27, 9
      %p168 = por %p166, %p167
      %p170 = scmp.ne.s32.totalorder %s155, %s169
      %p171 = scmp.eq.s32.totalorder %s27, 0
      %p172 = por %p170, %p171
      %s174 = sadd.s32 %s173, 1
      %p177 = scmp.eq.s32.totalorder %s21, 9
      %p178 = scmp.ne.s32.totalorder %s173, %s175
      %p179 = scmp.eq.s32.totalorder %s21, 0
      %p180 = por %p178, %p179
      %p181 = scmp.ne.s32.totalorder %s173, %s175
      %p182 = scmp.eq.s32.totalorder %s26, 9
      %p183 = por %p181, %p182
      %p184 = scmp.ne.s32.totalorder %s175, %s176
      %p185 = scmp.eq.s32.totalorder %s26, 0
      %p186 = por %p184, %p185
      %p187 = scmp.ne.s32.totalorder %s175, %s176
      %p188 = scmp.eq.s32.totalorder %s27, 9
      %p189 = por %p187, %p188
      %p191 = scmp.ne.s32.totalorder %s176, %s190
      %p192 = scmp.eq.s32.totalorder %s27, 0
      %p193 = por %p191, %p192
      %s195 = sadd.s32 %s194, 1
      %p198 = scmp.eq.s32.totalorder %s21, 9
      %p199 = scmp.ne.s32.totalorder %s194, %s196
      %p200 = scmp.eq.s32.totalorder %s21, 0
      %p201 = por %p199, %p200
      %p202 = scmp.ne.s32.totalorder %s194, %s196
      %p203 = scmp.eq.s32.totalorder %s26, 9
      %p204 = por %p202, %p203
      %p205 = scmp.ne.s32.totalorder %s196, %s197
      %p206 = scmp.eq.s32.totalorder %s26, 0
      %p207 = por %p205, %p206
      %p208 = scmp.ne.s32.totalorder %s196, %s197
      %p209 = scmp.eq.s32.totalorder %s27, 9
      %p210 = por %p208, %p209
      %p212 = scmp.ne.s32.totalorder %s197, %s211
      %p213 = scmp.eq.s32.totalorder %s27, 0
      %p214 = por %p212, %p213
      %s216 = sadd.s32 %s215, 1
      %p219 = scmp.eq.s32.totalorder %s21, 9
      %p220 = scmp.ne.s32.totalorder %s215, %s217
      %p221 = scmp.eq.s32.totalorder %s21, 0
      %p222 = por %p220, %p221
      %p223 = scmp.ne.s32.totalorder %s215, %s217
      %p224 = scmp.eq.s32.totalorder %s26, 9
      %p225 = por %p223, %p224
      %p226 = scmp.ne.s32.totalorder %s217, %s218
      %p227 = scmp.eq.s32.totalorder %s26, 0
      %p228 = por %p226, %p227
      %p229 = scmp.ne.s32.totalorder %s217, %s218
      %p230 = scmp.eq.s32.totalorder %s27, 9
      %p231 = por %p229, %p230
      %p233 = scmp.ne.s32.totalorder %s218, %s232
      %p234 = scmp.eq.s32.totalorder %s27, 0
      %p235 = por %p233, %p234
      %s237 = sadd.s32 %s236, 1
      %p240 = scmp.eq.s32.totalorder %s21, 9
      %p241 = scmp.ne.s32.totalorder %s236, %s238
      %p242 = scmp.eq.s32.totalorder %s21, 0
      %p243 = por %p241, %p242
      %p244 = scmp.ne.s32.totalorder %s236, %s238
      %p245 = scmp.eq.s32.totalorder %s26, 9
      %p246 = por %p244, %p245
      %p247 = scmp.ne.s32.totalorder %s238, %s239
      %p248 = scmp.eq.s32.totalorder %s26, 0
      %p249 = por %p247, %p248
      %p250 = scmp.ne.s32.totalorder %s238, %s239
      %p251 = scmp.eq.s32.totalorder %s27, 9
      %p252 = por %p250, %p251
      %p254 = scmp.ne.s32.totalorder %s239, %s253
      %p255 = scmp.eq.s32.totalorder %s27, 0
      %p256 = por %p254, %p255
      %s258 = sadd.s32 %s257, 1
      %p261 = scmp.eq.s32.totalorder %s21, 9
      %p262 = scmp.ne.s32.totalorder %s257, %s259
      %p263 = scmp.eq.s32.totalorder %s21, 0
      %p264 = por %p262, %p263
      %p265 = scmp.ne.s32.totalorder %s257, %s259
      %p266 = scmp.eq.s32.totalorder %s26, 9
      %p267 = por %p265, %p266
      %p268 = scmp.ne.s32.totalorder %s259, %s260
      %p269 = scmp.eq.s32.totalorder %s26, 0
      %p270 = por %p268, %p269
      %p271 = scmp.ne.s32.totalorder %s259, %s260
      %p272 = scmp.eq.s32.totalorder %s27, 9
      %p273 = por %p271, %p272
      %p275 = scmp.ne.s32.totalorder %s260, %s274
      %p276 = scmp.eq.s32.totalorder %s27, 0
      %p277 = por %p275, %p276
      %s279 = sadd.s32 %s278, 1
      %p282 = scmp.eq.s32.totalorder %s21, 9
      %p283 = scmp.ne.s32.totalorder %s278, %s280
      %p284 = scmp.eq.s32.totalorder %s21, 0
      %p285 = por %p283, %p284
      %p286 = scmp.ne.s32.totalorder %s278, %s280
      %p287 = scmp.eq.s32.totalorder %s26, 9
      %p288 = por %p286, %p287
      %p289 = scmp.ne.s32.totalorder %s280, %s281
      %p290 = scmp.eq.s32.totalorder %s26, 0
      %p291 = por %p289, %p290
      %p292 = scmp.ne.s32.totalorder %s280, %s281
      %p293 = scmp.eq.s32.totalorder %s27, 9
      %p294 = por %p292, %p293
      %p296 = scmp.ne.s32.totalorder %s281, %s295
      %p297 = scmp.eq.s32.totalorder %s27, 0
      %p298 = por %p296, %p297
      %s300 = sadd.s32 %s299, 1
      %p303 = scmp.eq.s32.totalorder %s21, 9
      %p304 = scmp.ne.s32.totalorder %s299, %s301
      %p305 = scmp.eq.s32.totalorder %s21, 0
      %p306 = por %p304, %p305
      %p307 = scmp.ne.s32.totalorder %s299, %s301
      %p308 = scmp.eq.s32.totalorder %s26, 9
      %p309 = por %p307, %p308
      %p310 = scmp.ne.s32.totalorder %s301, %s302
      %p311 = scmp.eq.s32.totalorder %s26, 0
      %p312 = por %p310, %p311
      %p313 = scmp.ne.s32.totalorder %s301, %s302
      %p314 = scmp.eq.s32.totalorder %s27, 9
      %p315 = por %p313, %p314
      %p317 = scmp.ne.s32.totalorder %s302, %s316
      %p318 = scmp.eq.s32.totalorder %s27, 0
      %p319 = por %p317, %p318
      %p320 = scmp.eq.s32.totalorder %s28, 4
      %s321 = scalar_select %p320, %s29, 0
      %p322 = scmp.eq.s32.totalorder %s40, 4
      %s323 = scalar_select %p322, %s36, 0
      %s324 = ssub.s32 %s321, %s323
      %p325 = scmp.eq.s32.totalorder %s324, 0
      %s327 = sadd.s32 %s326, 1
      %s328 = scalar_select %p325, %s326, %s327
      %p331 = pneg %p325
      %p332 = scmp.eq.s32.totalorder %s21, 9
      %p333 = por %p331, %p332
      %p334 = scmp.ne.s32.totalorder %s326, %s329
      %p335 = scmp.eq.s32.totalorder %s21, 0
      %p336 = por %p334, %p335
      %p337 = scmp.ne.s32.totalorder %s326, %s329
      %p338 = scmp.eq.s32.totalorder %s26, 9
      %p339 = por %p337, %p338
      %p340 = scmp.ne.s32.totalorder %s329, %s330
      %p341 = scmp.eq.s32.totalorder %s26, 0
      %p342 = por %p340, %p341
      %p343 = scmp.ne.s32.totalorder %s329, %s330
      %p344 = scmp.eq.s32.totalorder %s27, 9
      %p345 = por %p343, %p344
      %p347 = scmp.ne.s32.totalorder %s330, %s346
      %p348 = scmp.eq.s32.totalorder %s27, 0
      %p349 = por %p347, %p348
      %p350 = scmp.le.s32.totalorder 1, %s21
      %p351 = scmp.lt.s32.totalorder %s21, 11
      %p352 = pnand %p350, %p351
      %p353 = pneg %p352
      // Predicated region
      $region9: #{tpu_custom_call.1} parent=5 // pred_check
        _
      $region10: #{tpu_custom_call.1} parent=5 // pred_check_branch
        %355 = sbr.rel (%p352) target = $region12
      $region11: #{tpu_custom_call.1} parent=5 // pred_region
        %s356 = ssub.s32 %s21, 1
        // Predicated region
        $region13: #{tpu_custom_call.1} parent=11 // pred_check
          %p357 = pneg %p144
        $region14: #{tpu_custom_call.1} parent=11 // pred_check_branch
          %359 = sbr.rel (%p357) target = $region16
        $region15: #{tpu_custom_call.1} parent=11 // pred_region
          _
        $region16: #{tpu_custom_call.1} parent=11 // pred_fallthru
          _
        // Predicated region
        $region17: #{tpu_custom_call.1} parent=11 // pred_check
          %p360 = pneg %p165
        $region18: #{tpu_custom_call.1} parent=11 // pred_check_branch
          %362 = sbr.rel (%p360) target = $region20
        $region19: #{tpu_custom_call.1} parent=11 // pred_region
          _
        $region20: #{tpu_custom_call.1} parent=11 // pred_fallthru
          _
        // Predicated region
        $region21: #{tpu_custom_call.1} parent=11 // pred_check
          %p363 = pneg %p186
        $region22: #{tpu_custom_call.1} parent=11 // pred_check_branch
          %365 = sbr.rel (%p363) target = $region24
        $region23: #{tpu_custom_call.1} parent=11 // pred_region
          _
        $region24: #{tpu_custom_call.1} parent=11 // pred_fallthru
          _
        // Predicated region
        $region25: #{tpu_custom_call.1} parent=11 // pred_check
          %p366 = pneg %p207
        $region26: #{tpu_custom_call.1} parent=11 // pred_check_branch
          %368 = sbr.rel (%p366) target = $region28
        $region27: #{tpu_custom_call.1} parent=11 // pred_region
          _
        $region28: #{tpu_custom_call.1} parent=11 // pred_fallthru
          _
        // Predicated region
        $region29: #{tpu_custom_call.1} parent=11 // pred_check
          %p369 = pneg %p228
        $region30: #{tpu_custom_call.1} parent=11 // pred_check_branch
          %371 = sbr.rel (%p369) target = $region32
        $region31: #{tpu_custom_call.1} parent=11 // pred_region
          _
        $region32: #{tpu_custom_call.1} parent=11 // pred_fallthru
          _
        // Predicated region
        $region33: #{tpu_custom_call.1} parent=11 // pred_check
          %p372 = pneg %p249
        $region34: #{tpu_custom_call.1} parent=11 // pred_check_branch
          %374 = sbr.rel (%p372) target = $region36
        $region35: #{tpu_custom_call.1} parent=11 // pred_region
          _
        $region36: #{tpu_custom_call.1} parent=11 // pred_fallthru
          _
        // Predicated region
        $region37: #{tpu_custom_call.1} parent=11 // pred_check
          %p375 = pneg %p270
        $region38: #{tpu_custom_call.1} parent=11 // pred_check_branch
          %377 = sbr.rel (%p375) target = $region40
        $region39: #{tpu_custom_call.1} parent=11 // pred_region
          _
        $region40: #{tpu_custom_call.1} parent=11 // pred_fallthru
          _
        // Predicated region
        $region41: #{tpu_custom_call.1} parent=11 // pred_check
          %p378 = pneg %p291
        $region42: #{tpu_custom_call.1} parent=11 // pred_check_branch
          %380 = sbr.rel (%p378) target = $region44
        $region43: #{tpu_custom_call.1} parent=11 // pred_region
          _
        $region44: #{tpu_custom_call.1} parent=11 // pred_fallthru
          _
        // Predicated region
        $region45: #{tpu_custom_call.1} parent=11 // pred_check
          %p381 = pneg %p312
        $region46: #{tpu_custom_call.1} parent=11 // pred_check_branch
          %383 = sbr.rel (%p381) target = $region48
        $region47: #{tpu_custom_call.1} parent=11 // pred_region
          _
        $region48: #{tpu_custom_call.1} parent=11 // pred_fallthru
          _
      $region12: #{tpu_custom_call.1} parent=5 // pred_fallthru
        _
      %p384 = scmp.lt.s32.totalorder %s21, 10
      // Predicated region
      $region49: #{tpu_custom_call.1} parent=5 // pred_check
        %p385 = pneg %p384
      $region50: #{tpu_custom_call.1} parent=5 // pred_check_branch
        %387 = sbr.rel (%p385) target = $region52
      $region51: #{tpu_custom_call.1} parent=5 // pred_region
        // Predicated region
        $region53: #{tpu_custom_call.1} parent=51 // pred_check
          %p388 = pneg %p57
        $region54: #{tpu_custom_call.1} parent=51 // pred_check_branch
          %390 = sbr.rel (%p388) target = $region56
        $region55: #{tpu_custom_call.1} parent=51 // pred_region
          %p391 = scmp.eq.s32.totalorder %s28, 0
          %s392 = scalar_select %p391, %s29, 0
          %s393 = smul.u32 32, %s392
          %p394 = scmp.lt.s32.totalorder %s393, 63
          %s395 = scalar_select %p394, %s393, 63
          %s396 = smul.addr %s395, 8
          %s397 = scalar_lea.vmem %s0, %s396
          %p398 = scmp.eq.s32.totalorder %s28, 0
          %s399 = scalar_select %p398, %s29, 0
          %s400 = smul.u32 32, %s399
        $region56: #{tpu_custom_call.1} parent=51 // pred_fallthru
          _
        // Predicated region
        $region57: #{tpu_custom_call.1} parent=51 // pred_check
          %p401 = pneg %p87
        $region58: #{tpu_custom_call.1} parent=51 // pred_check_branch
          %403 = sbr.rel (%p401) target = $region60
        $region59: #{tpu_custom_call.1} parent=51 // pred_region
          %p404 = scmp.eq.s32.totalorder %s28, 3
          %s405 = scalar_select %p404, %s29, 0
          %s406 = smul.u32 2, %s405
          %p407 = scmp.lt.s32.totalorder %s406, 3
          %s408 = scalar_select %p407, %s406, 3
          %s409 = scalar_lea.vmem %s1, %s408
          %p410 = scmp.eq.s32.totalorder %s28, 3
          %s411 = scalar_select %p410, %s29, 0
          %s412 = smul.u32 2, %s411
        $region60: #{tpu_custom_call.1} parent=51 // pred_fallthru
          _
        // Predicated region
        $region61: #{tpu_custom_call.1} parent=51 // pred_check
          %p413 = pneg %p117
        $region62: #{tpu_custom_call.1} parent=51 // pred_check_branch
          %415 = sbr.rel (%p413) target = $region64
        $region63: #{tpu_custom_call.1} parent=51 // pred_region
          %p416 = scmp.eq.s32.totalorder %s28, 4
          %s417 = scalar_select %p416, %s29, 0
          %s418 = smul.u32 32, %s417
          %p419 = scmp.lt.s32.totalorder %s418, 63
          %s420 = scalar_select %p419, %s418, 63
          %s421 = smul.addr %s420, 8
          %s422 = scalar_lea.vmem %s2, %s421
          %p423 = scmp.eq.s32.totalorder %s28, 4
          %s424 = scalar_select %p423, %s29, 0
          %s425 = smul.u32 32, %s424
        $region64: #{tpu_custom_call.1} parent=51 // pred_fallthru
          _
      $region52: #{tpu_custom_call.1} parent=5 // pred_fallthru
        _
      %p426 = scmp.le.s32.totalorder 1, %s21
      %p427 = scmp.lt.s32.totalorder %s21, 11
      %p428 = pnand %p426, %p427
      %p429 = pneg %p428
      // Predicated region
      $region65: #{tpu_custom_call.1} parent=5 // pred_check
        _
      $region66: #{tpu_custom_call.1} parent=5 // pred_check_branch
        %431 = sbr.rel (%p428) target = $region68
      $region67: #{tpu_custom_call.1} parent=5 // pred_region
        %s432 = ssub.s32 %s21, 1
        %p433 = scmp.eq.s32.totalorder %s30, 0
        %s434 = scalar_select %p433, %s31, 0
        %s435 = smul.u32 32, %s434
        %p436 = scmp.lt.s32.totalorder %s435, 63
        %s437 = scalar_select %p436, %s435, 63
        %s438 = smul.addr %s437, 8
        %s439 = scalar_lea.vmem %s0, %s438
        %p440 = pneg %p63
        %p441 = pneg %p60
        %p442 = scmp.eq.s32.totalorder %s30, 3
        %s443 = scalar_select %p442, %s31, 0
        %s444 = smul.u32 2, %s443
        %p445 = scmp.lt.s32.totalorder %s444, 3
        %s446 = scalar_select %p445, %s444, 3
        %s447 = scalar_lea.vmem %s1, %s446
        %p448 = pneg %p93
        %p449 = pneg %p90
        %p450 = scmp.eq.s32.totalorder %s30, 4
        %s451 = scalar_select %p450, %s31, 0
        %s452 = smul.u32 32, %s451
        %p453 = scmp.lt.s32.totalorder %s452, 63
        %s454 = scalar_select %p453, %s452, 63
        %s455 = smul.addr %s454, 8
        %s456 = scalar_lea.vmem %s2, %s455
        %p457 = pneg %p123
        %p458 = pneg %p120
        %p459 = pneg %p144
        %p460 = pneg %p141
        %p461 = pneg %p165
        %p462 = pneg %p162
        %p463 = pneg %p186
        %p464 = pneg %p183
        %p465 = pneg %p207
        %p466 = pneg %p204
        %p467 = pneg %p228
        %p468 = pneg %p225
        %p469 = pneg %p249
        %p470 = pneg %p246
        %p471 = pneg %p270
        %p472 = pneg %p267
        %p473 = pneg %p291
        %p474 = pneg %p288
        %p475 = pneg %p312
        %p476 = pneg %p309
        %p477 = pneg %p342
        %p478 = pneg %p339
        %s479 = sand.u32 %s329, 1
        %s480 = scalar_lea.sflag [#allocation13], %s479
        %s481 = sand.u32 %s329, 1
        %s482 = smul.addr %s481, 256
        %s483 = scalar_lea.vmem [#allocation12], %s482
        %p484 = scmp.eq.s32.totalorder %s30, 0
        %s485 = scalar_select %p484, %s31, 0
        %s486 = smul.u32 32, %s485
        %p487 = scmp.lt.s32.totalorder %s486, 63
        %s488 = scalar_select %p487, %s486, 63
        %s489 = smul.addr %s488, 8
        %s490 = scalar_lea.vmem %s0, %s489
        %p491 = scmp.eq.s32.totalorder %s30, 0
        %s492 = scalar_select %p491, %s31, 0
        %s493 = smul.u32 32, %s492
        %p494 = scmp.eq.s32.totalorder %s30, 3
        %s495 = scalar_select %p494, %s31, 0
        %s496 = smul.u32 2, %s495
        %p497 = scmp.lt.s32.totalorder %s496, 3
        %s498 = scalar_select %p497, %s496, 3
        %s499 = scalar_lea.vmem %s1, %s498
        %p500 = scmp.eq.s32.totalorder %s30, 3
        %s501 = scalar_select %p500, %s31, 0
        %s502 = smul.u32 2, %s501
        %p503 = scmp.eq.s32.totalorder %s30, 4
        %s504 = scalar_select %p503, %s31, 0
        %s505 = smul.u32 32, %s504
        %p506 = scmp.lt.s32.totalorder %s505, 63
        %s507 = scalar_select %p506, %s505, 63
        %s508 = smul.addr %s507, 8
        %s509 = scalar_lea.vmem %s2, %s508
        %p510 = scmp.eq.s32.totalorder %s30, 4
        %s511 = scalar_select %p510, %s31, 0
        %s512 = smul.u32 32, %s511
        %p513 = scmp.eq.s32.totalorder %s30, 4
        %s514 = scalar_select %p513, %s31, 0
        %s515 = smul.u32 32, %s514
        %p516 = scmp.eq.s32.totalorder %s30, 0
        %p517 = scmp.eq.s32.totalorder %s31, 0
        %p518 = pnand %p516, %p517
        %p519 = pneg %p518
        // Predicated region
        $region69: #{tpu_custom_call.1} parent=67 // pred_check
          _
        $region70: #{tpu_custom_call.1} parent=67 // pred_check_branch
          %521 = sbr.rel (%p518) target = $region72
        $region71: #{tpu_custom_call.1} parent=67 // pred_region
          %vm522 = vcmask 24576
          %523 = vst.msk [vmem:[#allocation3] sm:$0x1] %vm522, 0.0
          %524 = vst [vmem:[#allocation4] sm:$0x1] 0.0
          %525 = vst [vmem:[#allocation5] sm:$0x1] 0.0
          %526 = vst [vmem:[#allocation6] sm:$0x1] 0.0
        $region72: #{tpu_custom_call.1} parent=67 // pred_fallthru
          _
        %p527 = scmp.ge.s32.totalorder %s30, 1
        %p528 = pnand %p517, %p527
        %p529 = pneg %p528
        %p530 = scmp.le.s32.totalorder %s30, 3
        %p531 = pnand %p529, %p530
        %p532 = pneg %p531
        // Predicated region
        $region73: #{tpu_custom_call.1} parent=67 // pred_check
          _
        $region74: #{tpu_custom_call.1} parent=67 // pred_check_branch
          %534 = sbr.rel (%p531) target = $region76
        $region75: #{tpu_custom_call.1} parent=67 // pred_region
          %p535 = scmp.eq.s32.totalorder %s30, 1
          // Predicated region
          $region77: #{tpu_custom_call.1} parent=75 // pred_check
            %p536 = pneg %p535
          $region78: #{tpu_custom_call.1} parent=75 // pred_check_branch
            %538 = sbr.rel (%p536) target = $region80
          $region79: #{tpu_custom_call.1} parent=75 // pred_region
            %v539 = vld [vmem:[#allocation3] sm:$0x1]
            %v540 = vmul.f32 %v539, 0.002
            %v541 = vld [vmem:[%s4] sm:$0xf]
            %v542 = vld [vmem:[%s7] sm:$0x1]
            %vm543 = vcmask 31744
            %v545 = vsel %vm543, %v540, 0
            %vm547 = vcmask 1043456
            %v549 = vsel %vm547, %v541, 0
            %551 = vmatprep.subr.mxu0 0.0
            %552 = vmatpush1.msra.mxu0 0.0
            %553 = vmatprep.subr.mxu0 0.0
            %554 = vmatpush1.msra.mxu0 0.0
            %555 = vmatprep.subr.mxu0 0.0
            %556 = vmatpush1.msra.mxu0 0.0
            %557 = vmatprep.subr.mxu0 0.0
            %558 = vmatpush1.msra.mxu0 0.0
            %559 = vmatprep.subr.mxu0 0.0
            %560 = vmatpush1.msra.mxu0 0.0
            %561 = vmatprep.subr.mxu0 0.0
            %562 = vmatpush1.msra.mxu0 0.0
            %563 = vmatprep.subr.mxu0 0.0
            %564 = vmatpush1.msra.mxu0 0.0
            %565 = vmatprep.subr.mxu0 0.0
            %566 = vmatpush1.msra.mxu0 0.0
            %567 = vmatprep.subr.mxu0 0.0
            %568 = vmatpush1.msra.mxu0 0.0
            %569 = vmatprep.subr.mxu0 0.0
            %570 = vmatpush1.msra.mxu0 0.0
            %571 = vmatprep.subr.mxu0 0.0
            %572 = vmatpush1.msra.mxu0 0.0
            %573 = vmatprep.subr.mxu0 0.0
            %574 = vmatpush1.msra.mxu0 0.0
            %575 = vmatprep.subr.mxu0 0.0
            %576 = vmatpush1.msra.mxu0 0.0
            %577 = vmatprep.subr.mxu0 0.0
            %578 = vmatpush1.msra.mxu0 0.0
            %579 = vmatprep.subr.mxu0 0.0
            %580 = vmatpush1.msra.mxu0 0.0
            %581 = vmatprep.subr.mxu0 0.0
            %582 = vmatpush1.msra.mxu0 %v549
            %583 = vmatprep.subr.mxu0 0.0
            %584 = vmatpush2.msra.mxu0 0.0
            %585 = vmatprep.subr.mxu0 0.0
            %586 = vmatpush2.msra.mxu0 0.0
            %587 = vmatprep.subr.mxu0 0.0
            %588 = vmatpush2.msra.mxu0 0.0
            %589 = vmatprep.subr.mxu0 0.0
            %590 = vmatpush2.msra.mxu0 0.0
            %591 = vmatprep.subr.mxu0 0.0
            %592 = vmatpush2.msra.mxu0 0.0
            %593 = vmatprep.subr.mxu0 0.0
            %594 = vmatpush2.msra.mxu0 0.0
            %595 = vmatprep.subr.mxu0 0.0
            %596 = vmatpush2.msra.mxu0 0.0
            %597 = vmatprep.subr.mxu0 0.0
            %598 = vmatpush2.msra.mxu0 0.0
            %599 = vmatprep.subr.mxu0 0.0
            %600 = vmatpush2.msra.mxu0 0.0
            %601 = vmatprep.subr.mxu0 0.0
            %602 = vmatpush2.msra.mxu0 0.0
            %603 = vmatprep.subr.mxu0 0.0
            %604 = vmatpush2.msra.mxu0 0.0
            %605 = vmatprep.subr.mxu0 0.0
            %606 = vmatpush2.msra.mxu0 0.0
            %607 = vmatprep.subr.mxu0 0.0
            %608 = vmatpush2.msra.mxu0 0.0
            %609 = vmatprep.subr.mxu0 0.0
            %610 = vmatpush2.msra.mxu0 0.0
            %611 = vmatprep.subr.mxu0 0.0
            %612 = vmatpush2.msra.mxu0 0.0
            %613 = vmatprep.subr.mxu0 0.0
            %614 = vmatpush2.msra.mxu0 0.0
            %615 = vmatprep.mubr.f32.mxu0 0.0
            %616 = vmatmul.mubr.f32.gmra.mxu0 %v545
            %v617 = vpop.f32.mrf.mxu0
            %v618 = vadd.f32 %v542, %v617
            %v619 = vpop.f32.mrf.mxu0
            %620 = vdwg.mxu0
            %621 = vst [vmem:[#allocation7] sm:$0x1] %v618
          $region80: #{tpu_custom_call.1} parent=75 // pred_fallthru
            _
          %p622 = scmp.ge.s32.totalorder %s30, 2
          // Predicated region
          $region81: #{tpu_custom_call.1} parent=75 // pred_check
            %p623 = pneg %p622
          $region82: #{tpu_custom_call.1} parent=75 // pred_check_branch
            %625 = sbr.rel (%p623) target = $region84
          $region83: #{tpu_custom_call.1} parent=75 // pred_region
            %s626 = ssub.s32 %s30, 1
            %v627 = vld [vmem:[#allocation4] sm:$0x1]
            %v628 = vmul.f32 %v627, 0.002
            %s629 = ssub.s32 %s30, 2
            %s630 = smul.u32 %s629, 128
            %s631 = scalar_lea.vmem %s6, %s630
            %v632 = vld [vmem:[%s631] sm:$0xff]
            %v633 = vld [vmem:[%s631 + $0x8] sm:$0xff]
            %v634 = vld [vmem:[%s631 + $0x10] sm:$0xff]
            %v635 = vld [vmem:[%s631 + $0x18] sm:$0xff]
            %v636 = vld [vmem:[%s631 + $0x20] sm:$0xff]
            %v637 = vld [vmem:[%s631 + $0x28] sm:$0xff]
            %v638 = vld [vmem:[%s631 + $0x30] sm:$0xff]
            %v639 = vld [vmem:[%s631 + $0x38] sm:$0xff]
            %v640 = vld [vmem:[%s631 + $0x40] sm:$0xff]
            %v641 = vld [vmem:[%s631 + $0x48] sm:$0xff]
            %v642 = vld [vmem:[%s631 + $0x50] sm:$0xff]
            %v643 = vld [vmem:[%s631 + $0x58] sm:$0xff]
            %v644 = vld [vmem:[%s631 + $0x60] sm:$0xff]
            %v645 = vld [vmem:[%s631 + $0x68] sm:$0xff]
            %v646 = vld [vmem:[%s631 + $0x70] sm:$0xff]
            %v647 = vld [vmem:[%s631 + $0x78] sm:$0xff]
            %s648 = scalar_lea.vmem %s7, %s626
            %v649 = vld [vmem:[%s648] sm:$0x1]
            %650 = vmatprep.subr.mxu0 0.0
            %651 = vmatpush1.msra.mxu0 %v647
            %652 = vmatprep.subr.mxu0 0.0
            %653 = vmatpush1.msra.mxu0 %v646
            %654 = vmatprep.subr.mxu0 0.0
            %655 = vmatpush1.msra.mxu0 %v645
            %656 = vmatprep.subr.mxu0 0.0
            %657 = vmatpush1.msra.mxu0 %v644
            %658 = vmatprep.subr.mxu0 0.0
            %659 = vmatpush1.msra.mxu0 %v643
            %660 = vmatprep.subr.mxu0 0.0
            %661 = vmatpush1.msra.mxu0 %v642
            %662 = vmatprep.subr.mxu0 0.0
            %663 = vmatpush1.msra.mxu0 %v641
            %664 = vmatprep.subr.mxu0 0.0
            %665 = vmatpush1.msra.mxu0 %v640
            %666 = vmatprep.subr.mxu0 0.0
            %667 = vmatpush1.msra.mxu0 %v639
            %668 = vmatprep.subr.mxu0 0.0
            %669 = vmatpush1.msra.mxu0 %v638
            %670 = vmatprep.subr.mxu0 0.0
            %671 = vmatpush1.msra.mxu0 %v637
            %672 = vmatprep.subr.mxu0 0.0
            %673 = vmatpush1.msra.mxu0 %v636
            %674 = vmatprep.subr.mxu0 0.0
            %675 = vmatpush1.msra.mxu0 %v635
            %676 = vmatprep.subr.mxu0 0.0
            %677 = vmatpush1.msra.mxu0 %v634
            %678 = vmatprep.subr.mxu0 0.0
            %679 = vmatpush1.msra.mxu0 %v633
            %680 = vmatprep.subr.mxu0 0.0
            %681 = vmatpush1.msra.mxu0 %v632
            %682 = vmatprep.subr.mxu0 0.0
            %683 = vmatpush2.msra.mxu0 0.0
            %684 = vmatprep.subr.mxu0 0.0
            %685 = vmatpush2.msra.mxu0 0.0
            %686 = vmatprep.subr.mxu0 0.0
            %687 = vmatpush2.msra.mxu0 0.0
            %688 = vmatprep.subr.mxu0 0.0
            %689 = vmatpush2.msra.mxu0 0.0
            %690 = vmatprep.subr.mxu0 0.0
            %691 = vmatpush2.msra.mxu0 0.0
            %692 = vmatprep.subr.mxu0 0.0
            %693 = vmatpush2.msra.mxu0 0.0
            %694 = vmatprep.subr.mxu0 0.0
            %695 = vmatpush2.msra.mxu0 0.0
            %696 = vmatprep.subr.mxu0 0.0
            %697 = vmatpush2.msra.mxu0 0.0
            %698 = vmatprep.subr.mxu0 0.0
            %699 = vmatpush2.msra.mxu0 0.0
            %700 = vmatprep.subr.mxu0 0.0
            %701 = vmatpush2.msra.mxu0 0.0
            %702 = vmatprep.subr.mxu0 0.0
            %703 = vmatpush2.msra.mxu0 0.0
            %704 = vmatprep.subr.mxu0 0.0
            %705 = vmatpush2.msra.mxu0 0.0
            %706 = vmatprep.subr.mxu0 0.0
            %707 = vmatpush2.msra.mxu0 0.0
            %708 = vmatprep.subr.mxu0 0.0
            %709 = vmatpush2.msra.mxu0 0.0
            %710 = vmatprep.subr.mxu0 0.0
            %711 = vmatpush2.msra.mxu0 0.0
            %712 = vmatprep.subr.mxu0 0.0
            %713 = vmatpush2.msra.mxu0 0.0
            %714 = vmatprep.mubr.f32.mxu0 0.0
            %715 = vmatmul.mubr.f32.gmra.mxu0 %v628
            %v716 = vpop.f32.mrf.mxu0
            %v717 = vadd.f32 %v649, %v716
            %v718 = vpop.f32.mrf.mxu0
            %719 = vdwg.mxu0
            %720 = vst [vmem:[#allocation7] sm:$0x1] %v717
          $region84: #{tpu_custom_call.1} parent=75 // pred_fallthru
            _
          %v721 = vld [vmem:[#allocation5] sm:$0x1]
          %v722 = vmul.f32 %v721, 0.002
          %v723 = vld [vmem:[#allocation6] sm:$0x1]
          %v724 = vmul.f32 %v723, 0.002
          %v725 = vmul.f32 %v722, %v722
          %v726 = vsub.f32 %v724, %v725
          %v727 = vmax.f32 %v726, 0.0
          %v728 = vld [vmem:[#allocation7] sm:$0x1]
          %v729 = vadd.f32 %v722, %v728
          %730 = vst [vmem:[#allocation8] sm:$0x1] %v729
          %v731 = vadd.f32 %v727, 1e-05
          %v732 = vrsqrt.pop %v731
          %733 = vst [vmem:[#allocation9] sm:$0x1] %v732
          %734 = vst [vmem:[#allocation4] sm:$0x1] 0.0
          %735 = vst [vmem:[#allocation5] sm:$0x1] 0.0
          %736 = vst [vmem:[#allocation6] sm:$0x1] 0.0
        $region76: #{tpu_custom_call.1} parent=67 // pred_fallthru
          _
        %p737 = scmp.eq.s32.totalorder %s30, 3
        %p738 = pnand %p737, %p517
        %p739 = pneg %p738
        // Predicated region
        $region85: #{tpu_custom_call.1} parent=67 // pred_check
          _
        $region86: #{tpu_custom_call.1} parent=67 // pred_check_branch
          %741 = sbr.rel (%p738) target = $region88
        $region87: #{tpu_custom_call.1} parent=67 // pred_region
          %742 = vst [vmem:[#allocation10] sm:$0xff] 0.0
          %vm743 = vcmask 7168
          %744 = vst.msk [vmem:[#allocation11] sm:$0xff] %vm743, 0.0
        $region88: #{tpu_custom_call.1} parent=67 // pred_fallthru
          _
        // Predicated region
        $region89: #{tpu_custom_call.1} parent=67 // pred_check
          %p745 = pneg %p516
        $region90: #{tpu_custom_call.1} parent=67 // pred_check_branch
          %747 = sbr.rel (%p745) target = $region92
        $region91: #{tpu_custom_call.1} parent=67 // pred_region
          %v748 = vld [vmem:[%s490] sm:$0xff]
          %v749 = vld [vmem:[%s490 + $0x8] sm:$0xff]
          %v750 = vld [vmem:[%s490 + $0x10] sm:$0xff]
          %v751 = vld [vmem:[%s490 + $0x18] sm:$0xff]
          %v752 = vld [vmem:[%s490 + $0x20] sm:$0xff]
          %v753 = vld [vmem:[%s490 + $0x28] sm:$0xff]
          %v754 = vld [vmem:[%s490 + $0x30] sm:$0xff]
          %v755 = vld [vmem:[%s490 + $0x38] sm:$0xff]
          %v756 = vld [vmem:[%s490 + $0x40] sm:$0xff]
          %v757 = vld [vmem:[%s490 + $0x48] sm:$0xff]
          %v758 = vld [vmem:[%s490 + $0x50] sm:$0xff]
          %v759 = vld [vmem:[%s490 + $0x58] sm:$0xff]
          %v760 = vld [vmem:[%s490 + $0x60] sm:$0xff]
          %v761 = vld [vmem:[%s490 + $0x68] sm:$0xff]
          %v762 = vld [vmem:[%s490 + $0x70] sm:$0xff]
          %v763 = vld [vmem:[%s490 + $0x78] sm:$0xff]
          %v764 = vld [vmem:[%s490 + $0x80] sm:$0xff]
          %v765 = vld [vmem:[%s490 + $0x88] sm:$0xff]
          %v766 = vld [vmem:[%s490 + $0x90] sm:$0xff]
          %v767 = vld [vmem:[%s490 + $0x98] sm:$0xff]
          %v768 = vld [vmem:[%s490 + $0xa0] sm:$0xff]
          %v769 = vld [vmem:[%s490 + $0xa8] sm:$0xff]
          %v770 = vld [vmem:[%s490 + $0xb0] sm:$0xff]
          %v771 = vld [vmem:[%s490 + $0xb8] sm:$0xff]
          %v772 = vld [vmem:[%s490 + $0xc0] sm:$0xff]
          %v773 = vld [vmem:[%s490 + $0xc8] sm:$0xff]
          %v774 = vld [vmem:[%s490 + $0xd0] sm:$0xff]
          %v775 = vld [vmem:[%s490 + $0xd8] sm:$0xff]
          %v776 = vld [vmem:[%s490 + $0xe0] sm:$0xff]
          %v777 = vld [vmem:[%s490 + $0xe8] sm:$0xff]
          %v778 = vld [vmem:[%s490 + $0xf0] sm:$0xff]
          %v779 = vld [vmem:[%s490 + $0xf8] sm:$0xff]
          %v780 = vld [vmem:[%s3] sm:$0xf]
          %vm781 = vcmask 31744
          %v783 = vsel %vm781, %v748, 0
          %v786 = vsel %vm781, %v749, 0
          %v789 = vsel %vm781, %v750, 0
          %v792 = vsel %vm781, %v751, 0
          %v795 = vsel %vm781, %v752, 0
          %v798 = vsel %vm781, %v753, 0
          %v801 = vsel %vm781, %v754, 0
          %v804 = vsel %vm781, %v755, 0
          %v807 = vsel %vm781, %v756, 0
          %v810 = vsel %vm781, %v757, 0
          %v813 = vsel %vm781, %v758, 0
          %v816 = vsel %vm781, %v759, 0
          %v819 = vsel %vm781, %v760, 0
          %v822 = vsel %vm781, %v761, 0
          %v825 = vsel %vm781, %v762, 0
          %v828 = vsel %vm781, %v763, 0
          %v831 = vsel %vm781, %v764, 0
          %v834 = vsel %vm781, %v765, 0
          %v837 = vsel %vm781, %v766, 0
          %v840 = vsel %vm781, %v767, 0
          %v843 = vsel %vm781, %v768, 0
          %v846 = vsel %vm781, %v769, 0
          %v849 = vsel %vm781, %v770, 0
          %v852 = vsel %vm781, %v771, 0
          %v855 = vsel %vm781, %v772, 0
          %v858 = vsel %vm781, %v773, 0
          %v861 = vsel %vm781, %v774, 0
          %v864 = vsel %vm781, %v775, 0
          %v867 = vsel %vm781, %v776, 0
          %v870 = vsel %vm781, %v777, 0
          %v873 = vsel %vm781, %v778, 0
          %v876 = vsel %vm781, %v779, 0
          %vm878 = vcmask 1043456
          %v880 = vsel %vm878, %v780, 0
          %882 = vmatprep.subr.mxu0 0.0
          %883 = vmatpush1.msra.mxu0 0.0
          %884 = vmatprep.subr.mxu0 0.0
          %885 = vmatpush1.msra.mxu0 0.0
          %886 = vmatprep.subr.mxu0 0.0
          %887 = vmatpush1.msra.mxu0 0.0
          %888 = vmatprep.subr.mxu0 0.0
          %889 = vmatpush1.msra.mxu0 0.0
          %890 = vmatprep.subr.mxu0 0.0
          %891 = vmatpush1.msra.mxu0 0.0
          %892 = vmatprep.subr.mxu0 0.0
          %893 = vmatpush1.msra.mxu0 0.0
          %894 = vmatprep.subr.mxu0 0.0
          %895 = vmatpush1.msra.mxu0 0.0
          %896 = vmatprep.subr.mxu0 0.0
          %897 = vmatpush1.msra.mxu0 0.0
          %898 = vmatprep.subr.mxu0 0.0
          %899 = vmatpush1.msra.mxu0 0.0
          %900 = vmatprep.subr.mxu0 0.0
          %901 = vmatpush1.msra.mxu0 0.0
          %902 = vmatprep.subr.mxu0 0.0
          %903 = vmatpush1.msra.mxu0 0.0
          %904 = vmatprep.subr.mxu0 0.0
          %905 = vmatpush1.msra.mxu0 0.0
          %906 = vmatprep.subr.mxu0 0.0
          %907 = vmatpush1.msra.mxu0 0.0
          %908 = vmatprep.subr.mxu0 0.0
          %909 = vmatpush1.msra.mxu0 0.0
          %910 = vmatprep.subr.mxu0 0.0
          %911 = vmatpush1.msra.mxu0 0.0
          %912 = vmatprep.subr.mxu0 0.0
          %913 = vmatpush1.msra.mxu0 %v880
          %914 = vmatprep.subr.mxu0 0.0
          %915 = vmatpush2.msra.mxu0 0.0
          %916 = vmatprep.subr.mxu0 0.0
          %917 = vmatpush2.msra.mxu0 0.0
          %918 = vmatprep.subr.mxu0 0.0
          %919 = vmatpush2.msra.mxu0 0.0
          %920 = vmatprep.subr.mxu0 0.0
          %921 = vmatpush2.msra.mxu0 0.0
          %922 = vmatprep.subr.mxu0 0.0
          %923 = vmatpush2.msra.mxu0 0.0
          %924 = vmatprep.subr.mxu0 0.0
          %925 = vmatpush2.msra.mxu0 0.0
          %926 = vmatprep.subr.mxu0 0.0
          %927 = vmatpush2.msra.mxu0 0.0
          %928 = vmatprep.subr.mxu0 0.0
          %929 = vmatpush2.msra.mxu0 0.0
          %930 = vmatprep.subr.mxu0 0.0
          %931 = vmatpush2.msra.mxu0 0.0
          %932 = vmatprep.subr.mxu0 0.0
          %933 = vmatpush2.msra.mxu0 0.0
          %934 = vmatprep.subr.mxu0 0.0
          %935 = vmatpush2.msra.mxu0 0.0
          %936 = vmatprep.subr.mxu0 0.0
          %937 = vmatpush2.msra.mxu0 0.0
          %938 = vmatprep.subr.mxu0 0.0
          %939 = vmatpush2.msra.mxu0 0.0
          %940 = vmatprep.subr.mxu0 0.0
          %941 = vmatpush2.msra.mxu0 0.0
          %942 = vmatprep.subr.mxu0 0.0
          %943 = vmatpush2.msra.mxu0 0.0
          %944 = vmatprep.subr.mxu0 0.0
          %945 = vmatpush2.msra.mxu0 0.0
          %946 = vmatprep.mubr.f32.mxu0 0.0
          %947 = vmatmul.mubr.f32.gmra.mxu0 %v783
          %v948 = vpop.f32.mrf.mxu0
          %v949 = vadd.f32 0.0, %v948
          %v950 = vpop.f32.mrf.mxu0
          %951 = vmatprep.mubr.f32.mxu0 0.0
          %952 = vmatmul.mubr.f32.gmra.mxu0 %v786
          %v953 = vpop.f32.mrf.mxu0
          %v954 = vadd.f32 0.0, %v953
          %v955 = vpop.f32.mrf.mxu0
          %956 = vmatprep.mubr.f32.mxu0 0.0
          %957 = vmatmul.mubr.f32.gmra.mxu0 %v789
          %v958 = vpop.f32.mrf.mxu0
          %v959 = vadd.f32 0.0, %v958
          %v960 = vpop.f32.mrf.mxu0
          %961 = vmatprep.mubr.f32.mxu0 0.0
          %962 = vmatmul.mubr.f32.gmra.mxu0 %v792
          %v963 = vpop.f32.mrf.mxu0
          %v964 = vadd.f32 0.0, %v963
          %v965 = vpop.f32.mrf.mxu0
          %966 = vmatprep.mubr.f32.mxu0 0.0
          %967 = vmatmul.mubr.f32.gmra.mxu0 %v795
          %v968 = vpop.f32.mrf.mxu0
          %v969 = vadd.f32 0.0, %v968
          %v970 = vpop.f32.mrf.mxu0
          %971 = vmatprep.mubr.f32.mxu0 0.0
          %972 = vmatmul.mubr.f32.gmra.mxu0 %v798
          %v973 = vpop.f32.mrf.mxu0
          %v974 = vadd.f32 0.0, %v973
          %v975 = vpop.f32.mrf.mxu0
          %976 = vmatprep.mubr.f32.mxu0 0.0
          %977 = vmatmul.mubr.f32.gmra.mxu0 %v801
          %v978 = vpop.f32.mrf.mxu0
          %v979 = vadd.f32 0.0, %v978
          %v980 = vpop.f32.mrf.mxu0
          %981 = vmatprep.mubr.f32.mxu0 0.0
          %982 = vmatmul.mubr.f32.gmra.mxu0 %v804
          %v983 = vpop.f32.mrf.mxu0
          %v984 = vadd.f32 0.0, %v983
          %v985 = vpop.f32.mrf.mxu0
          %986 = vmatprep.mubr.f32.mxu0 0.0
          %987 = vmatmul.mubr.f32.gmra.mxu0 %v807
          %v988 = vpop.f32.mrf.mxu0
          %v989 = vadd.f32 0.0, %v988
          %v990 = vpop.f32.mrf.mxu0
          %991 = vmatprep.mubr.f32.mxu0 0.0
          %992 = vmatmul.mubr.f32.gmra.mxu0 %v810
          %v993 = vpop.f32.mrf.mxu0
          %v994 = vadd.f32 0.0, %v993
          %v995 = vpop.f32.mrf.mxu0
          %996 = vmatprep.mubr.f32.mxu0 0.0
          %997 = vmatmul.mubr.f32.gmra.mxu0 %v813
          %v998 = vpop.f32.mrf.mxu0
          %v999 = vadd.f32 0.0, %v998
          %v1000 = vpop.f32.mrf.mxu0
          %1001 = vmatprep.mubr.f32.mxu0 0.0
          %1002 = vmatmul.mubr.f32.gmra.mxu0 %v816
          %v1003 = vpop.f32.mrf.mxu0
          %v1004 = vadd.f32 0.0, %v1003
          %v1005 = vpop.f32.mrf.mxu0
          %1006 = vmatprep.mubr.f32.mxu0 0.0
          %1007 = vmatmul.mubr.f32.gmra.mxu0 %v819
          %v1008 = vpop.f32.mrf.mxu0
          %v1009 = vadd.f32 0.0, %v1008
          %v1010 = vpop.f32.mrf.mxu0
          %1011 = vmatprep.mubr.f32.mxu0 0.0
          %1012 = vmatmul.mubr.f32.gmra.mxu0 %v822
          %v1013 = vpop.f32.mrf.mxu0
          %v1014 = vadd.f32 0.0, %v1013
          %v1015 = vpop.f32.mrf.mxu0
          %1016 = vmatprep.mubr.f32.mxu0 0.0
          %1017 = vmatmul.mubr.f32.gmra.mxu0 %v825
          %v1018 = vpop.f32.mrf.mxu0
          %v1019 = vadd.f32 0.0, %v1018
          %v1020 = vpop.f32.mrf.mxu0
          %1021 = vmatprep.mubr.f32.mxu0 0.0
          %1022 = vmatmul.mubr.f32.gmra.mxu0 %v828
          %v1023 = vpop.f32.mrf.mxu0
          %v1024 = vadd.f32 0.0, %v1023
          %v1025 = vpop.f32.mrf.mxu0
          %1026 = vmatprep.mubr.f32.mxu0 0.0
          %1027 = vmatmul.mubr.f32.gmra.mxu0 %v831
          %v1028 = vpop.f32.mrf.mxu0
          %v1029 = vadd.f32 0.0, %v1028
          %v1030 = vpop.f32.mrf.mxu0
          %1031 = vmatprep.mubr.f32.mxu0 0.0
          %1032 = vmatmul.mubr.f32.gmra.mxu0 %v834
          %v1033 = vpop.f32.mrf.mxu0
          %v1034 = vadd.f32 0.0, %v1033
          %v1035 = vpop.f32.mrf.mxu0
          %1036 = vmatprep.mubr.f32.mxu0 0.0
          %1037 = vmatmul.mubr.f32.gmra.mxu0 %v837
          %v1038 = vpop.f32.mrf.mxu0
          %v1039 = vadd.f32 0.0, %v1038
          %v1040 = vpop.f32.mrf.mxu0
          %1041 = vmatprep.mubr.f32.mxu0 0.0
          %1042 = vmatmul.mubr.f32.gmra.mxu0 %v840
          %v1043 = vpop.f32.mrf.mxu0
          %v1044 = vadd.f32 0.0, %v1043
          %v1045 = vpop.f32.mrf.mxu0
          %1046 = vmatprep.mubr.f32.mxu0 0.0
          %1047 = vmatmul.mubr.f32.gmra.mxu0 %v843
          %v1048 = vpop.f32.mrf.mxu0
          %v1049 = vadd.f32 0.0, %v1048
          %v1050 = vpop.f32.mrf.mxu0
          %1051 = vmatprep.mubr.f32.mxu0 0.0
          %1052 = vmatmul.mubr.f32.gmra.mxu0 %v846
          %v1053 = vpop.f32.mrf.mxu0
          %v1054 = vadd.f32 0.0, %v1053
          %v1055 = vpop.f32.mrf.mxu0
          %1056 = vmatprep.mubr.f32.mxu0 0.0
          %1057 = vmatmul.mubr.f32.gmra.mxu0 %v849
          %v1058 = vpop.f32.mrf.mxu0
          %v1059 = vadd.f32 0.0, %v1058
          %v1060 = vpop.f32.mrf.mxu0
          %1061 = vmatprep.mubr.f32.mxu0 0.0
          %1062 = vmatmul.mubr.f32.gmra.mxu0 %v852
          %v1063 = vpop.f32.mrf.mxu0
          %v1064 = vadd.f32 0.0, %v1063
          %v1065 = vpop.f32.mrf.mxu0
          %1066 = vmatprep.mubr.f32.mxu0 0.0
          %1067 = vmatmul.mubr.f32.gmra.mxu0 %v855
          %v1068 = vpop.f32.mrf.mxu0
          %v1069 = vadd.f32 0.0, %v1068
          %v1070 = vpop.f32.mrf.mxu0
          %1071 = vmatprep.mubr.f32.mxu0 0.0
          %1072 = vmatmul.mubr.f32.gmra.mxu0 %v858
          %v1073 = vpop.f32.mrf.mxu0
          %v1074 = vadd.f32 0.0, %v1073
          %v1075 = vpop.f32.mrf.mxu0
          %1076 = vmatprep.mubr.f32.mxu0 0.0
          %1077 = vmatmul.mubr.f32.gmra.mxu0 %v861
          %v1078 = vpop.f32.mrf.mxu0
          %v1079 = vadd.f32 0.0, %v1078
          %v1080 = vpop.f32.mrf.mxu0
          %1081 = vmatprep.mubr.f32.mxu0 0.0
          %1082 = vmatmul.mubr.f32.gmra.mxu0 %v864
          %v1083 = vpop.f32.mrf.mxu0
          %v1084 = vadd.f32 0.0, %v1083
          %v1085 = vpop.f32.mrf.mxu0
          %1086 = vmatprep.mubr.f32.mxu0 0.0
          %1087 = vmatmul.mubr.f32.gmra.mxu0 %v867
          %v1088 = vpop.f32.mrf.mxu0
          %v1089 = vadd.f32 0.0, %v1088
          %v1090 = vpop.f32.mrf.mxu0
          %1091 = vmatprep.mubr.f32.mxu0 0.0
          %1092 = vmatmul.mubr.f32.gmra.mxu0 %v870
          %v1093 = vpop.f32.mrf.mxu0
          %v1094 = vadd.f32 0.0, %v1093
          %v1095 = vpop.f32.mrf.mxu0
          %1096 = vmatprep.mubr.f32.mxu0 0.0
          %1097 = vmatmul.mubr.f32.gmra.mxu0 %v873
          %v1098 = vpop.f32.mrf.mxu0
          %v1099 = vadd.f32 0.0, %v1098
          %v1100 = vpop.f32.mrf.mxu0
          %1101 = vmatprep.mubr.f32.mxu0 0.0
          %1102 = vmatmul.mubr.f32.gmra.mxu0 %v876
          %v1103 = vpop.f32.mrf.mxu0
          %v1104 = vadd.f32 0.0, %v1103
          %v1105 = vpop.f32.mrf.mxu0
          %1106 = vdwg.mxu0
          %s1107 = smul.u32 %s31, 256
          %s1108 = scalar_lea.vmem [#allocation2], %s1107
          %1109 = vst [vmem:[%s1108] sm:$0xff] %v949
          %1110 = vst [vmem:[%s1108 + $0x8] sm:$0xff] %v954
          %1111 = vst [vmem:[%s1108 + $0x10] sm:$0xff] %v959
          %1112 = vst [vmem:[%s1108 + $0x18] sm:$0xff] %v964
          %1113 = vst [vmem:[%s1108 + $0x20] sm:$0xff] %v969
          %1114 = vst [vmem:[%s1108 + $0x28] sm:$0xff] %v974
          %1115 = vst [vmem:[%s1108 + $0x30] sm:$0xff] %v979
          %1116 = vst [vmem:[%s1108 + $0x38] sm:$0xff] %v984
          %1117 = vst [vmem:[%s1108 + $0x40] sm:$0xff] %v989
          %1118 = vst [vmem:[%s1108 + $0x48] sm:$0xff] %v994
          %1119 = vst [vmem:[%s1108 + $0x50] sm:$0xff] %v999
          %1120 = vst [vmem:[%s1108 + $0x58] sm:$0xff] %v1004
          %1121 = vst [vmem:[%s1108 + $0x60] sm:$0xff] %v1009
          %1122 = vst [vmem:[%s1108 + $0x68] sm:$0xff] %v1014
          %1123 = vst [vmem:[%s1108 + $0x70] sm:$0xff] %v1019
          %1124 = vst [vmem:[%s1108 + $0x78] sm:$0xff] %v1024
          %1125 = vst [vmem:[%s1108 + $0x80] sm:$0xff] %v1029
          %1126 = vst [vmem:[%s1108 + $0x88] sm:$0xff] %v1034
          %1127 = vst [vmem:[%s1108 + $0x90] sm:$0xff] %v1039
          %1128 = vst [vmem:[%s1108 + $0x98] sm:$0xff] %v1044
          %1129 = vst [vmem:[%s1108 + $0xa0] sm:$0xff] %v1049
          %1130 = vst [vmem:[%s1108 + $0xa8] sm:$0xff] %v1054
          %1131 = vst [vmem:[%s1108 + $0xb0] sm:$0xff] %v1059
          %1132 = vst [vmem:[%s1108 + $0xb8] sm:$0xff] %v1064
          %1133 = vst [vmem:[%s1108 + $0xc0] sm:$0xff] %v1069
          %1134 = vst [vmem:[%s1108 + $0xc8] sm:$0xff] %v1074
          %1135 = vst [vmem:[%s1108 + $0xd0] sm:$0xff] %v1079
          %1136 = vst [vmem:[%s1108 + $0xd8] sm:$0xff] %v1084
          %1137 = vst [vmem:[%s1108 + $0xe0] sm:$0xff] %v1089
          %1138 = vst [vmem:[%s1108 + $0xe8] sm:$0xff] %v1094
          %1139 = vst [vmem:[%s1108 + $0xf0] sm:$0xff] %v1099
          %1140 = vst [vmem:[%s1108 + $0xf8] sm:$0xff] %v1104
          %v1141 = vld [vmem:[#allocation3] sm:$0x1]
          %v1142 = vsel %vm781, %v748, 0.0
          %v1143 = vsel %vm781, %v749, 0.0
          %v1144 = vadd.f32 %v1142, %v1143
          %v1145 = vsel %vm781, %v750, 0.0
          %v1146 = vadd.f32 %v1144, %v1145
          %v1147 = vsel %vm781, %v751, 0.0
          %v1148 = vadd.f32 %v1146, %v1147
          %v1149 = vsel %vm781, %v752, 0.0
          %v1150 = vadd.f32 %v1148, %v1149
          %v1151 = vsel %vm781, %v753, 0.0
          %v1152 = vadd.f32 %v1150, %v1151
          %v1153 = vsel %vm781, %v754, 0.0
          %v1154 = vadd.f32 %v1152, %v1153
          %v1155 = vsel %vm781, %v755, 0.0
          %v1156 = vadd.f32 %v1154, %v1155
          %v1157 = vsel %vm781, %v756, 0.0
          %v1158 = vadd.f32 %v1156, %v1157
          %v1159 = vsel %vm781, %v757, 0.0
          %v1160 = vadd.f32 %v1158, %v1159
          %v1161 = vsel %vm781, %v758, 0.0
          %v1162 = vadd.f32 %v1160, %v1161
          %v1163 = vsel %vm781, %v759, 0.0
          %v1164 = vadd.f32 %v1162, %v1163
          %v1165 = vsel %vm781, %v760, 0.0
          %v1166 = vadd.f32 %v1164, %v1165
          %v1167 = vsel %vm781, %v761, 0.0
          %v1168 = vadd.f32 %v1166, %v1167
          %v1169 = vsel %vm781, %v762, 0.0
          %v1170 = vadd.f32 %v1168, %v1169
          %v1171 = vsel %vm781, %v763, 0.0
          %v1172 = vadd.f32 %v1170, %v1171
          %v1173 = vsel %vm781, %v764, 0.0
          %v1174 = vadd.f32 %v1172, %v1173
          %v1175 = vsel %vm781, %v765, 0.0
          %v1176 = vadd.f32 %v1174, %v1175
          %v1177 = vsel %vm781, %v766, 0.0
          %v1178 = vadd.f32 %v1176, %v1177
          %v1179 = vsel %vm781, %v767, 0.0
          %v1180 = vadd.f32 %v1178, %v1179
          %v1181 = vsel %vm781, %v768, 0.0
          %v1182 = vadd.f32 %v1180, %v1181
          %v1183 = vsel %vm781, %v769, 0.0
          %v1184 = vadd.f32 %v1182, %v1183
          %v1185 = vsel %vm781, %v770, 0.0
          %v1186 = vadd.f32 %v1184, %v1185
          %v1187 = vsel %vm781, %v771, 0.0
          %v1188 = vadd.f32 %v1186, %v1187
          %v1189 = vsel %vm781, %v772, 0.0
          %v1190 = vadd.f32 %v1188, %v1189
          %v1191 = vsel %vm781, %v773, 0.0
          %v1192 = vadd.f32 %v1190, %v1191
          %v1193 = vsel %vm781, %v774, 0.0
          %v1194 = vadd.f32 %v1192, %v1193
          %v1195 = vsel %vm781, %v775, 0.0
          %v1196 = vadd.f32 %v1194, %v1195
          %v1197 = vsel %vm781, %v776, 0.0
          %v1198 = vadd.f32 %v1196, %v1197
          %v1199 = vsel %vm781, %v777, 0.0
          %v1200 = vadd.f32 %v1198, %v1199
          %v1201 = vsel %vm781, %v778, 0.0
          %v1202 = vadd.f32 %v1200, %v1201
          %v1203 = vsel %vm781, %v779, 0.0
          %v1204 = vadd.f32 %v1202, %v1203
          %v1205 = vrot.slane %v1204, 4
          %v1206 = vadd.f32 %v1204, %v1205
          %v1207 = vrot.slane %v1206, 2
          %v1208 = vadd.f32 %v1206, %v1207
          %v1209 = vrot.slane %v1208, 1
          %v1210 = vadd.f32 %v1208, %v1209
          %v1211 = vadd.f32 %v1141, %v1210
          %vm1212 = vcmask 24576
          %1213 = vst.msk [vmem:[#allocation3] sm:$0x1] %vm1212, %v1211
          %v1214 = vld [vmem:[#allocation5] sm:$0x1]
          %v1215 = vadd.f32 %v949, %v954
          %v1216 = vadd.f32 %v1215, %v959
          %v1217 = vadd.f32 %v1216, %v964
          %v1218 = vadd.f32 %v1217, %v969
          %v1219 = vadd.f32 %v1218, %v974
          %v1220 = vadd.f32 %v1219, %v979
          %v1221 = vadd.f32 %v1220, %v984
          %v1222 = vadd.f32 %v1221, %v989
          %v1223 = vadd.f32 %v1222, %v994
          %v1224 = vadd.f32 %v1223, %v999
          %v1225 = vadd.f32 %v1224, %v1004
          %v1226 = vadd.f32 %v1225, %v1009
          %v1227 = vadd.f32 %v1226, %v1014
          %v1228 = vadd.f32 %v1227, %v1019
          %v1229 = vadd.f32 %v1228, %v1024
          %v1230 = vadd.f32 %v1229, %v1029
          %v1231 = vadd.f32 %v1230, %v1034
          %v1232 = vadd.f32 %v1231, %v1039
          %v1233 = vadd.f32 %v1232, %v1044
          %v1234 = vadd.f32 %v1233, %v1049
          %v1235 = vadd.f32 %v1234, %v1054
          %v1236 = vadd.f32 %v1235, %v1059
          %v1237 = vadd.f32 %v1236, %v1064
          %v1238 = vadd.f32 %v1237, %v1069
          %v1239 = vadd.f32 %v1238, %v1074
          %v1240 = vadd.f32 %v1239, %v1079
          %v1241 = vadd.f32 %v1240, %v1084
          %v1242 = vadd.f32 %v1241, %v1089
          %v1243 = vadd.f32 %v1242, %v1094
          %v1244 = vadd.f32 %v1243, %v1099
          %v1245 = vadd.f32 %v1244, %v1104
          %v1246 = vrot.slane %v1245, 4
          %v1247 = vadd.f32 %v1245, %v1246
          %v1248 = vrot.slane %v1247, 2
          %v1249 = vadd.f32 %v1247, %v1248
          %v1250 = vrot.slane %v1249, 1
          %v1251 = vadd.f32 %v1249, %v1250
          %v1252 = vadd.f32 %v1214, %v1251
          %1253 = vst [vmem:[#allocation5] sm:$0x1] %v1252
          %v1254 = vld [vmem:[#allocation6] sm:$0x1]
          %v1255 = vmul.f32 %v949, %v949
          %v1256 = vmul.f32 %v954, %v954
          %v1257 = vmul.f32 %v959, %v959
          %v1258 = vmul.f32 %v964, %v964
          %v1259 = vmul.f32 %v969, %v969
          %v1260 = vmul.f32 %v974, %v974
          %v1261 = vmul.f32 %v979, %v979
          %v1262 = vmul.f32 %v984, %v984
          %v1263 = vmul.f32 %v989, %v989
          %v1264 = vmul.f32 %v994, %v994
          %v1265 = vmul.f32 %v999, %v999
          %v1266 = vmul.f32 %v1004, %v1004
          %v1267 = vmul.f32 %v1009, %v1009
          %v1268 = vmul.f32 %v1014, %v1014
          %v1269 = vmul.f32 %v1019, %v1019
          %v1270 = vmul.f32 %v1024, %v1024
          %v1271 = vmul.f32 %v1029, %v1029
          %v1272 = vmul.f32 %v1034, %v1034
          %v1273 = vmul.f32 %v1039, %v1039
          %v1274 = vmul.f32 %v1044, %v1044
          %v1275 = vmul.f32 %v1049, %v1049
          %v1276 = vmul.f32 %v1054, %v1054
          %v1277 = vmul.f32 %v1059, %v1059
          %v1278 = vmul.f32 %v1064, %v1064
          %v1279 = vmul.f32 %v1069, %v1069
          %v1280 = vmul.f32 %v1074, %v1074
          %v1281 = vmul.f32 %v1079, %v1079
          %v1282 = vmul.f32 %v1084, %v1084
          %v1283 = vmul.f32 %v1089, %v1089
          %v1284 = vmul.f32 %v1094, %v1094
          %v1285 = vmul.f32 %v1099, %v1099
          %v1286 = vmul.f32 %v1104, %v1104
          %v1287 = vadd.f32 %v1255, %v1256
          %v1288 = vadd.f32 %v1287, %v1257
          %v1289 = vadd.f32 %v1288, %v1258
          %v1290 = vadd.f32 %v1289, %v1259
          %v1291 = vadd.f32 %v1290, %v1260
          %v1292 = vadd.f32 %v1291, %v1261
          %v1293 = vadd.f32 %v1292, %v1262
          %v1294 = vadd.f32 %v1293, %v1263
          %v1295 = vadd.f32 %v1294, %v1264
          %v1296 = vadd.f32 %v1295, %v1265
          %v1297 = vadd.f32 %v1296, %v1266
          %v1298 = vadd.f32 %v1297, %v1267
          %v1299 = vadd.f32 %v1298, %v1268
          %v1300 = vadd.f32 %v1299, %v1269
          %v1301 = vadd.f32 %v1300, %v1270
          %v1302 = vadd.f32 %v1301, %v1271
          %v1303 = vadd.f32 %v1302, %v1272
          %v1304 = vadd.f32 %v1303, %v1273
          %v1305 = vadd.f32 %v1304, %v1274
          %v1306 = vadd.f32 %v1305, %v1275
          %v1307 = vadd.f32 %v1306, %v1276
          %v1308 = vadd.f32 %v1307, %v1277
          %v1309 = vadd.f32 %v1308, %v1278
          %v1310 = vadd.f32 %v1309, %v1279
          %v1311 = vadd.f32 %v1310, %v1280
          %v1312 = vadd.f32 %v1311, %v1281
          %v1313 = vadd.f32 %v1312, %v1282
          %v1314 = vadd.f32 %v1313, %v1283
          %v1315 = vadd.f32 %v1314, %v1284
          %v1316 = vadd.f32 %v1315, %v1285
          %v1317 = vadd.f32 %v1316, %v1286
          %v1318 = vrot.slane %v1317, 4
          %v1319 = vadd.f32 %v1317, %v1318
          %v1320 = vrot.slane %v1319, 2
          %v1321 = vadd.f32 %v1319, %v1320
          %v1322 = vrot.slane %v1321, 1
          %v1323 = vadd.f32 %v1321, %v1322
          %v1324 = vadd.f32 %v1254, %v1323
          %1325 = vst [vmem:[#allocation6] sm:$0x1] %v1324
        $region92: #{tpu_custom_call.1} parent=67 // pred_fallthru
          _
        %p1326 = scmp.le.s32.totalorder %s30, 2
        %p1327 = pnand %p527, %p1326
        %p1328 = pneg %p1327
        // Predicated region
        $region93: #{tpu_custom_call.1} parent=67 // pred_check
          _
        $region94: #{tpu_custom_call.1} parent=67 // pred_check_branch
          %1330 = sbr.rel (%p1327) target = $region96
        $region95: #{tpu_custom_call.1} parent=67 // pred_region
          %v1331 = vlaneseq
          %v1332 = vshrl.u32 %v1331, 7
          %v1333 = vadd.s32 %v1332, 8
          %v1334 = vadd.s32 %v1332, 16
          %v1335 = vadd.s32 %v1332, 24
          %v1336 = vadd.s32 %v1332, 32
          %v1337 = vadd.s32 %v1332, 40
          %v1338 = vadd.s32 %v1332, 48
          %v1339 = vadd.s32 %v1332, 56
          %v1340 = vadd.s32 %v1332, 64
          %v1341 = vadd.s32 %v1332, 72
          %v1342 = vadd.s32 %v1332, 80
          %v1343 = vadd.s32 %v1332, 88
          %v1344 = vadd.s32 %v1332, 96
          %v1345 = vadd.s32 %v1332, 104
          %v1346 = vadd.s32 %v1332, 112
          %v1347 = vadd.s32 %v1332, 120
          %v1348 = vadd.s32 %v1332, 128
          %v1349 = vadd.s32 %v1332, 136
          %v1350 = vadd.s32 %v1332, 144
          %v1351 = vadd.s32 %v1332, 152
          %v1352 = vadd.s32 %v1332, 160
          %v1353 = vadd.s32 %v1332, 168
          %v1354 = vadd.s32 %v1332, 176
          %v1355 = vadd.s32 %v1332, 184
          %v1356 = vadd.s32 %v1332, 192
          %v1357 = vadd.s32 %v1332, 200
          %v1358 = vadd.s32 %v1332, 208
          %v1359 = vadd.s32 %v1332, 216
          %v1360 = vadd.s32 %v1332, 224
          %v1361 = vadd.s32 %v1332, 232
          %v1362 = vadd.s32 %v1332, 240
          %v1363 = vadd.s32 %v1332, 248
          %s1364 = smul.u32 %s31, 256
          %v1365 = vstv %s1364
          %v1366 = vadd.s32 %v1332, %v1365
          %v1367 = vadd.s32 %v1333, %v1365
          %v1368 = vadd.s32 %v1334, %v1365
          %v1369 = vadd.s32 %v1335, %v1365
          %v1370 = vadd.s32 %v1336, %v1365
          %v1371 = vadd.s32 %v1337, %v1365
          %v1372 = vadd.s32 %v1338, %v1365
          %v1373 = vadd.s32 %v1339, %v1365
          %v1374 = vadd.s32 %v1340, %v1365
          %v1375 = vadd.s32 %v1341, %v1365
          %v1376 = vadd.s32 %v1342, %v1365
          %v1377 = vadd.s32 %v1343, %v1365
          %v1378 = vadd.s32 %v1344, %v1365
          %v1379 = vadd.s32 %v1345, %v1365
          %v1380 = vadd.s32 %v1346, %v1365
          %v1381 = vadd.s32 %v1347, %v1365
          %v1382 = vadd.s32 %v1348, %v1365
          %v1383 = vadd.s32 %v1349, %v1365
          %v1384 = vadd.s32 %v1350, %v1365
          %v1385 = vadd.s32 %v1351, %v1365
          %v1386 = vadd.s32 %v1352, %v1365
          %v1387 = vadd.s32 %v1353, %v1365
          %v1388 = vadd.s32 %v1354, %v1365
          %v1389 = vadd.s32 %v1355, %v1365
          %v1390 = vadd.s32 %v1356, %v1365
          %v1391 = vadd.s32 %v1357, %v1365
          %v1392 = vadd.s32 %v1358, %v1365
          %v1393 = vadd.s32 %v1359, %v1365
          %v1394 = vadd.s32 %v1360, %v1365
          %v1395 = vadd.s32 %v1361, %v1365
          %v1396 = vadd.s32 %v1362, %v1365
          %v1397 = vadd.s32 %v1363, %v1365
          %vm1398 = vcmp.lt.s32.totalorder %v1366, 500
          %vm1399 = vcmp.lt.s32.totalorder %v1367, 500
          %vm1400 = vcmp.lt.s32.totalorder %v1368, 500
          %vm1401 = vcmp.lt.s32.totalorder %v1369, 500
          %vm1402 = vcmp.lt.s32.totalorder %v1370, 500
          %vm1403 = vcmp.lt.s32.totalorder %v1371, 500
          %vm1404 = vcmp.lt.s32.totalorder %v1372, 500
          %vm1405 = vcmp.lt.s32.totalorder %v1373, 500
          %vm1406 = vcmp.lt.s32.totalorder %v1374, 500
          %vm1407 = vcmp.lt.s32.totalorder %v1375, 500
          %vm1408 = vcmp.lt.s32.totalorder %v1376, 500
          %vm1409 = vcmp.lt.s32.totalorder %v1377, 500
          %vm1410 = vcmp.lt.s32.totalorder %v1378, 500
          %vm1411 = vcmp.lt.s32.totalorder %v1379, 500
          %vm1412 = vcmp.lt.s32.totalorder %v1380, 500
          %vm1413 = vcmp.lt.s32.totalorder %v1381, 500
          %vm1414 = vcmp.lt.s32.totalorder %v1382, 500
          %vm1415 = vcmp.lt.s32.totalorder %v1383, 500
          %vm1416 = vcmp.lt.s32.totalorder %v1384, 500
          %vm1417 = vcmp.lt.s32.totalorder %v1385, 500
          %vm1418 = vcmp.lt.s32.totalorder %v1386, 500
          %vm1419 = vcmp.lt.s32.totalorder %v1387, 500
          %vm1420 = vcmp.lt.s32.totalorder %v1388, 500
          %vm1421 = vcmp.lt.s32.totalorder %v1389, 500
          %vm1422 = vcmp.lt.s32.totalorder %v1390, 500
          %vm1423 = vcmp.lt.s32.totalorder %v1391, 500
          %vm1424 = vcmp.lt.s32.totalorder %v1392, 500
          %vm1425 = vcmp.lt.s32.totalorder %v1393, 500
          %vm1426 = vcmp.lt.s32.totalorder %v1394, 500
          %vm1427 = vcmp.lt.s32.totalorder %v1395, 500
          %vm1428 = vcmp.lt.s32.totalorder %v1396, 500
          %vm1429 = vcmp.lt.s32.totalorder %v1397, 500
          %v1430 = vsel %vm1398, 1, 0
          %v1431 = vsel %vm1399, 1, 0
          %v1432 = vsel %vm1400, 1, 0
          %v1433 = vsel %vm1401, 1, 0
          %v1434 = vsel %vm1402, 1, 0
          %v1435 = vsel %vm1403, 1, 0
          %v1436 = vsel %vm1404, 1, 0
          %v1437 = vsel %vm1405, 1, 0
          %v1438 = vsel %vm1406, 1, 0
          %v1439 = vsel %vm1407, 1, 0
          %v1440 = vsel %vm1408, 1, 0
          %v1441 = vsel %vm1409, 1, 0
          %v1442 = vsel %vm1410, 1, 0
          %v1443 = vsel %vm1411, 1, 0
          %v1444 = vsel %vm1412, 1, 0
          %v1445 = vsel %vm1413, 1, 0
          %v1446 = vsel %vm1414, 1, 0
          %v1447 = vsel %vm1415, 1, 0
          %v1448 = vsel %vm1416, 1, 0
          %v1449 = vsel %vm1417, 1, 0
          %v1450 = vsel %vm1418, 1, 0
          %v1451 = vsel %vm1419, 1, 0
          %v1452 = vsel %vm1420, 1, 0
          %v1453 = vsel %vm1421, 1, 0
          %v1454 = vsel %vm1422, 1, 0
          %v1455 = vsel %vm1423, 1, 0
          %v1456 = vsel %vm1424, 1, 0
          %v1457 = vsel %vm1425, 1, 0
          %v1458 = vsel %vm1426, 1, 0
          %v1459 = vsel %vm1427, 1, 0
          %v1460 = vsel %vm1428, 1, 0
          %v1461 = vsel %vm1429, 1, 0
          %v1462 = vcvt.s32.f32 %v1430
          %v1463 = vcvt.s32.f32 %v1431
          %v1464 = vcvt.s32.f32 %v1432
          %v1465 = vcvt.s32.f32 %v1433
          %v1466 = vcvt.s32.f32 %v1434
          %v1467 = vcvt.s32.f32 %v1435
          %v1468 = vcvt.s32.f32 %v1436
          %v1469 = vcvt.s32.f32 %v1437
          %v1470 = vcvt.s32.f32 %v1438
          %v1471 = vcvt.s32.f32 %v1439
          %v1472 = vcvt.s32.f32 %v1440
          %v1473 = vcvt.s32.f32 %v1441
          %v1474 = vcvt.s32.f32 %v1442
          %v1475 = vcvt.s32.f32 %v1443
          %v1476 = vcvt.s32.f32 %v1444
          %v1477 = vcvt.s32.f32 %v1445
          %v1478 = vcvt.s32.f32 %v1446
          %v1479 = vcvt.s32.f32 %v1447
          %v1480 = vcvt.s32.f32 %v1448
          %v1481 = vcvt.s32.f32 %v1449
          %v1482 = vcvt.s32.f32 %v1450
          %v1483 = vcvt.s32.f32 %v1451
          %v1484 = vcvt.s32.f32 %v1452
          %v1485 = vcvt.s32.f32 %v1453
          %v1486 = vcvt.s32.f32 %v1454
          %v1487 = vcvt.s32.f32 %v1455
          %v1488 = vcvt.s32.f32 %v1456
          %v1489 = vcvt.s32.f32 %v1457
          %v1490 = vcvt.s32.f32 %v1458
          %v1491 = vcvt.s32.f32 %v1459
          %v1492 = vcvt.s32.f32 %v1460
          %v1493 = vcvt.s32.f32 %v1461
          %s1494 = scalar_lea.vmem [#allocation2], %s1364
          %v1495 = vld [vmem:[%s1494] sm:$0xff]
          %v1496 = vld [vmem:[%s1494 + $0x8] sm:$0xff]
          %v1497 = vld [vmem:[%s1494 + $0x10] sm:$0xff]
          %v1498 = vld [vmem:[%s1494 + $0x18] sm:$0xff]
          %v1499 = vld [vmem:[%s1494 + $0x20] sm:$0xff]
          %v1500 = vld [vmem:[%s1494 + $0x28] sm:$0xff]
          %v1501 = vld [vmem:[%s1494 + $0x30] sm:$0xff]
          %v1502 = vld [vmem:[%s1494 + $0x38] sm:$0xff]
          %v1503 = vld [vmem:[%s1494 + $0x40] sm:$0xff]
          %v1504 = vld [vmem:[%s1494 + $0x48] sm:$0xff]
          %v1505 = vld [vmem:[%s1494 + $0x50] sm:$0xff]
          %v1506 = vld [vmem:[%s1494 + $0x58] sm:$0xff]
          %v1507 = vld [vmem:[%s1494 + $0x60] sm:$0xff]
          %v1508 = vld [vmem:[%s1494 + $0x68] sm:$0xff]
          %v1509 = vld [vmem:[%s1494 + $0x70] sm:$0xff]
          %v1510 = vld [vmem:[%s1494 + $0x78] sm:$0xff]
          %v1511 = vld [vmem:[%s1494 + $0x80] sm:$0xff]
          %v1512 = vld [vmem:[%s1494 + $0x88] sm:$0xff]
          %v1513 = vld [vmem:[%s1494 + $0x90] sm:$0xff]
          %v1514 = vld [vmem:[%s1494 + $0x98] sm:$0xff]
          %v1515 = vld [vmem:[%s1494 + $0xa0] sm:$0xff]
          %v1516 = vld [vmem:[%s1494 + $0xa8] sm:$0xff]
          %v1517 = vld [vmem:[%s1494 + $0xb0] sm:$0xff]
          %v1518 = vld [vmem:[%s1494 + $0xb8] sm:$0xff]
          %v1519 = vld [vmem:[%s1494 + $0xc0] sm:$0xff]
          %v1520 = vld [vmem:[%s1494 + $0xc8] sm:$0xff]
          %v1521 = vld [vmem:[%s1494 + $0xd0] sm:$0xff]
          %v1522 = vld [vmem:[%s1494 + $0xd8] sm:$0xff]
          %v1523 = vld [vmem:[%s1494 + $0xe0] sm:$0xff]
          %v1524 = vld [vmem:[%s1494 + $0xe8] sm:$0xff]
          %v1525 = vld [vmem:[%s1494 + $0xf0] sm:$0xff]
          %v1526 = vld [vmem:[%s1494 + $0xf8] sm:$0xff]
          %v1527 = vld [vmem:[#allocation7] sm:$0x1]
          %v1529 = vlaneseq
          %v1530 = vshrl.u32 %v1529, 7
          %v1531 = vsub.s32 0, %v1530
          %v1532 = vrot.slane %v1527, %v1531
          %v1534 = vadd.f32 %v1495, %v1532
          %v1535 = vadd.f32 %v1496, %v1532
          %v1536 = vadd.f32 %v1497, %v1532
          %v1537 = vadd.f32 %v1498, %v1532
          %v1538 = vadd.f32 %v1499, %v1532
          %v1539 = vadd.f32 %v1500, %v1532
          %v1540 = vadd.f32 %v1501, %v1532
          %v1541 = vadd.f32 %v1502, %v1532
          %v1542 = vadd.f32 %v1503, %v1532
          %v1543 = vadd.f32 %v1504, %v1532
          %v1544 = vadd.f32 %v1505, %v1532
          %v1545 = vadd.f32 %v1506, %v1532
          %v1546 = vadd.f32 %v1507, %v1532
          %v1547 = vadd.f32 %v1508, %v1532
          %v1548 = vadd.f32 %v1509, %v1532
          %v1549 = vadd.f32 %v1510, %v1532
          %v1550 = vadd.f32 %v1511, %v1532
          %v1551 = vadd.f32 %v1512, %v1532
          %v1552 = vadd.f32 %v1513, %v1532
          %v1553 = vadd.f32 %v1514, %v1532
          %v1554 = vadd.f32 %v1515, %v1532
          %v1555 = vadd.f32 %v1516, %v1532
          %v1556 = vadd.f32 %v1517, %v1532
          %v1557 = vadd.f32 %v1518, %v1532
          %v1558 = vadd.f32 %v1519, %v1532
          %v1559 = vadd.f32 %v1520, %v1532
          %v1560 = vadd.f32 %v1521, %v1532
          %v1561 = vadd.f32 %v1522, %v1532
          %v1562 = vadd.f32 %v1523, %v1532
          %v1563 = vadd.f32 %v1524, %v1532
          %v1564 = vadd.f32 %v1525, %v1532
          %v1565 = vadd.f32 %v1526, %v1532
          %v1566 = vld [vmem:[#allocation8] sm:$0x1]
          %v1568 = vlaneseq
          %v1569 = vshrl.u32 %v1568, 7
          %v1570 = vsub.s32 0, %v1569
          %v1571 = vrot.slane %v1566, %v1570
          %v1573 = vsub.f32 %v1534, %v1571
          %v1574 = vsub.f32 %v1535, %v1571
          %v1575 = vsub.f32 %v1536, %v1571
          %v1576 = vsub.f32 %v1537, %v1571
          %v1577 = vsub.f32 %v1538, %v1571
          %v1578 = vsub.f32 %v1539, %v1571
          %v1579 = vsub.f32 %v1540, %v1571
          %v1580 = vsub.f32 %v1541, %v1571
          %v1581 = vsub.f32 %v1542, %v1571
          %v1582 = vsub.f32 %v1543, %v1571
          %v1583 = vsub.f32 %v1544, %v1571
          %v1584 = vsub.f32 %v1545, %v1571
          %v1585 = vsub.f32 %v1546, %v1571
          %v1586 = vsub.f32 %v1547, %v1571
          %v1587 = vsub.f32 %v1548, %v1571
          %v1588 = vsub.f32 %v1549, %v1571
          %v1589 = vsub.f32 %v1550, %v1571
          %v1590 = vsub.f32 %v1551, %v1571
          %v1591 = vsub.f32 %v1552, %v1571
          %v1592 = vsub.f32 %v1553, %v1571
          %v1593 = vsub.f32 %v1554, %v1571
          %v1594 = vsub.f32 %v1555, %v1571
          %v1595 = vsub.f32 %v1556, %v1571
          %v1596 = vsub.f32 %v1557, %v1571
          %v1597 = vsub.f32 %v1558, %v1571
          %v1598 = vsub.f32 %v1559, %v1571
          %v1599 = vsub.f32 %v1560, %v1571
          %v1600 = vsub.f32 %v1561, %v1571
          %v1601 = vsub.f32 %v1562, %v1571
          %v1602 = vsub.f32 %v1563, %v1571
          %v1603 = vsub.f32 %v1564, %v1571
          %v1604 = vsub.f32 %v1565, %v1571
          %v1605 = vld [vmem:[#allocation9] sm:$0x1]
          %v1607 = vlaneseq
          %v1608 = vshrl.u32 %v1607, 7
          %v1609 = vsub.s32 0, %v1608
          %v1610 = vrot.slane %v1605, %v1609
          %v1612 = vmul.f32 %v1573, %v1610
          %v1613 = vmul.f32 %v1574, %v1610
          %v1614 = vmul.f32 %v1575, %v1610
          %v1615 = vmul.f32 %v1576, %v1610
          %v1616 = vmul.f32 %v1577, %v1610
          %v1617 = vmul.f32 %v1578, %v1610
          %v1618 = vmul.f32 %v1579, %v1610
          %v1619 = vmul.f32 %v1580, %v1610
          %v1620 = vmul.f32 %v1581, %v1610
          %v1621 = vmul.f32 %v1582, %v1610
          %v1622 = vmul.f32 %v1583, %v1610
          %v1623 = vmul.f32 %v1584, %v1610
          %v1624 = vmul.f32 %v1585, %v1610
          %v1625 = vmul.f32 %v1586, %v1610
          %v1626 = vmul.f32 %v1587, %v1610
          %v1627 = vmul.f32 %v1588, %v1610
          %v1628 = vmul.f32 %v1589, %v1610
          %v1629 = vmul.f32 %v1590, %v1610
          %v1630 = vmul.f32 %v1591, %v1610
          %v1631 = vmul.f32 %v1592, %v1610
          %v1632 = vmul.f32 %v1593, %v1610
          %v1633 = vmul.f32 %v1594, %v1610
          %v1634 = vmul.f32 %v1595, %v1610
          %v1635 = vmul.f32 %v1596, %v1610
          %v1636 = vmul.f32 %v1597, %v1610
          %v1637 = vmul.f32 %v1598, %v1610
          %v1638 = vmul.f32 %v1599, %v1610
          %v1639 = vmul.f32 %v1600, %v1610
          %v1640 = vmul.f32 %v1601, %v1610
          %v1641 = vmul.f32 %v1602, %v1610
          %v1642 = vmul.f32 %v1603, %v1610
          %v1643 = vmul.f32 %v1604, %v1610
          %v1644 = vmax.f32 %v1612, 0.0
          %v1645 = vmax.f32 %v1613, 0.0
          %v1646 = vmax.f32 %v1614, 0.0
          %v1647 = vmax.f32 %v1615, 0.0
          %v1648 = vmax.f32 %v1616, 0.0
          %v1649 = vmax.f32 %v1617, 0.0
          %v1650 = vmax.f32 %v1618, 0.0
          %v1651 = vmax.f32 %v1619, 0.0
          %v1652 = vmax.f32 %v1620, 0.0
          %v1653 = vmax.f32 %v1621, 0.0
          %v1654 = vmax.f32 %v1622, 0.0
          %v1655 = vmax.f32 %v1623, 0.0
          %v1656 = vmax.f32 %v1624, 0.0
          %v1657 = vmax.f32 %v1625, 0.0
          %v1658 = vmax.f32 %v1626, 0.0
          %v1659 = vmax.f32 %v1627, 0.0
          %v1660 = vmax.f32 %v1628, 0.0
          %v1661 = vmax.f32 %v1629, 0.0
          %v1662 = vmax.f32 %v1630, 0.0
          %v1663 = vmax.f32 %v1631, 0.0
          %v1664 = vmax.f32 %v1632, 0.0
          %v1665 = vmax.f32 %v1633, 0.0
          %v1666 = vmax.f32 %v1634, 0.0
          %v1667 = vmax.f32 %v1635, 0.0
          %v1668 = vmax.f32 %v1636, 0.0
          %v1669 = vmax.f32 %v1637, 0.0
          %v1670 = vmax.f32 %v1638, 0.0
          %v1671 = vmax.f32 %v1639, 0.0
          %v1672 = vmax.f32 %v1640, 0.0
          %v1673 = vmax.f32 %v1641, 0.0
          %v1674 = vmax.f32 %v1642, 0.0
          %v1675 = vmax.f32 %v1643, 0.0
          %v1676 = vmul.f32 %v1644, %v1462
          %v1677 = vmul.f32 %v1645, %v1463
          %v1678 = vmul.f32 %v1646, %v1464
          %v1679 = vmul.f32 %v1647, %v1465
          %v1680 = vmul.f32 %v1648, %v1466
          %v1681 = vmul.f32 %v1649, %v1467
          %v1682 = vmul.f32 %v1650, %v1468
          %v1683 = vmul.f32 %v1651, %v1469
          %v1684 = vmul.f32 %v1652, %v1470
          %v1685 = vmul.f32 %v1653, %v1471
          %v1686 = vmul.f32 %v1654, %v1472
          %v1687 = vmul.f32 %v1655, %v1473
          %v1688 = vmul.f32 %v1656, %v1474
          %v1689 = vmul.f32 %v1657, %v1475
          %v1690 = vmul.f32 %v1658, %v1476
          %v1691 = vmul.f32 %v1659, %v1477
          %v1692 = vmul.f32 %v1660, %v1478
          %v1693 = vmul.f32 %v1661, %v1479
          %v1694 = vmul.f32 %v1662, %v1480
          %v1695 = vmul.f32 %v1663, %v1481
          %v1696 = vmul.f32 %v1664, %v1482
          %v1697 = vmul.f32 %v1665, %v1483
          %v1698 = vmul.f32 %v1666, %v1484
          %v1699 = vmul.f32 %v1667, %v1485
          %v1700 = vmul.f32 %v1668, %v1486
          %v1701 = vmul.f32 %v1669, %v1487
          %v1702 = vmul.f32 %v1670, %v1488
          %v1703 = vmul.f32 %v1671, %v1489
          %v1704 = vmul.f32 %v1672, %v1490
          %v1705 = vmul.f32 %v1673, %v1491
          %v1706 = vmul.f32 %v1674, %v1492
          %v1707 = vmul.f32 %v1675, %v1493
          %s1708 = ssub.s32 %s30, 1
          %s1709 = smul.u32 %s1708, 128
          %s1710 = scalar_lea.vmem %s5, %s1709
          %v1711 = vld [vmem:[%s1710] sm:$0xff]
          %v1712 = vld [vmem:[%s1710 + $0x8] sm:$0xff]
          %v1713 = vld [vmem:[%s1710 + $0x10] sm:$0xff]
          %v1714 = vld [vmem:[%s1710 + $0x18] sm:$0xff]
          %v1715 = vld [vmem:[%s1710 + $0x20] sm:$0xff]
          %v1716 = vld [vmem:[%s1710 + $0x28] sm:$0xff]
          %v1717 = vld [vmem:[%s1710 + $0x30] sm:$0xff]
          %v1718 = vld [vmem:[%s1710 + $0x38] sm:$0xff]
          %v1719 = vld [vmem:[%s1710 + $0x40] sm:$0xff]
          %v1720 = vld [vmem:[%s1710 + $0x48] sm:$0xff]
          %v1721 = vld [vmem:[%s1710 + $0x50] sm:$0xff]
          %v1722 = vld [vmem:[%s1710 + $0x58] sm:$0xff]
          %v1723 = vld [vmem:[%s1710 + $0x60] sm:$0xff]
          %v1724 = vld [vmem:[%s1710 + $0x68] sm:$0xff]
          %v1725 = vld [vmem:[%s1710 + $0x70] sm:$0xff]
          %v1726 = vld [vmem:[%s1710 + $0x78] sm:$0xff]
          %1727 = vmatprep.subr.mxu0 0.0
          %1728 = vmatpush1.msra.mxu0 %v1726
          %1729 = vmatprep.subr.mxu0 0.0
          %1730 = vmatpush1.msra.mxu0 %v1725
          %1731 = vmatprep.subr.mxu0 0.0
          %1732 = vmatpush1.msra.mxu0 %v1724
          %1733 = vmatprep.subr.mxu0 0.0
          %1734 = vmatpush1.msra.mxu0 %v1723
          %1735 = vmatprep.subr.mxu0 0.0
          %1736 = vmatpush1.msra.mxu0 %v1722
          %1737 = vmatprep.subr.mxu0 0.0
          %1738 = vmatpush1.msra.mxu0 %v1721
          %1739 = vmatprep.subr.mxu0 0.0
          %1740 = vmatpush1.msra.mxu0 %v1720
          %1741 = vmatprep.subr.mxu0 0.0
          %1742 = vmatpush1.msra.mxu0 %v1719
          %1743 = vmatprep.subr.mxu0 0.0
          %1744 = vmatpush1.msra.mxu0 %v1718
          %1745 = vmatprep.subr.mxu0 0.0
          %1746 = vmatpush1.msra.mxu0 %v1717
          %1747 = vmatprep.subr.mxu0 0.0
          %1748 = vmatpush1.msra.mxu0 %v1716
          %1749 = vmatprep.subr.mxu0 0.0
          %1750 = vmatpush1.msra.mxu0 %v1715
          %1751 = vmatprep.subr.mxu0 0.0
          %1752 = vmatpush1.msra.mxu0 %v1714
          %1753 = vmatprep.subr.mxu0 0.0
          %1754 = vmatpush1.msra.mxu0 %v1713
          %1755 = vmatprep.subr.mxu0 0.0
          %1756 = vmatpush1.msra.mxu0 %v1712
          %1757 = vmatprep.subr.mxu0 0.0
          %1758 = vmatpush1.msra.mxu0 %v1711
          %1759 = vmatprep.subr.mxu0 0.0
          %1760 = vmatpush2.msra.mxu0 0.0
          %1761 = vmatprep.subr.mxu0 0.0
          %1762 = vmatpush2.msra.mxu0 0.0
          %1763 = vmatprep.subr.mxu0 0.0
          %1764 = vmatpush2.msra.mxu0 0.0
          %1765 = vmatprep.subr.mxu0 0.0
          %1766 = vmatpush2.msra.mxu0 0.0
          %1767 = vmatprep.subr.mxu0 0.0
          %1768 = vmatpush2.msra.mxu0 0.0
          %1769 = vmatprep.subr.mxu0 0.0
          %1770 = vmatpush2.msra.mxu0 0.0
          %1771 = vmatprep.subr.mxu0 0.0
          %1772 = vmatpush2.msra.mxu0 0.0
          %1773 = vmatprep.subr.mxu0 0.0
          %1774 = vmatpush2.msra.mxu0 0.0
          %1775 = vmatprep.subr.mxu0 0.0
          %1776 = vmatpush2.msra.mxu0 0.0
          %1777 = vmatprep.subr.mxu0 0.0
          %1778 = vmatpush2.msra.mxu0 0.0
          %1779 = vmatprep.subr.mxu0 0.0
          %1780 = vmatpush2.msra.mxu0 0.0
          %1781 = vmatprep.subr.mxu0 0.0
          %1782 = vmatpush2.msra.mxu0 0.0
          %1783 = vmatprep.subr.mxu0 0.0
          %1784 = vmatpush2.msra.mxu0 0.0
          %1785 = vmatprep.subr.mxu0 0.0
          %1786 = vmatpush2.msra.mxu0 0.0
          %1787 = vmatprep.subr.mxu0 0.0
          %1788 = vmatpush2.msra.mxu0 0.0
          %1789 = vmatprep.subr.mxu0 0.0
          %1790 = vmatpush2.msra.mxu0 0.0
          %1791 = vmatprep.mubr.f32.mxu0 0.0
          %1792 = vmatmul.mubr.f32.gmra.mxu0 %v1676
          %v1793 = vpop.f32.mrf.mxu0
          %v1794 = vadd.f32 0.0, %v1793
          %v1795 = vpop.f32.mrf.mxu0
          %1796 = vmatprep.mubr.f32.mxu0 0.0
          %1797 = vmatmul.mubr.f32.gmra.mxu0 %v1677
          %v1798 = vpop.f32.mrf.mxu0
          %v1799 = vadd.f32 0.0, %v1798
          %v1800 = vpop.f32.mrf.mxu0
          %1801 = vmatprep.mubr.f32.mxu0 0.0
          %1802 = vmatmul.mubr.f32.gmra.mxu0 %v1678
          %v1803 = vpop.f32.mrf.mxu0
          %v1804 = vadd.f32 0.0, %v1803
          %v1805 = vpop.f32.mrf.mxu0
          %1806 = vmatprep.mubr.f32.mxu0 0.0
          %1807 = vmatmul.mubr.f32.gmra.mxu0 %v1679
          %v1808 = vpop.f32.mrf.mxu0
          %v1809 = vadd.f32 0.0, %v1808
          %v1810 = vpop.f32.mrf.mxu0
          %1811 = vmatprep.mubr.f32.mxu0 0.0
          %1812 = vmatmul.mubr.f32.gmra.mxu0 %v1680
          %v1813 = vpop.f32.mrf.mxu0
          %v1814 = vadd.f32 0.0, %v1813
          %v1815 = vpop.f32.mrf.mxu0
          %1816 = vmatprep.mubr.f32.mxu0 0.0
          %1817 = vmatmul.mubr.f32.gmra.mxu0 %v1681
          %v1818 = vpop.f32.mrf.mxu0
          %v1819 = vadd.f32 0.0, %v1818
          %v1820 = vpop.f32.mrf.mxu0
          %1821 = vmatprep.mubr.f32.mxu0 0.0
          %1822 = vmatmul.mubr.f32.gmra.mxu0 %v1682
          %v1823 = vpop.f32.mrf.mxu0
          %v1824 = vadd.f32 0.0, %v1823
          %v1825 = vpop.f32.mrf.mxu0
          %1826 = vmatprep.mubr.f32.mxu0 0.0
          %1827 = vmatmul.mubr.f32.gmra.mxu0 %v1683
          %v1828 = vpop.f32.mrf.mxu0
          %v1829 = vadd.f32 0.0, %v1828
          %v1830 = vpop.f32.mrf.mxu0
          %1831 = vmatprep.mubr.f32.mxu0 0.0
          %1832 = vmatmul.mubr.f32.gmra.mxu0 %v1684
          %v1833 = vpop.f32.mrf.mxu0
          %v1834 = vadd.f32 0.0, %v1833
          %v1835 = vpop.f32.mrf.mxu0
          %1836 = vmatprep.mubr.f32.mxu0 0.0
          %1837 = vmatmul.mubr.f32.gmra.mxu0 %v1685
          %v1838 = vpop.f32.mrf.mxu0
          %v1839 = vadd.f32 0.0, %v1838
          %v1840 = vpop.f32.mrf.mxu0
          %1841 = vmatprep.mubr.f32.mxu0 0.0
          %1842 = vmatmul.mubr.f32.gmra.mxu0 %v1686
          %v1843 = vpop.f32.mrf.mxu0
          %v1844 = vadd.f32 0.0, %v1843
          %v1845 = vpop.f32.mrf.mxu0
          %1846 = vmatprep.mubr.f32.mxu0 0.0
          %1847 = vmatmul.mubr.f32.gmra.mxu0 %v1687
          %v1848 = vpop.f32.mrf.mxu0
          %v1849 = vadd.f32 0.0, %v1848
          %v1850 = vpop.f32.mrf.mxu0
          %1851 = vmatprep.mubr.f32.mxu0 0.0
          %1852 = vmatmul.mubr.f32.gmra.mxu0 %v1688
          %v1853 = vpop.f32.mrf.mxu0
          %v1854 = vadd.f32 0.0, %v1853
          %v1855 = vpop.f32.mrf.mxu0
          %1856 = vmatprep.mubr.f32.mxu0 0.0
          %1857 = vmatmul.mubr.f32.gmra.mxu0 %v1689
          %v1858 = vpop.f32.mrf.mxu0
          %v1859 = vadd.f32 0.0, %v1858
          %v1860 = vpop.f32.mrf.mxu0
          %1861 = vmatprep.mubr.f32.mxu0 0.0
          %1862 = vmatmul.mubr.f32.gmra.mxu0 %v1690
          %v1863 = vpop.f32.mrf.mxu0
          %v1864 = vadd.f32 0.0, %v1863
          %v1865 = vpop.f32.mrf.mxu0
          %1866 = vmatprep.mubr.f32.mxu0 0.0
          %1867 = vmatmul.mubr.f32.gmra.mxu0 %v1691
          %v1868 = vpop.f32.mrf.mxu0
          %v1869 = vadd.f32 0.0, %v1868
          %v1870 = vpop.f32.mrf.mxu0
          %1871 = vmatprep.mubr.f32.mxu0 0.0
          %1872 = vmatmul.mubr.f32.gmra.mxu0 %v1692
          %v1873 = vpop.f32.mrf.mxu0
          %v1874 = vadd.f32 0.0, %v1873
          %v1875 = vpop.f32.mrf.mxu0
          %1876 = vmatprep.mubr.f32.mxu0 0.0
          %1877 = vmatmul.mubr.f32.gmra.mxu0 %v1693
          %v1878 = vpop.f32.mrf.mxu0
          %v1879 = vadd.f32 0.0, %v1878
          %v1880 = vpop.f32.mrf.mxu0
          %1881 = vmatprep.mubr.f32.mxu0 0.0
          %1882 = vmatmul.mubr.f32.gmra.mxu0 %v1694
          %v1883 = vpop.f32.mrf.mxu0
          %v1884 = vadd.f32 0.0, %v1883
          %v1885 = vpop.f32.mrf.mxu0
          %1886 = vmatprep.mubr.f32.mxu0 0.0
          %1887 = vmatmul.mubr.f32.gmra.mxu0 %v1695
          %v1888 = vpop.f32.mrf.mxu0
          %v1889 = vadd.f32 0.0, %v1888
          %v1890 = vpop.f32.mrf.mxu0
          %1891 = vmatprep.mubr.f32.mxu0 0.0
          %1892 = vmatmul.mubr.f32.gmra.mxu0 %v1696
          %v1893 = vpop.f32.mrf.mxu0
          %v1894 = vadd.f32 0.0, %v1893
          %v1895 = vpop.f32.mrf.mxu0
          %1896 = vmatprep.mubr.f32.mxu0 0.0
          %1897 = vmatmul.mubr.f32.gmra.mxu0 %v1697
          %v1898 = vpop.f32.mrf.mxu0
          %v1899 = vadd.f32 0.0, %v1898
          %v1900 = vpop.f32.mrf.mxu0
          %1901 = vmatprep.mubr.f32.mxu0 0.0
          %1902 = vmatmul.mubr.f32.gmra.mxu0 %v1698
          %v1903 = vpop.f32.mrf.mxu0
          %v1904 = vadd.f32 0.0, %v1903
          %v1905 = vpop.f32.mrf.mxu0
          %1906 = vmatprep.mubr.f32.mxu0 0.0
          %1907 = vmatmul.mubr.f32.gmra.mxu0 %v1699
          %v1908 = vpop.f32.mrf.mxu0
          %v1909 = vadd.f32 0.0, %v1908
          %v1910 = vpop.f32.mrf.mxu0
          %1911 = vmatprep.mubr.f32.mxu0 0.0
          %1912 = vmatmul.mubr.f32.gmra.mxu0 %v1700
          %v1913 = vpop.f32.mrf.mxu0
          %v1914 = vadd.f32 0.0, %v1913
          %v1915 = vpop.f32.mrf.mxu0
          %1916 = vmatprep.mubr.f32.mxu0 0.0
          %1917 = vmatmul.mubr.f32.gmra.mxu0 %v1701
          %v1918 = vpop.f32.mrf.mxu0
          %v1919 = vadd.f32 0.0, %v1918
          %v1920 = vpop.f32.mrf.mxu0
          %1921 = vmatprep.mubr.f32.mxu0 0.0
          %1922 = vmatmul.mubr.f32.gmra.mxu0 %v1702
          %v1923 = vpop.f32.mrf.mxu0
          %v1924 = vadd.f32 0.0, %v1923
          %v1925 = vpop.f32.mrf.mxu0
          %1926 = vmatprep.mubr.f32.mxu0 0.0
          %1927 = vmatmul.mubr.f32.gmra.mxu0 %v1703
          %v1928 = vpop.f32.mrf.mxu0
          %v1929 = vadd.f32 0.0, %v1928
          %v1930 = vpop.f32.mrf.mxu0
          %1931 = vmatprep.mubr.f32.mxu0 0.0
          %1932 = vmatmul.mubr.f32.gmra.mxu0 %v1704
          %v1933 = vpop.f32.mrf.mxu0
          %v1934 = vadd.f32 0.0, %v1933
          %v1935 = vpop.f32.mrf.mxu0
          %1936 = vmatprep.mubr.f32.mxu0 0.0
          %1937 = vmatmul.mubr.f32.gmra.mxu0 %v1705
          %v1938 = vpop.f32.mrf.mxu0
          %v1939 = vadd.f32 0.0, %v1938
          %v1940 = vpop.f32.mrf.mxu0
          %1941 = vmatprep.mubr.f32.mxu0 0.0
          %1942 = vmatmul.mubr.f32.gmra.mxu0 %v1706
          %v1943 = vpop.f32.mrf.mxu0
          %v1944 = vadd.f32 0.0, %v1943
          %v1945 = vpop.f32.mrf.mxu0
          %1946 = vmatprep.mubr.f32.mxu0 0.0
          %1947 = vmatmul.mubr.f32.gmra.mxu0 %v1707
          %v1948 = vpop.f32.mrf.mxu0
          %v1949 = vadd.f32 0.0, %v1948
          %v1950 = vpop.f32.mrf.mxu0
          %1951 = vdwg.mxu0
          %1952 = vst [vmem:[%s1494] sm:$0xff] %v1794
          %1953 = vst [vmem:[%s1494 + $0x8] sm:$0xff] %v1799
          %1954 = vst [vmem:[%s1494 + $0x10] sm:$0xff] %v1804
          %1955 = vst [vmem:[%s1494 + $0x18] sm:$0xff] %v1809
          %1956 = vst [vmem:[%s1494 + $0x20] sm:$0xff] %v1814
          %1957 = vst [vmem:[%s1494 + $0x28] sm:$0xff] %v1819
          %1958 = vst [vmem:[%s1494 + $0x30] sm:$0xff] %v1824
          %1959 = vst [vmem:[%s1494 + $0x38] sm:$0xff] %v1829
          %1960 = vst [vmem:[%s1494 + $0x40] sm:$0xff] %v1834
          %1961 = vst [vmem:[%s1494 + $0x48] sm:$0xff] %v1839
          %1962 = vst [vmem:[%s1494 + $0x50] sm:$0xff] %v1844
          %1963 = vst [vmem:[%s1494 + $0x58] sm:$0xff] %v1849
          %1964 = vst [vmem:[%s1494 + $0x60] sm:$0xff] %v1854
          %1965 = vst [vmem:[%s1494 + $0x68] sm:$0xff] %v1859
          %1966 = vst [vmem:[%s1494 + $0x70] sm:$0xff] %v1864
          %1967 = vst [vmem:[%s1494 + $0x78] sm:$0xff] %v1869
          %1968 = vst [vmem:[%s1494 + $0x80] sm:$0xff] %v1874
          %1969 = vst [vmem:[%s1494 + $0x88] sm:$0xff] %v1879
          %1970 = vst [vmem:[%s1494 + $0x90] sm:$0xff] %v1884
          %1971 = vst [vmem:[%s1494 + $0x98] sm:$0xff] %v1889
          %1972 = vst [vmem:[%s1494 + $0xa0] sm:$0xff] %v1894
          %1973 = vst [vmem:[%s1494 + $0xa8] sm:$0xff] %v1899
          %1974 = vst [vmem:[%s1494 + $0xb0] sm:$0xff] %v1904
          %1975 = vst [vmem:[%s1494 + $0xb8] sm:$0xff] %v1909
          %1976 = vst [vmem:[%s1494 + $0xc0] sm:$0xff] %v1914
          %1977 = vst [vmem:[%s1494 + $0xc8] sm:$0xff] %v1919
          %1978 = vst [vmem:[%s1494 + $0xd0] sm:$0xff] %v1924
          %1979 = vst [vmem:[%s1494 + $0xd8] sm:$0xff] %v1929
          %1980 = vst [vmem:[%s1494 + $0xe0] sm:$0xff] %v1934
          %1981 = vst [vmem:[%s1494 + $0xe8] sm:$0xff] %v1939
          %1982 = vst [vmem:[%s1494 + $0xf0] sm:$0xff] %v1944
          %1983 = vst [vmem:[%s1494 + $0xf8] sm:$0xff] %v1949
          %v1984 = vld [vmem:[#allocation4] sm:$0x1]
          %v1985 = vadd.f32 %v1676, %v1677
          %v1986 = vadd.f32 %v1985, %v1678
          %v1987 = vadd.f32 %v1986, %v1679
          %v1988 = vadd.f32 %v1987, %v1680
          %v1989 = vadd.f32 %v1988, %v1681
          %v1990 = vadd.f32 %v1989, %v1682
          %v1991 = vadd.f32 %v1990, %v1683
          %v1992 = vadd.f32 %v1991, %v1684
          %v1993 = vadd.f32 %v1992, %v1685
          %v1994 = vadd.f32 %v1993, %v1686
          %v1995 = vadd.f32 %v1994, %v1687
          %v1996 = vadd.f32 %v1995, %v1688
          %v1997 = vadd.f32 %v1996, %v1689
          %v1998 = vadd.f32 %v1997, %v1690
          %v1999 = vadd.f32 %v1998, %v1691
          %v2000 = vadd.f32 %v1999, %v1692
          %v2001 = vadd.f32 %v2000, %v1693
          %v2002 = vadd.f32 %v2001, %v1694
          %v2003 = vadd.f32 %v2002, %v1695
          %v2004 = vadd.f32 %v2003, %v1696
          %v2005 = vadd.f32 %v2004, %v1697
          %v2006 = vadd.f32 %v2005, %v1698
          %v2007 = vadd.f32 %v2006, %v1699
          %v2008 = vadd.f32 %v2007, %v1700
          %v2009 = vadd.f32 %v2008, %v1701
          %v2010 = vadd.f32 %v2009, %v1702
          %v2011 = vadd.f32 %v2010, %v1703
          %v2012 = vadd.f32 %v2011, %v1704
          %v2013 = vadd.f32 %v2012, %v1705
          %v2014 = vadd.f32 %v2013, %v1706
          %v2015 = vadd.f32 %v2014, %v1707
          %v2016 = vrot.slane %v2015, 4
          %v2017 = vadd.f32 %v2015, %v2016
          %v2018 = vrot.slane %v2017, 2
          %v2019 = vadd.f32 %v2017, %v2018
          %v2020 = vrot.slane %v2019, 1
          %v2021 = vadd.f32 %v2019, %v2020
          %v2022 = vadd.f32 %v1984, %v2021
          %2023 = vst [vmem:[#allocation4] sm:$0x1] %v2022
          %v2024 = vld [vmem:[#allocation5] sm:$0x1]
          %v2025 = vadd.f32 %v1794, %v1799
          %v2026 = vadd.f32 %v2025, %v1804
          %v2027 = vadd.f32 %v2026, %v1809
          %v2028 = vadd.f32 %v2027, %v1814
          %v2029 = vadd.f32 %v2028, %v1819
          %v2030 = vadd.f32 %v2029, %v1824
          %v2031 = vadd.f32 %v2030, %v1829
          %v2032 = vadd.f32 %v2031, %v1834
          %v2033 = vadd.f32 %v2032, %v1839
          %v2034 = vadd.f32 %v2033, %v1844
          %v2035 = vadd.f32 %v2034, %v1849
          %v2036 = vadd.f32 %v2035, %v1854
          %v2037 = vadd.f32 %v2036, %v1859
          %v2038 = vadd.f32 %v2037, %v1864
          %v2039 = vadd.f32 %v2038, %v1869
          %v2040 = vadd.f32 %v2039, %v1874
          %v2041 = vadd.f32 %v2040, %v1879
          %v2042 = vadd.f32 %v2041, %v1884
          %v2043 = vadd.f32 %v2042, %v1889
          %v2044 = vadd.f32 %v2043, %v1894
          %v2045 = vadd.f32 %v2044, %v1899
          %v2046 = vadd.f32 %v2045, %v1904
          %v2047 = vadd.f32 %v2046, %v1909
          %v2048 = vadd.f32 %v2047, %v1914
          %v2049 = vadd.f32 %v2048, %v1919
          %v2050 = vadd.f32 %v2049, %v1924
          %v2051 = vadd.f32 %v2050, %v1929
          %v2052 = vadd.f32 %v2051, %v1934
          %v2053 = vadd.f32 %v2052, %v1939
          %v2054 = vadd.f32 %v2053, %v1944
          %v2055 = vadd.f32 %v2054, %v1949
          %v2056 = vrot.slane %v2055, 4
          %v2057 = vadd.f32 %v2055, %v2056
          %v2058 = vrot.slane %v2057, 2
          %v2059 = vadd.f32 %v2057, %v2058
          %v2060 = vrot.slane %v2059, 1
          %v2061 = vadd.f32 %v2059, %v2060
          %v2062 = vadd.f32 %v2024, %v2061
          %2063 = vst [vmem:[#allocation5] sm:$0x1] %v2062
          %v2064 = vld [vmem:[#allocation6] sm:$0x1]
          %v2065 = vmul.f32 %v1794, %v1794
          %v2066 = vmul.f32 %v1799, %v1799
          %v2067 = vmul.f32 %v1804, %v1804
          %v2068 = vmul.f32 %v1809, %v1809
          %v2069 = vmul.f32 %v1814, %v1814
          %v2070 = vmul.f32 %v1819, %v1819
          %v2071 = vmul.f32 %v1824, %v1824
          %v2072 = vmul.f32 %v1829, %v1829
          %v2073 = vmul.f32 %v1834, %v1834
          %v2074 = vmul.f32 %v1839, %v1839
          %v2075 = vmul.f32 %v1844, %v1844
          %v2076 = vmul.f32 %v1849, %v1849
          %v2077 = vmul.f32 %v1854, %v1854
          %v2078 = vmul.f32 %v1859, %v1859
          %v2079 = vmul.f32 %v1864, %v1864
          %v2080 = vmul.f32 %v1869, %v1869
          %v2081 = vmul.f32 %v1874, %v1874
          %v2082 = vmul.f32 %v1879, %v1879
          %v2083 = vmul.f32 %v1884, %v1884
          %v2084 = vmul.f32 %v1889, %v1889
          %v2085 = vmul.f32 %v1894, %v1894
          %v2086 = vmul.f32 %v1899, %v1899
          %v2087 = vmul.f32 %v1904, %v1904
          %v2088 = vmul.f32 %v1909, %v1909
          %v2089 = vmul.f32 %v1914, %v1914
          %v2090 = vmul.f32 %v1919, %v1919
          %v2091 = vmul.f32 %v1924, %v1924
          %v2092 = vmul.f32 %v1929, %v1929
          %v2093 = vmul.f32 %v1934, %v1934
          %v2094 = vmul.f32 %v1939, %v1939
          %v2095 = vmul.f32 %v1944, %v1944
          %v2096 = vmul.f32 %v1949, %v1949
          %v2097 = vadd.f32 %v2065, %v2066
          %v2098 = vadd.f32 %v2097, %v2067
          %v2099 = vadd.f32 %v2098, %v2068
          %v2100 = vadd.f32 %v2099, %v2069
          %v2101 = vadd.f32 %v2100, %v2070
          %v2102 = vadd.f32 %v2101, %v2071
          %v2103 = vadd.f32 %v2102, %v2072
          %v2104 = vadd.f32 %v2103, %v2073
          %v2105 = vadd.f32 %v2104, %v2074
          %v2106 = vadd.f32 %v2105, %v2075
          %v2107 = vadd.f32 %v2106, %v2076
          %v2108 = vadd.f32 %v2107, %v2077
          %v2109 = vadd.f32 %v2108, %v2078
          %v2110 = vadd.f32 %v2109, %v2079
          %v2111 = vadd.f32 %v2110, %v2080
          %v2112 = vadd.f32 %v2111, %v2081
          %v2113 = vadd.f32 %v2112, %v2082
          %v2114 = vadd.f32 %v2113, %v2083
          %v2115 = vadd.f32 %v2114, %v2084
          %v2116 = vadd.f32 %v2115, %v2085
          %v2117 = vadd.f32 %v2116, %v2086
          %v2118 = vadd.f32 %v2117, %v2087
          %v2119 = vadd.f32 %v2118, %v2088
          %v2120 = vadd.f32 %v2119, %v2089
          %v2121 = vadd.f32 %v2120, %v2090
          %v2122 = vadd.f32 %v2121, %v2091
          %v2123 = vadd.f32 %v2122, %v2092
          %v2124 = vadd.f32 %v2123, %v2093
          %v2125 = vadd.f32 %v2124, %v2094
          %v2126 = vadd.f32 %v2125, %v2095
          %v2127 = vadd.f32 %v2126, %v2096
          %v2128 = vrot.slane %v2127, 4
          %v2129 = vadd.f32 %v2127, %v2128
          %v2130 = vrot.slane %v2129, 2
          %v2131 = vadd.f32 %v2129, %v2130
          %v2132 = vrot.slane %v2131, 1
          %v2133 = vadd.f32 %v2131, %v2132
          %v2134 = vadd.f32 %v2064, %v2133
          %2135 = vst [vmem:[#allocation6] sm:$0x1] %v2134
        $region96: #{tpu_custom_call.1} parent=67 // pred_fallthru
          _
        // Predicated region
        $region97: #{tpu_custom_call.1} parent=67 // pred_check
          %p2136 = pneg %p737
        $region98: #{tpu_custom_call.1} parent=67 // pred_check_branch
          %2138 = sbr.rel (%p2136) target = $region100
        $region99: #{tpu_custom_call.1} parent=67 // pred_region
          %v2139 = vlaneseq
          %v2140 = vshrl.u32 %v2139, 7
          %v2141 = vadd.s32 %v2140, 8
          %v2142 = vadd.s32 %v2140, 16
          %v2143 = vadd.s32 %v2140, 24
          %v2144 = vadd.s32 %v2140, 32
          %v2145 = vadd.s32 %v2140, 40
          %v2146 = vadd.s32 %v2140, 48
          %v2147 = vadd.s32 %v2140, 56
          %v2148 = vadd.s32 %v2140, 64
          %v2149 = vadd.s32 %v2140, 72
          %v2150 = vadd.s32 %v2140, 80
          %v2151 = vadd.s32 %v2140, 88
          %v2152 = vadd.s32 %v2140, 96
          %v2153 = vadd.s32 %v2140, 104
          %v2154 = vadd.s32 %v2140, 112
          %v2155 = vadd.s32 %v2140, 120
          %v2156 = vadd.s32 %v2140, 128
          %v2157 = vadd.s32 %v2140, 136
          %v2158 = vadd.s32 %v2140, 144
          %v2159 = vadd.s32 %v2140, 152
          %v2160 = vadd.s32 %v2140, 160
          %v2161 = vadd.s32 %v2140, 168
          %v2162 = vadd.s32 %v2140, 176
          %v2163 = vadd.s32 %v2140, 184
          %v2164 = vadd.s32 %v2140, 192
          %v2165 = vadd.s32 %v2140, 200
          %v2166 = vadd.s32 %v2140, 208
          %v2167 = vadd.s32 %v2140, 216
          %v2168 = vadd.s32 %v2140, 224
          %v2169 = vadd.s32 %v2140, 232
          %v2170 = vadd.s32 %v2140, 240
          %v2171 = vadd.s32 %v2140, 248
          %s2172 = smul.u32 %s31, 256
          %v2173 = vstv %s2172
          %v2174 = vadd.s32 %v2140, %v2173
          %v2175 = vadd.s32 %v2141, %v2173
          %v2176 = vadd.s32 %v2142, %v2173
          %v2177 = vadd.s32 %v2143, %v2173
          %v2178 = vadd.s32 %v2144, %v2173
          %v2179 = vadd.s32 %v2145, %v2173
          %v2180 = vadd.s32 %v2146, %v2173
          %v2181 = vadd.s32 %v2147, %v2173
          %v2182 = vadd.s32 %v2148, %v2173
          %v2183 = vadd.s32 %v2149, %v2173
          %v2184 = vadd.s32 %v2150, %v2173
          %v2185 = vadd.s32 %v2151, %v2173
          %v2186 = vadd.s32 %v2152, %v2173
          %v2187 = vadd.s32 %v2153, %v2173
          %v2188 = vadd.s32 %v2154, %v2173
          %v2189 = vadd.s32 %v2155, %v2173
          %v2190 = vadd.s32 %v2156, %v2173
          %v2191 = vadd.s32 %v2157, %v2173
          %v2192 = vadd.s32 %v2158, %v2173
          %v2193 = vadd.s32 %v2159, %v2173
          %v2194 = vadd.s32 %v2160, %v2173
          %v2195 = vadd.s32 %v2161, %v2173
          %v2196 = vadd.s32 %v2162, %v2173
          %v2197 = vadd.s32 %v2163, %v2173
          %v2198 = vadd.s32 %v2164, %v2173
          %v2199 = vadd.s32 %v2165, %v2173
          %v2200 = vadd.s32 %v2166, %v2173
          %v2201 = vadd.s32 %v2167, %v2173
          %v2202 = vadd.s32 %v2168, %v2173
          %v2203 = vadd.s32 %v2169, %v2173
          %v2204 = vadd.s32 %v2170, %v2173
          %v2205 = vadd.s32 %v2171, %v2173
          %vm2206 = vcmp.lt.s32.totalorder %v2174, 500
          %vm2207 = vcmp.lt.s32.totalorder %v2175, 500
          %vm2208 = vcmp.lt.s32.totalorder %v2176, 500
          %vm2209 = vcmp.lt.s32.totalorder %v2177, 500
          %vm2210 = vcmp.lt.s32.totalorder %v2178, 500
          %vm2211 = vcmp.lt.s32.totalorder %v2179, 500
          %vm2212 = vcmp.lt.s32.totalorder %v2180, 500
          %vm2213 = vcmp.lt.s32.totalorder %v2181, 500
          %vm2214 = vcmp.lt.s32.totalorder %v2182, 500
          %vm2215 = vcmp.lt.s32.totalorder %v2183, 500
          %vm2216 = vcmp.lt.s32.totalorder %v2184, 500
          %vm2217 = vcmp.lt.s32.totalorder %v2185, 500
          %vm2218 = vcmp.lt.s32.totalorder %v2186, 500
          %vm2219 = vcmp.lt.s32.totalorder %v2187, 500
          %vm2220 = vcmp.lt.s32.totalorder %v2188, 500
          %vm2221 = vcmp.lt.s32.totalorder %v2189, 500
          %vm2222 = vcmp.lt.s32.totalorder %v2190, 500
          %vm2223 = vcmp.lt.s32.totalorder %v2191, 500
          %vm2224 = vcmp.lt.s32.totalorder %v2192, 500
          %vm2225 = vcmp.lt.s32.totalorder %v2193, 500
          %vm2226 = vcmp.lt.s32.totalorder %v2194, 500
          %vm2227 = vcmp.lt.s32.totalorder %v2195, 500
          %vm2228 = vcmp.lt.s32.totalorder %v2196, 500
          %vm2229 = vcmp.lt.s32.totalorder %v2197, 500
          %vm2230 = vcmp.lt.s32.totalorder %v2198, 500
          %vm2231 = vcmp.lt.s32.totalorder %v2199, 500
          %vm2232 = vcmp.lt.s32.totalorder %v2200, 500
          %vm2233 = vcmp.lt.s32.totalorder %v2201, 500
          %vm2234 = vcmp.lt.s32.totalorder %v2202, 500
          %vm2235 = vcmp.lt.s32.totalorder %v2203, 500
          %vm2236 = vcmp.lt.s32.totalorder %v2204, 500
          %vm2237 = vcmp.lt.s32.totalorder %v2205, 500
          %v2238 = vsel %vm2206, 1, 0
          %v2239 = vsel %vm2207, 1, 0
          %v2240 = vsel %vm2208, 1, 0
          %v2241 = vsel %vm2209, 1, 0
          %v2242 = vsel %vm2210, 1, 0
          %v2243 = vsel %vm2211, 1, 0
          %v2244 = vsel %vm2212, 1, 0
          %v2245 = vsel %vm2213, 1, 0
          %v2246 = vsel %vm2214, 1, 0
          %v2247 = vsel %vm2215, 1, 0
          %v2248 = vsel %vm2216, 1, 0
          %v2249 = vsel %vm2217, 1, 0
          %v2250 = vsel %vm2218, 1, 0
          %v2251 = vsel %vm2219, 1, 0
          %v2252 = vsel %vm2220, 1, 0
          %v2253 = vsel %vm2221, 1, 0
          %v2254 = vsel %vm2222, 1, 0
          %v2255 = vsel %vm2223, 1, 0
          %v2256 = vsel %vm2224, 1, 0
          %v2257 = vsel %vm2225, 1, 0
          %v2258 = vsel %vm2226, 1, 0
          %v2259 = vsel %vm2227, 1, 0
          %v2260 = vsel %vm2228, 1, 0
          %v2261 = vsel %vm2229, 1, 0
          %v2262 = vsel %vm2230, 1, 0
          %v2263 = vsel %vm2231, 1, 0
          %v2264 = vsel %vm2232, 1, 0
          %v2265 = vsel %vm2233, 1, 0
          %v2266 = vsel %vm2234, 1, 0
          %v2267 = vsel %vm2235, 1, 0
          %v2268 = vsel %vm2236, 1, 0
          %v2269 = vsel %vm2237, 1, 0
          %v2270 = vcvt.s32.f32 %v2238
          %v2271 = vcvt.s32.f32 %v2239
          %v2272 = vcvt.s32.f32 %v2240
          %v2273 = vcvt.s32.f32 %v2241
          %v2274 = vcvt.s32.f32 %v2242
          %v2275 = vcvt.s32.f32 %v2243
          %v2276 = vcvt.s32.f32 %v2244
          %v2277 = vcvt.s32.f32 %v2245
          %v2278 = vcvt.s32.f32 %v2246
          %v2279 = vcvt.s32.f32 %v2247
          %v2280 = vcvt.s32.f32 %v2248
          %v2281 = vcvt.s32.f32 %v2249
          %v2282 = vcvt.s32.f32 %v2250
          %v2283 = vcvt.s32.f32 %v2251
          %v2284 = vcvt.s32.f32 %v2252
          %v2285 = vcvt.s32.f32 %v2253
          %v2286 = vcvt.s32.f32 %v2254
          %v2287 = vcvt.s32.f32 %v2255
          %v2288 = vcvt.s32.f32 %v2256
          %v2289 = vcvt.s32.f32 %v2257
          %v2290 = vcvt.s32.f32 %v2258
          %v2291 = vcvt.s32.f32 %v2259
          %v2292 = vcvt.s32.f32 %v2260
          %v2293 = vcvt.s32.f32 %v2261
          %v2294 = vcvt.s32.f32 %v2262
          %v2295 = vcvt.s32.f32 %v2263
          %v2296 = vcvt.s32.f32 %v2264
          %v2297 = vcvt.s32.f32 %v2265
          %v2298 = vcvt.s32.f32 %v2266
          %v2299 = vcvt.s32.f32 %v2267
          %v2300 = vcvt.s32.f32 %v2268
          %v2301 = vcvt.s32.f32 %v2269
          %s2302 = scalar_lea.vmem [#allocation2], %s2172
          %v2303 = vld [vmem:[%s2302] sm:$0xff]
          %v2304 = vld [vmem:[%s2302 + $0x8] sm:$0xff]
          %v2305 = vld [vmem:[%s2302 + $0x10] sm:$0xff]
          %v2306 = vld [vmem:[%s2302 + $0x18] sm:$0xff]
          %v2307 = vld [vmem:[%s2302 + $0x20] sm:$0xff]
          %v2308 = vld [vmem:[%s2302 + $0x28] sm:$0xff]
          %v2309 = vld [vmem:[%s2302 + $0x30] sm:$0xff]
          %v2310 = vld [vmem:[%s2302 + $0x38] sm:$0xff]
          %v2311 = vld [vmem:[%s2302 + $0x40] sm:$0xff]
          %v2312 = vld [vmem:[%s2302 + $0x48] sm:$0xff]
          %v2313 = vld [vmem:[%s2302 + $0x50] sm:$0xff]
          %v2314 = vld [vmem:[%s2302 + $0x58] sm:$0xff]
          %v2315 = vld [vmem:[%s2302 + $0x60] sm:$0xff]
          %v2316 = vld [vmem:[%s2302 + $0x68] sm:$0xff]
          %v2317 = vld [vmem:[%s2302 + $0x70] sm:$0xff]
          %v2318 = vld [vmem:[%s2302 + $0x78] sm:$0xff]
          %v2319 = vld [vmem:[%s2302 + $0x80] sm:$0xff]
          %v2320 = vld [vmem:[%s2302 + $0x88] sm:$0xff]
          %v2321 = vld [vmem:[%s2302 + $0x90] sm:$0xff]
          %v2322 = vld [vmem:[%s2302 + $0x98] sm:$0xff]
          %v2323 = vld [vmem:[%s2302 + $0xa0] sm:$0xff]
          %v2324 = vld [vmem:[%s2302 + $0xa8] sm:$0xff]
          %v2325 = vld [vmem:[%s2302 + $0xb0] sm:$0xff]
          %v2326 = vld [vmem:[%s2302 + $0xb8] sm:$0xff]
          %v2327 = vld [vmem:[%s2302 + $0xc0] sm:$0xff]
          %v2328 = vld [vmem:[%s2302 + $0xc8] sm:$0xff]
          %v2329 = vld [vmem:[%s2302 + $0xd0] sm:$0xff]
          %v2330 = vld [vmem:[%s2302 + $0xd8] sm:$0xff]
          %v2331 = vld [vmem:[%s2302 + $0xe0] sm:$0xff]
          %v2332 = vld [vmem:[%s2302 + $0xe8] sm:$0xff]
          %v2333 = vld [vmem:[%s2302 + $0xf0] sm:$0xff]
          %v2334 = vld [vmem:[%s2302 + $0xf8] sm:$0xff]
          %v2335 = vld [vmem:[#allocation7] sm:$0x1]
          %v2337 = vlaneseq
          %v2338 = vshrl.u32 %v2337, 7
          %v2339 = vsub.s32 0, %v2338
          %v2340 = vrot.slane %v2335, %v2339
          %v2342 = vadd.f32 %v2303, %v2340
          %v2343 = vadd.f32 %v2304, %v2340
          %v2344 = vadd.f32 %v2305, %v2340
          %v2345 = vadd.f32 %v2306, %v2340
          %v2346 = vadd.f32 %v2307, %v2340
          %v2347 = vadd.f32 %v2308, %v2340
          %v2348 = vadd.f32 %v2309, %v2340
          %v2349 = vadd.f32 %v2310, %v2340
          %v2350 = vadd.f32 %v2311, %v2340
          %v2351 = vadd.f32 %v2312, %v2340
          %v2352 = vadd.f32 %v2313, %v2340
          %v2353 = vadd.f32 %v2314, %v2340
          %v2354 = vadd.f32 %v2315, %v2340
          %v2355 = vadd.f32 %v2316, %v2340
          %v2356 = vadd.f32 %v2317, %v2340
          %v2357 = vadd.f32 %v2318, %v2340
          %v2358 = vadd.f32 %v2319, %v2340
          %v2359 = vadd.f32 %v2320, %v2340
          %v2360 = vadd.f32 %v2321, %v2340
          %v2361 = vadd.f32 %v2322, %v2340
          %v2362 = vadd.f32 %v2323, %v2340
          %v2363 = vadd.f32 %v2324, %v2340
          %v2364 = vadd.f32 %v2325, %v2340
          %v2365 = vadd.f32 %v2326, %v2340
          %v2366 = vadd.f32 %v2327, %v2340
          %v2367 = vadd.f32 %v2328, %v2340
          %v2368 = vadd.f32 %v2329, %v2340
          %v2369 = vadd.f32 %v2330, %v2340
          %v2370 = vadd.f32 %v2331, %v2340
          %v2371 = vadd.f32 %v2332, %v2340
          %v2372 = vadd.f32 %v2333, %v2340
          %v2373 = vadd.f32 %v2334, %v2340
          %v2374 = vld [vmem:[#allocation8] sm:$0x1]
          %v2376 = vlaneseq
          %v2377 = vshrl.u32 %v2376, 7
          %v2378 = vsub.s32 0, %v2377
          %v2379 = vrot.slane %v2374, %v2378
          %v2381 = vsub.f32 %v2342, %v2379
          %v2382 = vsub.f32 %v2343, %v2379
          %v2383 = vsub.f32 %v2344, %v2379
          %v2384 = vsub.f32 %v2345, %v2379
          %v2385 = vsub.f32 %v2346, %v2379
          %v2386 = vsub.f32 %v2347, %v2379
          %v2387 = vsub.f32 %v2348, %v2379
          %v2388 = vsub.f32 %v2349, %v2379
          %v2389 = vsub.f32 %v2350, %v2379
          %v2390 = vsub.f32 %v2351, %v2379
          %v2391 = vsub.f32 %v2352, %v2379
          %v2392 = vsub.f32 %v2353, %v2379
          %v2393 = vsub.f32 %v2354, %v2379
          %v2394 = vsub.f32 %v2355, %v2379
          %v2395 = vsub.f32 %v2356, %v2379
          %v2396 = vsub.f32 %v2357, %v2379
          %v2397 = vsub.f32 %v2358, %v2379
          %v2398 = vsub.f32 %v2359, %v2379
          %v2399 = vsub.f32 %v2360, %v2379
          %v2400 = vsub.f32 %v2361, %v2379
          %v2401 = vsub.f32 %v2362, %v2379
          %v2402 = vsub.f32 %v2363, %v2379
          %v2403 = vsub.f32 %v2364, %v2379
          %v2404 = vsub.f32 %v2365, %v2379
          %v2405 = vsub.f32 %v2366, %v2379
          %v2406 = vsub.f32 %v2367, %v2379
          %v2407 = vsub.f32 %v2368, %v2379
          %v2408 = vsub.f32 %v2369, %v2379
          %v2409 = vsub.f32 %v2370, %v2379
          %v2410 = vsub.f32 %v2371, %v2379
          %v2411 = vsub.f32 %v2372, %v2379
          %v2412 = vsub.f32 %v2373, %v2379
          %v2413 = vld [vmem:[#allocation9] sm:$0x1]
          %v2415 = vlaneseq
          %v2416 = vshrl.u32 %v2415, 7
          %v2417 = vsub.s32 0, %v2416
          %v2418 = vrot.slane %v2413, %v2417
          %v2420 = vmul.f32 %v2381, %v2418
          %v2421 = vmul.f32 %v2382, %v2418
          %v2422 = vmul.f32 %v2383, %v2418
          %v2423 = vmul.f32 %v2384, %v2418
          %v2424 = vmul.f32 %v2385, %v2418
          %v2425 = vmul.f32 %v2386, %v2418
          %v2426 = vmul.f32 %v2387, %v2418
          %v2427 = vmul.f32 %v2388, %v2418
          %v2428 = vmul.f32 %v2389, %v2418
          %v2429 = vmul.f32 %v2390, %v2418
          %v2430 = vmul.f32 %v2391, %v2418
          %v2431 = vmul.f32 %v2392, %v2418
          %v2432 = vmul.f32 %v2393, %v2418
          %v2433 = vmul.f32 %v2394, %v2418
          %v2434 = vmul.f32 %v2395, %v2418
          %v2435 = vmul.f32 %v2396, %v2418
          %v2436 = vmul.f32 %v2397, %v2418
          %v2437 = vmul.f32 %v2398, %v2418
          %v2438 = vmul.f32 %v2399, %v2418
          %v2439 = vmul.f32 %v2400, %v2418
          %v2440 = vmul.f32 %v2401, %v2418
          %v2441 = vmul.f32 %v2402, %v2418
          %v2442 = vmul.f32 %v2403, %v2418
          %v2443 = vmul.f32 %v2404, %v2418
          %v2444 = vmul.f32 %v2405, %v2418
          %v2445 = vmul.f32 %v2406, %v2418
          %v2446 = vmul.f32 %v2407, %v2418
          %v2447 = vmul.f32 %v2408, %v2418
          %v2448 = vmul.f32 %v2409, %v2418
          %v2449 = vmul.f32 %v2410, %v2418
          %v2450 = vmul.f32 %v2411, %v2418
          %v2451 = vmul.f32 %v2412, %v2418
          %v2452 = vmax.f32 %v2420, 0.0
          %v2453 = vmax.f32 %v2421, 0.0
          %v2454 = vmax.f32 %v2422, 0.0
          %v2455 = vmax.f32 %v2423, 0.0
          %v2456 = vmax.f32 %v2424, 0.0
          %v2457 = vmax.f32 %v2425, 0.0
          %v2458 = vmax.f32 %v2426, 0.0
          %v2459 = vmax.f32 %v2427, 0.0
          %v2460 = vmax.f32 %v2428, 0.0
          %v2461 = vmax.f32 %v2429, 0.0
          %v2462 = vmax.f32 %v2430, 0.0
          %v2463 = vmax.f32 %v2431, 0.0
          %v2464 = vmax.f32 %v2432, 0.0
          %v2465 = vmax.f32 %v2433, 0.0
          %v2466 = vmax.f32 %v2434, 0.0
          %v2467 = vmax.f32 %v2435, 0.0
          %v2468 = vmax.f32 %v2436, 0.0
          %v2469 = vmax.f32 %v2437, 0.0
          %v2470 = vmax.f32 %v2438, 0.0
          %v2471 = vmax.f32 %v2439, 0.0
          %v2472 = vmax.f32 %v2440, 0.0
          %v2473 = vmax.f32 %v2441, 0.0
          %v2474 = vmax.f32 %v2442, 0.0
          %v2475 = vmax.f32 %v2443, 0.0
          %v2476 = vmax.f32 %v2444, 0.0
          %v2477 = vmax.f32 %v2445, 0.0
          %v2478 = vmax.f32 %v2446, 0.0
          %v2479 = vmax.f32 %v2447, 0.0
          %v2480 = vmax.f32 %v2448, 0.0
          %v2481 = vmax.f32 %v2449, 0.0
          %v2482 = vmax.f32 %v2450, 0.0
          %v2483 = vmax.f32 %v2451, 0.0
          %v2484 = vmul.f32 %v2452, %v2270
          %v2485 = vmul.f32 %v2453, %v2271
          %v2486 = vmul.f32 %v2454, %v2272
          %v2487 = vmul.f32 %v2455, %v2273
          %v2488 = vmul.f32 %v2456, %v2274
          %v2489 = vmul.f32 %v2457, %v2275
          %v2490 = vmul.f32 %v2458, %v2276
          %v2491 = vmul.f32 %v2459, %v2277
          %v2492 = vmul.f32 %v2460, %v2278
          %v2493 = vmul.f32 %v2461, %v2279
          %v2494 = vmul.f32 %v2462, %v2280
          %v2495 = vmul.f32 %v2463, %v2281
          %v2496 = vmul.f32 %v2464, %v2282
          %v2497 = vmul.f32 %v2465, %v2283
          %v2498 = vmul.f32 %v2466, %v2284
          %v2499 = vmul.f32 %v2467, %v2285
          %v2500 = vmul.f32 %v2468, %v2286
          %v2501 = vmul.f32 %v2469, %v2287
          %v2502 = vmul.f32 %v2470, %v2288
          %v2503 = vmul.f32 %v2471, %v2289
          %v2504 = vmul.f32 %v2472, %v2290
          %v2505 = vmul.f32 %v2473, %v2291
          %v2506 = vmul.f32 %v2474, %v2292
          %v2507 = vmul.f32 %v2475, %v2293
          %v2508 = vmul.f32 %v2476, %v2294
          %v2509 = vmul.f32 %v2477, %v2295
          %v2510 = vmul.f32 %v2478, %v2296
          %v2511 = vmul.f32 %v2479, %v2297
          %v2512 = vmul.f32 %v2480, %v2298
          %v2513 = vmul.f32 %v2481, %v2299
          %v2514 = vmul.f32 %v2482, %v2300
          %v2515 = vmul.f32 %v2483, %v2301
          %v2516 = vlaneseq
          %v2517 = vand.u32 %v2516, 127
          %v2518 = vadd.s32 %v2517, 128
          %v2519 = vadd.s32 %v2517, %v2173
          %v2520 = vadd.s32 %v2518, %v2173
          %vm2521 = vcmp.lt.s32.totalorder %v2519, 500
          %vm2522 = vcmp.lt.s32.totalorder %v2520, 500
          %v2523 = vsel %vm2521, 1, 0
          %v2524 = vsel %vm2522, 1, 0
          %v2525 = vcvt.s32.f32 %v2523
          %v2526 = vcvt.s32.f32 %v2524
          %v2527 = vld [vmem:[%s499] sm:$0x3]
          %v2528 = vlaneseq
          %v2529 = vshrl.u32 %v2528, 7
          %v2530 = vsub.s32 0, %v2529
          %v2531 = vrot.slane %v2527, %v2530
          %v2532 = vlaneseq
          %v2533 = vshrl.u32 %v2532, 7
          %v2534 = vsub.s32 1, %v2533
          %v2535 = vrot.slane %v2527, %v2534
          %vm2536 = vcmp.eq.s32.totalorder %v2140, %v2531
          %vm2537 = vcmp.eq.s32.totalorder %v2140, %v2535
          %v2538 = vsel %vm2536, 1, 0
          %v2539 = vsel %vm2537, 1, 0
          %v2540 = vcvt.s32.f32 %v2538
          %v2541 = vcvt.s32.f32 %v2539
          %v2542 = vmul.f32 %v2540, %v2525
          %v2543 = vmul.f32 %v2541, %v2526
          %v2544 = vld [vmem:[#allocation10] sm:$0xff]
          %2545 = vmatprep.subr.mxu0 0.0
          %2546 = vmatpush1.msra.mxu0 %v2499
          %2547 = vmatprep.subr.mxu0 0.0
          %2548 = vmatpush1.msra.mxu0 %v2498
          %2549 = vmatprep.subr.mxu0 0.0
          %2550 = vmatpush1.msra.mxu0 %v2497
          %2551 = vmatprep.subr.mxu0 0.0
          %2552 = vmatpush1.msra.mxu0 %v2496
          %2553 = vmatprep.subr.mxu0 0.0
          %2554 = vmatpush1.msra.mxu0 %v2495
          %2555 = vmatprep.subr.mxu0 0.0
          %2556 = vmatpush1.msra.mxu0 %v2494
          %2557 = vmatprep.subr.mxu0 0.0
          %2558 = vmatpush1.msra.mxu0 %v2493
          %2559 = vmatprep.subr.mxu0 0.0
          %2560 = vmatpush1.msra.mxu0 %v2492
          %2561 = vmatprep.subr.mxu0 0.0
          %2562 = vmatpush1.msra.mxu0 %v2491
          %2563 = vmatprep.subr.mxu0 0.0
          %2564 = vmatpush1.msra.mxu0 %v2490
          %2565 = vmatprep.subr.mxu0 0.0
          %2566 = vmatpush1.msra.mxu0 %v2489
          %2567 = vmatprep.subr.mxu0 0.0
          %2568 = vmatpush1.msra.mxu0 %v2488
          %2569 = vmatprep.subr.mxu0 0.0
          %2570 = vmatpush1.msra.mxu0 %v2487
          %2571 = vmatprep.subr.mxu0 0.0
          %2572 = vmatpush1.msra.mxu0 %v2486
          %2573 = vmatprep.subr.mxu0 0.0
          %2574 = vmatpush1.msra.mxu0 %v2485
          %2575 = vmatprep.subr.mxu0 0.0
          %2576 = vmatpush1.msra.mxu0 %v2484
          %2577 = vmatprep.subr.mxu0 0.0
          %2578 = vmatpush2.msra.mxu0 %v2515
          %2579 = vmatprep.subr.mxu0 0.0
          %2580 = vmatpush2.msra.mxu0 %v2514
          %2581 = vmatprep.subr.mxu0 0.0
          %2582 = vmatpush2.msra.mxu0 %v2513
          %2583 = vmatprep.subr.mxu0 0.0
          %2584 = vmatpush2.msra.mxu0 %v2512
          %2585 = vmatprep.subr.mxu0 0.0
          %2586 = vmatpush2.msra.mxu0 %v2511
          %2587 = vmatprep.subr.mxu0 0.0
          %2588 = vmatpush2.msra.mxu0 %v2510
          %2589 = vmatprep.subr.mxu0 0.0
          %2590 = vmatpush2.msra.mxu0 %v2509
          %2591 = vmatprep.subr.mxu0 0.0
          %2592 = vmatpush2.msra.mxu0 %v2508
          %2593 = vmatprep.subr.mxu0 0.0
          %2594 = vmatpush2.msra.mxu0 %v2507
          %2595 = vmatprep.subr.mxu0 0.0
          %2596 = vmatpush2.msra.mxu0 %v2506
          %2597 = vmatprep.subr.mxu0 0.0
          %2598 = vmatpush2.msra.mxu0 %v2505
          %2599 = vmatprep.subr.mxu0 0.0
          %2600 = vmatpush2.msra.mxu0 %v2504
          %2601 = vmatprep.subr.mxu0 0.0
          %2602 = vmatpush2.msra.mxu0 %v2503
          %2603 = vmatprep.subr.mxu0 0.0
          %2604 = vmatpush2.msra.mxu0 %v2502
          %2605 = vmatprep.subr.mxu0 0.0
          %2606 = vmatpush2.msra.mxu0 %v2501
          %2607 = vmatprep.subr.mxu0 0.0
          %2608 = vmatpush2.msra.mxu0 %v2500
          %2609 = vmatprep.mubr.f32.mxu0 %v2543
          %2610 = vmatmul.mubr.f32.gmra.mxu0 %v2542
          %v2611 = vpop.f32.mrf.mxu0
          %v2612 = vadd.f32 0.0, %v2611
          %v2613 = vpop.f32.mrf.mxu0
          %2614 = vdwg.mxu0
          %v2615 = vadd.f32 %v2544, %v2612
          %2616 = vst [vmem:[#allocation10] sm:$0xff] %v2615
          %v2617 = vld [vmem:[#allocation11] sm:$0xff]
          %v2618 = vadd.f32 %v2542, %v2543
          %2619 = vadd.xlane.f32.xlu0 %v2618
          %v2620 = vpop.xlane.xlu0 %2619
          %v2621 = vadd.f32 %v2617, %v2620
          %vm2622 = vcmask 7168
          %2623 = vst.msk [vmem:[#allocation11] sm:$0xff] %vm2622, %v2621
          %p2624 = scmp.eq.s32.totalorder %s31, 1
          // Predicated region
          $region101: #{tpu_custom_call.1} parent=99 // pred_check
            %p2625 = pneg %p2624
          $region102: #{tpu_custom_call.1} parent=99 // pred_check_branch
            %2627 = sbr.rel (%p2625) target = $region104
          $region103: #{tpu_custom_call.1} parent=99 // pred_region
            %v2628 = vld [vmem:[#allocation10] sm:$0xff]
            %v2629 = vld [vmem:[#allocation11] sm:$0xff]
            %v2630 = vmax.f32 %v2629, 1.0
            %2632 = vset.pattern.permute.xlu0 0
            %2633 = vperm.xlu0 %2632, %v2630
            %v2634 = vpop.permute.xlu0 %2633
            %v2636 = vrcp.pop %v2634
            %v2637 = vmul.f32 %v2628, %v2636
            %v2638 = vld [vmem:[%s8] sm:$0xff]
            %v2639 = vld [vmem:[%s8 + $0x8] sm:$0xff]
            %v2640 = vld [vmem:[%s8 + $0x10] sm:$0xff]
            %v2641 = vld [vmem:[%s8 + $0x18] sm:$0xff]
            %v2642 = vld [vmem:[%s8 + $0x20] sm:$0xff]
            %v2643 = vld [vmem:[%s8 + $0x28] sm:$0xff]
            %v2644 = vld [vmem:[%s8 + $0x30] sm:$0xff]
            %v2645 = vld [vmem:[%s8 + $0x38] sm:$0xff]
            %v2646 = vld [vmem:[%s8 + $0x40] sm:$0xff]
            %v2647 = vld [vmem:[%s8 + $0x48] sm:$0xff]
            %v2648 = vld [vmem:[%s8 + $0x50] sm:$0xff]
            %v2649 = vld [vmem:[%s8 + $0x58] sm:$0xff]
            %v2650 = vld [vmem:[%s8 + $0x60] sm:$0xff]
            %v2651 = vld [vmem:[%s8 + $0x68] sm:$0xff]
            %v2652 = vld [vmem:[%s8 + $0x70] sm:$0xff]
            %v2653 = vld [vmem:[%s8 + $0x78] sm:$0xff]
            %v2654 = vld [vmem:[%s9] sm:$0x1]
            %v2656 = vlaneseq
            %v2657 = vshrl.u32 %v2656, 7
            %v2658 = vsub.s32 0, %v2657
            %v2659 = vrot.slane %v2654, %v2658
            %2661 = vmatprep.subr.mxu0 0.0
            %2662 = vmatpush1.msra.mxu0 %v2653
            %2663 = vmatprep.subr.mxu0 0.0
            %2664 = vmatpush1.msra.mxu0 %v2652
            %2665 = vmatprep.subr.mxu0 0.0
            %2666 = vmatpush1.msra.mxu0 %v2651
            %2667 = vmatprep.subr.mxu0 0.0
            %2668 = vmatpush1.msra.mxu0 %v2650
            %2669 = vmatprep.subr.mxu0 0.0
            %2670 = vmatpush1.msra.mxu0 %v2649
            %2671 = vmatprep.subr.mxu0 0.0
            %2672 = vmatpush1.msra.mxu0 %v2648
            %2673 = vmatprep.subr.mxu0 0.0
            %2674 = vmatpush1.msra.mxu0 %v2647
            %2675 = vmatprep.subr.mxu0 0.0
            %2676 = vmatpush1.msra.mxu0 %v2646
            %2677 = vmatprep.subr.mxu0 0.0
            %2678 = vmatpush1.msra.mxu0 %v2645
            %2679 = vmatprep.subr.mxu0 0.0
            %2680 = vmatpush1.msra.mxu0 %v2644
            %2681 = vmatprep.subr.mxu0 0.0
            %2682 = vmatpush1.msra.mxu0 %v2643
            %2683 = vmatprep.subr.mxu0 0.0
            %2684 = vmatpush1.msra.mxu0 %v2642
            %2685 = vmatprep.subr.mxu0 0.0
            %2686 = vmatpush1.msra.mxu0 %v2641
            %2687 = vmatprep.subr.mxu0 0.0
            %2688 = vmatpush1.msra.mxu0 %v2640
            %2689 = vmatprep.subr.mxu0 0.0
            %2690 = vmatpush1.msra.mxu0 %v2639
            %2691 = vmatprep.subr.mxu0 0.0
            %2692 = vmatpush1.msra.mxu0 %v2638
            %2693 = vmatprep.subr.mxu0 0.0
            %2694 = vmatpush2.msra.mxu0 0.0
            %2695 = vmatprep.subr.mxu0 0.0
            %2696 = vmatpush2.msra.mxu0 0.0
            %2697 = vmatprep.subr.mxu0 0.0
            %2698 = vmatpush2.msra.mxu0 0.0
            %2699 = vmatprep.subr.mxu0 0.0
            %2700 = vmatpush2.msra.mxu0 0.0
            %2701 = vmatprep.subr.mxu0 0.0
            %2702 = vmatpush2.msra.mxu0 0.0
            %2703 = vmatprep.subr.mxu0 0.0
            %2704 = vmatpush2.msra.mxu0 0.0
            %2705 = vmatprep.subr.mxu0 0.0
            %2706 = vmatpush2.msra.mxu0 0.0
            %2707 = vmatprep.subr.mxu0 0.0
            %2708 = vmatpush2.msra.mxu0 0.0
            %2709 = vmatprep.subr.mxu0 0.0
            %2710 = vmatpush2.msra.mxu0 0.0
            %2711 = vmatprep.subr.mxu0 0.0
            %2712 = vmatpush2.msra.mxu0 0.0
            %2713 = vmatprep.subr.mxu0 0.0
            %2714 = vmatpush2.msra.mxu0 0.0
            %2715 = vmatprep.subr.mxu0 0.0
            %2716 = vmatpush2.msra.mxu0 0.0
            %2717 = vmatprep.subr.mxu0 0.0
            %2718 = vmatpush2.msra.mxu0 0.0
            %2719 = vmatprep.subr.mxu0 0.0
            %2720 = vmatpush2.msra.mxu0 0.0
            %2721 = vmatprep.subr.mxu0 0.0
            %2722 = vmatpush2.msra.mxu0 0.0
            %2723 = vmatprep.subr.mxu0 0.0
            %2724 = vmatpush2.msra.mxu0 0.0
            %2725 = vmatprep.mubr.f32.mxu0 0.0
            %2726 = vmatmul.mubr.f32.gmra.mxu0 %v2637
            %v2727 = vpop.f32.mrf.mxu0
            %v2728 = vadd.f32 %v2659, %v2727
            %v2729 = vpop.f32.mrf.mxu0
            %2730 = vdwg.mxu0
            %2731 = vst [vmem:[#allocation10] sm:$0xff] %v2728
          $region104: #{tpu_custom_call.1} parent=99 // pred_fallthru
            _
        $region100: #{tpu_custom_call.1} parent=67 // pred_fallthru
          _
        %p2732 = scmp.eq.s32.totalorder %s30, 4
        // Predicated region
        $region105: #{tpu_custom_call.1} parent=67 // pred_check
          %p2733 = pneg %p2732
        $region106: #{tpu_custom_call.1} parent=67 // pred_check_branch
          %2735 = sbr.rel (%p2733) target = $region108
        $region107: #{tpu_custom_call.1} parent=67 // pred_region
          %v2736 = vlaneseq
          %v2737 = vand.u32 %v2736, 127
          %v2738 = vld [vmem:[%s509] sm:$0xff]
          %v2739 = vld [vmem:[%s509 + $0x8] sm:$0xff]
          %v2740 = vld [vmem:[%s509 + $0x10] sm:$0xff]
          %v2741 = vld [vmem:[%s509 + $0x18] sm:$0xff]
          %v2742 = vld [vmem:[%s509 + $0x20] sm:$0xff]
          %v2743 = vld [vmem:[%s509 + $0x28] sm:$0xff]
          %v2744 = vld [vmem:[%s509 + $0x30] sm:$0xff]
          %v2745 = vld [vmem:[%s509 + $0x38] sm:$0xff]
          %v2746 = vld [vmem:[%s509 + $0x40] sm:$0xff]
          %v2747 = vld [vmem:[%s509 + $0x48] sm:$0xff]
          %v2748 = vld [vmem:[%s509 + $0x50] sm:$0xff]
          %v2749 = vld [vmem:[%s509 + $0x58] sm:$0xff]
          %v2750 = vld [vmem:[%s509 + $0x60] sm:$0xff]
          %v2751 = vld [vmem:[%s509 + $0x68] sm:$0xff]
          %v2752 = vld [vmem:[%s509 + $0x70] sm:$0xff]
          %v2753 = vld [vmem:[%s509 + $0x78] sm:$0xff]
          %v2754 = vld [vmem:[%s509 + $0x80] sm:$0xff]
          %v2755 = vld [vmem:[%s509 + $0x88] sm:$0xff]
          %v2756 = vld [vmem:[%s509 + $0x90] sm:$0xff]
          %v2757 = vld [vmem:[%s509 + $0x98] sm:$0xff]
          %v2758 = vld [vmem:[%s509 + $0xa0] sm:$0xff]
          %v2759 = vld [vmem:[%s509 + $0xa8] sm:$0xff]
          %v2760 = vld [vmem:[%s509 + $0xb0] sm:$0xff]
          %v2761 = vld [vmem:[%s509 + $0xb8] sm:$0xff]
          %v2762 = vld [vmem:[%s509 + $0xc0] sm:$0xff]
          %v2763 = vld [vmem:[%s509 + $0xc8] sm:$0xff]
          %v2764 = vld [vmem:[%s509 + $0xd0] sm:$0xff]
          %v2765 = vld [vmem:[%s509 + $0xd8] sm:$0xff]
          %v2766 = vld [vmem:[%s509 + $0xe0] sm:$0xff]
          %v2767 = vld [vmem:[%s509 + $0xe8] sm:$0xff]
          %v2768 = vld [vmem:[%s509 + $0xf0] sm:$0xff]
          %v2769 = vld [vmem:[%s509 + $0xf8] sm:$0xff]
          %2770 = vset.pattern.permute.xlu0 0
          %2771 = vperm.xlu0 %2770, %v2738
          %v2772 = vpop.permute.xlu0 %2771
          %2773 = vset.pattern.permute.xlu0 0
          %2774 = vperm.xlu0 %2773, %v2739
          %v2775 = vpop.permute.xlu0 %2774
          %2776 = vset.pattern.permute.xlu0 0
          %2777 = vperm.xlu0 %2776, %v2740
          %v2778 = vpop.permute.xlu0 %2777
          %2779 = vset.pattern.permute.xlu0 0
          %2780 = vperm.xlu0 %2779, %v2741
          %v2781 = vpop.permute.xlu0 %2780
          %2782 = vset.pattern.permute.xlu0 0
          %2783 = vperm.xlu0 %2782, %v2742
          %v2784 = vpop.permute.xlu0 %2783
          %2785 = vset.pattern.permute.xlu0 0
          %2786 = vperm.xlu0 %2785, %v2743
          %v2787 = vpop.permute.xlu0 %2786
          %2788 = vset.pattern.permute.xlu0 0
          %2789 = vperm.xlu0 %2788, %v2744
          %v2790 = vpop.permute.xlu0 %2789
          %2791 = vset.pattern.permute.xlu0 0
          %2792 = vperm.xlu0 %2791, %v2745
          %v2793 = vpop.permute.xlu0 %2792
          %2794 = vset.pattern.permute.xlu0 0
          %2795 = vperm.xlu0 %2794, %v2746
          %v2796 = vpop.permute.xlu0 %2795
          %2797 = vset.pattern.permute.xlu0 0
          %2798 = vperm.xlu0 %2797, %v2747
          %v2799 = vpop.permute.xlu0 %2798
          %2800 = vset.pattern.permute.xlu0 0
          %2801 = vperm.xlu0 %2800, %v2748
          %v2802 = vpop.permute.xlu0 %2801
          %2803 = vset.pattern.permute.xlu0 0
          %2804 = vperm.xlu0 %2803, %v2749
          %v2805 = vpop.permute.xlu0 %2804
          %2806 = vset.pattern.permute.xlu0 0
          %2807 = vperm.xlu0 %2806, %v2750
          %v2808 = vpop.permute.xlu0 %2807
          %2809 = vset.pattern.permute.xlu0 0
          %2810 = vperm.xlu0 %2809, %v2751
          %v2811 = vpop.permute.xlu0 %2810
          %2812 = vset.pattern.permute.xlu0 0
          %2813 = vperm.xlu0 %2812, %v2752
          %v2814 = vpop.permute.xlu0 %2813
          %2815 = vset.pattern.permute.xlu0 0
          %2816 = vperm.xlu0 %2815, %v2753
          %v2817 = vpop.permute.xlu0 %2816
          %2818 = vset.pattern.permute.xlu0 0
          %2819 = vperm.xlu0 %2818, %v2754
          %v2820 = vpop.permute.xlu0 %2819
          %2821 = vset.pattern.permute.xlu0 0
          %2822 = vperm.xlu0 %2821, %v2755
          %v2823 = vpop.permute.xlu0 %2822
          %2824 = vset.pattern.permute.xlu0 0
          %2825 = vperm.xlu0 %2824, %v2756
          %v2826 = vpop.permute.xlu0 %2825
          %2827 = vset.pattern.permute.xlu0 0
          %2828 = vperm.xlu0 %2827, %v2757
          %v2829 = vpop.permute.xlu0 %2828
          %2830 = vset.pattern.permute.xlu0 0
          %2831 = vperm.xlu0 %2830, %v2758
          %v2832 = vpop.permute.xlu0 %2831
          %2833 = vset.pattern.permute.xlu0 0
          %2834 = vperm.xlu0 %2833, %v2759
          %v2835 = vpop.permute.xlu0 %2834
          %2836 = vset.pattern.permute.xlu0 0
          %2837 = vperm.xlu0 %2836, %v2760
          %v2838 = vpop.permute.xlu0 %2837
          %2839 = vset.pattern.permute.xlu0 0
          %2840 = vperm.xlu0 %2839, %v2761
          %v2841 = vpop.permute.xlu0 %2840
          %2842 = vset.pattern.permute.xlu0 0
          %2843 = vperm.xlu0 %2842, %v2762
          %v2844 = vpop.permute.xlu0 %2843
          %2845 = vset.pattern.permute.xlu0 0
          %2846 = vperm.xlu0 %2845, %v2763
          %v2847 = vpop.permute.xlu0 %2846
          %2848 = vset.pattern.permute.xlu0 0
          %2849 = vperm.xlu0 %2848, %v2764
          %v2850 = vpop.permute.xlu0 %2849
          %2851 = vset.pattern.permute.xlu0 0
          %2852 = vperm.xlu0 %2851, %v2765
          %v2853 = vpop.permute.xlu0 %2852
          %2854 = vset.pattern.permute.xlu0 0
          %2855 = vperm.xlu0 %2854, %v2766
          %v2856 = vpop.permute.xlu0 %2855
          %2857 = vset.pattern.permute.xlu0 0
          %2858 = vperm.xlu0 %2857, %v2767
          %v2859 = vpop.permute.xlu0 %2858
          %2860 = vset.pattern.permute.xlu0 0
          %2861 = vperm.xlu0 %2860, %v2768
          %v2862 = vpop.permute.xlu0 %2861
          %2863 = vset.pattern.permute.xlu0 0
          %2864 = vperm.xlu0 %2863, %v2769
          %v2865 = vpop.permute.xlu0 %2864
          %vm2866 = vcmp.eq.s32.totalorder %v2737, %v2772
          %vm2867 = vcmp.eq.s32.totalorder %v2737, %v2775
          %vm2868 = vcmp.eq.s32.totalorder %v2737, %v2778
          %vm2869 = vcmp.eq.s32.totalorder %v2737, %v2781
          %vm2870 = vcmp.eq.s32.totalorder %v2737, %v2784
          %vm2871 = vcmp.eq.s32.totalorder %v2737, %v2787
          %vm2872 = vcmp.eq.s32.totalorder %v2737, %v2790
          %vm2873 = vcmp.eq.s32.totalorder %v2737, %v2793
          %vm2874 = vcmp.eq.s32.totalorder %v2737, %v2796
          %vm2875 = vcmp.eq.s32.totalorder %v2737, %v2799
          %vm2876 = vcmp.eq.s32.totalorder %v2737, %v2802
          %vm2877 = vcmp.eq.s32.totalorder %v2737, %v2805
          %vm2878 = vcmp.eq.s32.totalorder %v2737, %v2808
          %vm2879 = vcmp.eq.s32.totalorder %v2737, %v2811
          %vm2880 = vcmp.eq.s32.totalorder %v2737, %v2814
          %vm2881 = vcmp.eq.s32.totalorder %v2737, %v2817
          %vm2882 = vcmp.eq.s32.totalorder %v2737, %v2820
          %vm2883 = vcmp.eq.s32.totalorder %v2737, %v2823
          %vm2884 = vcmp.eq.s32.totalorder %v2737, %v2826
          %vm2885 = vcmp.eq.s32.totalorder %v2737, %v2829
          %vm2886 = vcmp.eq.s32.totalorder %v2737, %v2832
          %vm2887 = vcmp.eq.s32.totalorder %v2737, %v2835
          %vm2888 = vcmp.eq.s32.totalorder %v2737, %v2838
          %vm2889 = vcmp.eq.s32.totalorder %v2737, %v2841
          %vm2890 = vcmp.eq.s32.totalorder %v2737, %v2844
          %vm2891 = vcmp.eq.s32.totalorder %v2737, %v2847
          %vm2892 = vcmp.eq.s32.totalorder %v2737, %v2850
          %vm2893 = vcmp.eq.s32.totalorder %v2737, %v2853
          %vm2894 = vcmp.eq.s32.totalorder %v2737, %v2856
          %vm2895 = vcmp.eq.s32.totalorder %v2737, %v2859
          %vm2896 = vcmp.eq.s32.totalorder %v2737, %v2862
          %vm2897 = vcmp.eq.s32.totalorder %v2737, %v2865
          %v2898 = vsel %vm2866, 1, 0
          %v2899 = vsel %vm2867, 1, 0
          %v2900 = vsel %vm2868, 1, 0
          %v2901 = vsel %vm2869, 1, 0
          %v2902 = vsel %vm2870, 1, 0
          %v2903 = vsel %vm2871, 1, 0
          %v2904 = vsel %vm2872, 1, 0
          %v2905 = vsel %vm2873, 1, 0
          %v2906 = vsel %vm2874, 1, 0
          %v2907 = vsel %vm2875, 1, 0
          %v2908 = vsel %vm2876, 1, 0
          %v2909 = vsel %vm2877, 1, 0
          %v2910 = vsel %vm2878, 1, 0
          %v2911 = vsel %vm2879, 1, 0
          %v2912 = vsel %vm2880, 1, 0
          %v2913 = vsel %vm2881, 1, 0
          %v2914 = vsel %vm2882, 1, 0
          %v2915 = vsel %vm2883, 1, 0
          %v2916 = vsel %vm2884, 1, 0
          %v2917 = vsel %vm2885, 1, 0
          %v2918 = vsel %vm2886, 1, 0
          %v2919 = vsel %vm2887, 1, 0
          %v2920 = vsel %vm2888, 1, 0
          %v2921 = vsel %vm2889, 1, 0
          %v2922 = vsel %vm2890, 1, 0
          %v2923 = vsel %vm2891, 1, 0
          %v2924 = vsel %vm2892, 1, 0
          %v2925 = vsel %vm2893, 1, 0
          %v2926 = vsel %vm2894, 1, 0
          %v2927 = vsel %vm2895, 1, 0
          %v2928 = vsel %vm2896, 1, 0
          %v2929 = vsel %vm2897, 1, 0
          %v2930 = vcvt.s32.f32 %v2898
          %v2931 = vcvt.s32.f32 %v2899
          %v2932 = vcvt.s32.f32 %v2900
          %v2933 = vcvt.s32.f32 %v2901
          %v2934 = vcvt.s32.f32 %v2902
          %v2935 = vcvt.s32.f32 %v2903
          %v2936 = vcvt.s32.f32 %v2904
          %v2937 = vcvt.s32.f32 %v2905
          %v2938 = vcvt.s32.f32 %v2906
          %v2939 = vcvt.s32.f32 %v2907
          %v2940 = vcvt.s32.f32 %v2908
          %v2941 = vcvt.s32.f32 %v2909
          %v2942 = vcvt.s32.f32 %v2910
          %v2943 = vcvt.s32.f32 %v2911
          %v2944 = vcvt.s32.f32 %v2912
          %v2945 = vcvt.s32.f32 %v2913
          %v2946 = vcvt.s32.f32 %v2914
          %v2947 = vcvt.s32.f32 %v2915
          %v2948 = vcvt.s32.f32 %v2916
          %v2949 = vcvt.s32.f32 %v2917
          %v2950 = vcvt.s32.f32 %v2918
          %v2951 = vcvt.s32.f32 %v2919
          %v2952 = vcvt.s32.f32 %v2920
          %v2953 = vcvt.s32.f32 %v2921
          %v2954 = vcvt.s32.f32 %v2922
          %v2955 = vcvt.s32.f32 %v2923
          %v2956 = vcvt.s32.f32 %v2924
          %v2957 = vcvt.s32.f32 %v2925
          %v2958 = vcvt.s32.f32 %v2926
          %v2959 = vcvt.s32.f32 %v2927
          %v2960 = vcvt.s32.f32 %v2928
          %v2961 = vcvt.s32.f32 %v2929
          %v2962 = vld [vmem:[#allocation10] sm:$0xff]
          %vm2963 = vcmask 64512
          %v2965 = vsel %vm2963, %v2930, 0
          %v2968 = vsel %vm2963, %v2931, 0
          %v2971 = vsel %vm2963, %v2932, 0
          %v2974 = vsel %vm2963, %v2933, 0
          %v2977 = vsel %vm2963, %v2934, 0
          %v2980 = vsel %vm2963, %v2935, 0
          %v2983 = vsel %vm2963, %v2936, 0
          %v2986 = vsel %vm2963, %v2937, 0
          %v2989 = vsel %vm2963, %v2938, 0
          %v2992 = vsel %vm2963, %v2939, 0
          %v2995 = vsel %vm2963, %v2940, 0
          %v2998 = vsel %vm2963, %v2941, 0
          %v3001 = vsel %vm2963, %v2942, 0
          %v3004 = vsel %vm2963, %v2943, 0
          %v3007 = vsel %vm2963, %v2944, 0
          %v3010 = vsel %vm2963, %v2945, 0
          %v3013 = vsel %vm2963, %v2946, 0
          %v3016 = vsel %vm2963, %v2947, 0
          %v3019 = vsel %vm2963, %v2948, 0
          %v3022 = vsel %vm2963, %v2949, 0
          %v3025 = vsel %vm2963, %v2950, 0
          %v3028 = vsel %vm2963, %v2951, 0
          %v3031 = vsel %vm2963, %v2952, 0
          %v3034 = vsel %vm2963, %v2953, 0
          %v3037 = vsel %vm2963, %v2954, 0
          %v3040 = vsel %vm2963, %v2955, 0
          %v3043 = vsel %vm2963, %v2956, 0
          %v3046 = vsel %vm2963, %v2957, 0
          %v3049 = vsel %vm2963, %v2958, 0
          %v3052 = vsel %vm2963, %v2959, 0
          %v3055 = vsel %vm2963, %v2960, 0
          %v3058 = vsel %vm2963, %v2961, 0
          %3060 = vmatprep.subr.mxu0 0.0
          %3061 = vmatpush1.msra.mxu0 0.0
          %3062 = vmatprep.subr.mxu0 0.0
          %3063 = vmatpush1.msra.mxu0 0.0
          %3064 = vmatprep.subr.mxu0 0.0
          %3065 = vmatpush1.msra.mxu0 0.0
          %3066 = vmatprep.subr.mxu0 0.0
          %3067 = vmatpush1.msra.mxu0 0.0
          %3068 = vmatprep.subr.mxu0 0.0
          %3069 = vmatpush1.msra.mxu0 0.0
          %3070 = vmatprep.subr.mxu0 0.0
          %3071 = vmatpush1.msra.mxu0 0.0
          %3072 = vmatprep.subr.mxu0 0.0
          %3073 = vmatpush1.msra.mxu0 0.0
          %3074 = vmatprep.subr.mxu0 0.0
          %3075 = vmatpush1.msra.mxu0 0.0
          %3076 = vmatprep.subr.mxu0 0.0
          %3077 = vmatpush1.msra.mxu0 0.0
          %3078 = vmatprep.subr.mxu0 0.0
          %3079 = vmatpush1.msra.mxu0 0.0
          %3080 = vmatprep.subr.mxu0 0.0
          %3081 = vmatpush1.msra.mxu0 0.0
          %3082 = vmatprep.subr.mxu0 0.0
          %3083 = vmatpush1.msra.mxu0 0.0
          %3084 = vmatprep.subr.mxu0 0.0
          %3085 = vmatpush1.msra.mxu0 0.0
          %3086 = vmatprep.subr.mxu0 0.0
          %3087 = vmatpush1.msra.mxu0 0.0
          %3088 = vmatprep.subr.mxu0 0.0
          %3089 = vmatpush1.msra.mxu0 0.0
          %3090 = vmatprep.subr.mxu0 0.0
          %3091 = vmatpush1.msra.mxu0 %v2962
          %3092 = vmatprep.subr.mxu0 0.0
          %3093 = vmatpush2.msra.mxu0 0.0
          %3094 = vmatprep.subr.mxu0 0.0
          %3095 = vmatpush2.msra.mxu0 0.0
          %3096 = vmatprep.subr.mxu0 0.0
          %3097 = vmatpush2.msra.mxu0 0.0
          %3098 = vmatprep.subr.mxu0 0.0
          %3099 = vmatpush2.msra.mxu0 0.0
          %3100 = vmatprep.subr.mxu0 0.0
          %3101 = vmatpush2.msra.mxu0 0.0
          %3102 = vmatprep.subr.mxu0 0.0
          %3103 = vmatpush2.msra.mxu0 0.0
          %3104 = vmatprep.subr.mxu0 0.0
          %3105 = vmatpush2.msra.mxu0 0.0
          %3106 = vmatprep.subr.mxu0 0.0
          %3107 = vmatpush2.msra.mxu0 0.0
          %3108 = vmatprep.subr.mxu0 0.0
          %3109 = vmatpush2.msra.mxu0 0.0
          %3110 = vmatprep.subr.mxu0 0.0
          %3111 = vmatpush2.msra.mxu0 0.0
          %3112 = vmatprep.subr.mxu0 0.0
          %3113 = vmatpush2.msra.mxu0 0.0
          %3114 = vmatprep.subr.mxu0 0.0
          %3115 = vmatpush2.msra.mxu0 0.0
          %3116 = vmatprep.subr.mxu0 0.0
          %3117 = vmatpush2.msra.mxu0 0.0
          %3118 = vmatprep.subr.mxu0 0.0
          %3119 = vmatpush2.msra.mxu0 0.0
          %3120 = vmatprep.subr.mxu0 0.0
          %3121 = vmatpush2.msra.mxu0 0.0
          %3122 = vmatprep.subr.mxu0 0.0
          %3123 = vmatpush2.msra.mxu0 0.0
          %3124 = vmatprep.mubr.f32.mxu0 0.0
          %3125 = vmatmul.mubr.f32.gmra.mxu0 %v2965
          %v3126 = vpop.f32.mrf.mxu0
          %v3127 = vadd.f32 0.0, %v3126
          %v3128 = vpop.f32.mrf.mxu0
          %3129 = vmatprep.mubr.f32.mxu0 0.0
          %3130 = vmatmul.mubr.f32.gmra.mxu0 %v2968
          %v3131 = vpop.f32.mrf.mxu0
          %v3132 = vadd.f32 0.0, %v3131
          %v3133 = vpop.f32.mrf.mxu0
          %3134 = vmatprep.mubr.f32.mxu0 0.0
          %3135 = vmatmul.mubr.f32.gmra.mxu0 %v2971
          %v3136 = vpop.f32.mrf.mxu0
          %v3137 = vadd.f32 0.0, %v3136
          %v3138 = vpop.f32.mrf.mxu0
          %3139 = vmatprep.mubr.f32.mxu0 0.0
          %3140 = vmatmul.mubr.f32.gmra.mxu0 %v2974
          %v3141 = vpop.f32.mrf.mxu0
          %v3142 = vadd.f32 0.0, %v3141
          %v3143 = vpop.f32.mrf.mxu0
          %3144 = vmatprep.mubr.f32.mxu0 0.0
          %3145 = vmatmul.mubr.f32.gmra.mxu0 %v2977
          %v3146 = vpop.f32.mrf.mxu0
          %v3147 = vadd.f32 0.0, %v3146
          %v3148 = vpop.f32.mrf.mxu0
          %3149 = vmatprep.mubr.f32.mxu0 0.0
          %3150 = vmatmul.mubr.f32.gmra.mxu0 %v2980
          %v3151 = vpop.f32.mrf.mxu0
          %v3152 = vadd.f32 0.0, %v3151
          %v3153 = vpop.f32.mrf.mxu0
          %3154 = vmatprep.mubr.f32.mxu0 0.0
          %3155 = vmatmul.mubr.f32.gmra.mxu0 %v2983
          %v3156 = vpop.f32.mrf.mxu0
          %v3157 = vadd.f32 0.0, %v3156
          %v3158 = vpop.f32.mrf.mxu0
          %3159 = vmatprep.mubr.f32.mxu0 0.0
          %3160 = vmatmul.mubr.f32.gmra.mxu0 %v2986
          %v3161 = vpop.f32.mrf.mxu0
          %v3162 = vadd.f32 0.0, %v3161
          %v3163 = vpop.f32.mrf.mxu0
          %3164 = vmatprep.mubr.f32.mxu0 0.0
          %3165 = vmatmul.mubr.f32.gmra.mxu0 %v2989
          %v3166 = vpop.f32.mrf.mxu0
          %v3167 = vadd.f32 0.0, %v3166
          %v3168 = vpop.f32.mrf.mxu0
          %3169 = vmatprep.mubr.f32.mxu0 0.0
          %3170 = vmatmul.mubr.f32.gmra.mxu0 %v2992
          %v3171 = vpop.f32.mrf.mxu0
          %v3172 = vadd.f32 0.0, %v3171
          %v3173 = vpop.f32.mrf.mxu0
          %3174 = vmatprep.mubr.f32.mxu0 0.0
          %3175 = vmatmul.mubr.f32.gmra.mxu0 %v2995
          %v3176 = vpop.f32.mrf.mxu0
          %v3177 = vadd.f32 0.0, %v3176
          %v3178 = vpop.f32.mrf.mxu0
          %3179 = vmatprep.mubr.f32.mxu0 0.0
          %3180 = vmatmul.mubr.f32.gmra.mxu0 %v2998
          %v3181 = vpop.f32.mrf.mxu0
          %v3182 = vadd.f32 0.0, %v3181
          %v3183 = vpop.f32.mrf.mxu0
          %3184 = vmatprep.mubr.f32.mxu0 0.0
          %3185 = vmatmul.mubr.f32.gmra.mxu0 %v3001
          %v3186 = vpop.f32.mrf.mxu0
          %v3187 = vadd.f32 0.0, %v3186
          %v3188 = vpop.f32.mrf.mxu0
          %3189 = vmatprep.mubr.f32.mxu0 0.0
          %3190 = vmatmul.mubr.f32.gmra.mxu0 %v3004
          %v3191 = vpop.f32.mrf.mxu0
          %v3192 = vadd.f32 0.0, %v3191
          %v3193 = vpop.f32.mrf.mxu0
          %3194 = vmatprep.mubr.f32.mxu0 0.0
          %3195 = vmatmul.mubr.f32.gmra.mxu0 %v3007
          %v3196 = vpop.f32.mrf.mxu0
          %v3197 = vadd.f32 0.0, %v3196
          %v3198 = vpop.f32.mrf.mxu0
          %3199 = vmatprep.mubr.f32.mxu0 0.0
          %3200 = vmatmul.mubr.f32.gmra.mxu0 %v3010
          %v3201 = vpop.f32.mrf.mxu0
          %v3202 = vadd.f32 0.0, %v3201
          %v3203 = vpop.f32.mrf.mxu0
          %3204 = vmatprep.mubr.f32.mxu0 0.0
          %3205 = vmatmul.mubr.f32.gmra.mxu0 %v3013
          %v3206 = vpop.f32.mrf.mxu0
          %v3207 = vadd.f32 0.0, %v3206
          %v3208 = vpop.f32.mrf.mxu0
          %3209 = vmatprep.mubr.f32.mxu0 0.0
          %3210 = vmatmul.mubr.f32.gmra.mxu0 %v3016
          %v3211 = vpop.f32.mrf.mxu0
          %v3212 = vadd.f32 0.0, %v3211
          %v3213 = vpop.f32.mrf.mxu0
          %3214 = vmatprep.mubr.f32.mxu0 0.0
          %3215 = vmatmul.mubr.f32.gmra.mxu0 %v3019
          %v3216 = vpop.f32.mrf.mxu0
          %v3217 = vadd.f32 0.0, %v3216
          %v3218 = vpop.f32.mrf.mxu0
          %3219 = vmatprep.mubr.f32.mxu0 0.0
          %3220 = vmatmul.mubr.f32.gmra.mxu0 %v3022
          %v3221 = vpop.f32.mrf.mxu0
          %v3222 = vadd.f32 0.0, %v3221
          %v3223 = vpop.f32.mrf.mxu0
          %3224 = vmatprep.mubr.f32.mxu0 0.0
          %3225 = vmatmul.mubr.f32.gmra.mxu0 %v3025
          %v3226 = vpop.f32.mrf.mxu0
          %v3227 = vadd.f32 0.0, %v3226
          %v3228 = vpop.f32.mrf.mxu0
          %3229 = vmatprep.mubr.f32.mxu0 0.0
          %3230 = vmatmul.mubr.f32.gmra.mxu0 %v3028
          %v3231 = vpop.f32.mrf.mxu0
          %v3232 = vadd.f32 0.0, %v3231
          %v3233 = vpop.f32.mrf.mxu0
          %3234 = vmatprep.mubr.f32.mxu0 0.0
          %3235 = vmatmul.mubr.f32.gmra.mxu0 %v3031
          %v3236 = vpop.f32.mrf.mxu0
          %v3237 = vadd.f32 0.0, %v3236
          %v3238 = vpop.f32.mrf.mxu0
          %3239 = vmatprep.mubr.f32.mxu0 0.0
          %3240 = vmatmul.mubr.f32.gmra.mxu0 %v3034
          %v3241 = vpop.f32.mrf.mxu0
          %v3242 = vadd.f32 0.0, %v3241
          %v3243 = vpop.f32.mrf.mxu0
          %3244 = vmatprep.mubr.f32.mxu0 0.0
          %3245 = vmatmul.mubr.f32.gmra.mxu0 %v3037
          %v3246 = vpop.f32.mrf.mxu0
          %v3247 = vadd.f32 0.0, %v3246
          %v3248 = vpop.f32.mrf.mxu0
          %3249 = vmatprep.mubr.f32.mxu0 0.0
          %3250 = vmatmul.mubr.f32.gmra.mxu0 %v3040
          %v3251 = vpop.f32.mrf.mxu0
          %v3252 = vadd.f32 0.0, %v3251
          %v3253 = vpop.f32.mrf.mxu0
          %3254 = vmatprep.mubr.f32.mxu0 0.0
          %3255 = vmatmul.mubr.f32.gmra.mxu0 %v3043
          %v3256 = vpop.f32.mrf.mxu0
          %v3257 = vadd.f32 0.0, %v3256
          %v3258 = vpop.f32.mrf.mxu0
          %3259 = vmatprep.mubr.f32.mxu0 0.0
          %3260 = vmatmul.mubr.f32.gmra.mxu0 %v3046
          %v3261 = vpop.f32.mrf.mxu0
          %v3262 = vadd.f32 0.0, %v3261
          %v3263 = vpop.f32.mrf.mxu0
          %3264 = vmatprep.mubr.f32.mxu0 0.0
          %3265 = vmatmul.mubr.f32.gmra.mxu0 %v3049
          %v3266 = vpop.f32.mrf.mxu0
          %v3267 = vadd.f32 0.0, %v3266
          %v3268 = vpop.f32.mrf.mxu0
          %3269 = vmatprep.mubr.f32.mxu0 0.0
          %3270 = vmatmul.mubr.f32.gmra.mxu0 %v3052
          %v3271 = vpop.f32.mrf.mxu0
          %v3272 = vadd.f32 0.0, %v3271
          %v3273 = vpop.f32.mrf.mxu0
          %3274 = vmatprep.mubr.f32.mxu0 0.0
          %3275 = vmatmul.mubr.f32.gmra.mxu0 %v3055
          %v3276 = vpop.f32.mrf.mxu0
          %v3277 = vadd.f32 0.0, %v3276
          %v3278 = vpop.f32.mrf.mxu0
          %3279 = vmatprep.mubr.f32.mxu0 0.0
          %3280 = vmatmul.mubr.f32.gmra.mxu0 %v3058
          %v3281 = vpop.f32.mrf.mxu0
          %v3282 = vadd.f32 0.0, %v3281
          %v3283 = vpop.f32.mrf.mxu0
          %3284 = vdwg.mxu0
          %v3285 = vld [vmem:[%s10] sm:$0xff]
          %v3286 = vld [vmem:[%s10 + $0x8] sm:$0xff]
          %v3287 = vld [vmem:[%s10 + $0x10] sm:$0xff]
          %v3288 = vld [vmem:[%s10 + $0x18] sm:$0xff]
          %v3289 = vld [vmem:[%s10 + $0x20] sm:$0xff]
          %v3290 = vld [vmem:[%s10 + $0x28] sm:$0xff]
          %v3291 = vld [vmem:[%s10 + $0x30] sm:$0xff]
          %v3292 = vld [vmem:[%s10 + $0x38] sm:$0xff]
          %v3293 = vld [vmem:[%s10 + $0x40] sm:$0xff]
          %v3294 = vld [vmem:[%s10 + $0x48] sm:$0xff]
          %v3295 = vld [vmem:[%s10 + $0x50] sm:$0xff]
          %v3296 = vld [vmem:[%s10 + $0x58] sm:$0xff]
          %v3297 = vld [vmem:[%s10 + $0x60] sm:$0xff]
          %v3298 = vld [vmem:[%s10 + $0x68] sm:$0xff]
          %v3299 = vld [vmem:[%s10 + $0x70] sm:$0xff]
          %v3300 = vld [vmem:[%s10 + $0x78] sm:$0xff]
          %v3301 = vld [vmem:[%s11] sm:$0x1]
          %v3303 = vlaneseq
          %v3304 = vshrl.u32 %v3303, 7
          %v3305 = vsub.s32 0, %v3304
          %v3306 = vrot.slane %v3301, %v3305
          %3308 = vmatprep.subr.mxu0 0.0
          %3309 = vmatpush1.msra.mxu0 %v3300
          %3310 = vmatprep.subr.mxu0 0.0
          %3311 = vmatpush1.msra.mxu0 %v3299
          %3312 = vmatprep.subr.mxu0 0.0
          %3313 = vmatpush1.msra.mxu0 %v3298
          %3314 = vmatprep.subr.mxu0 0.0
          %3315 = vmatpush1.msra.mxu0 %v3297
          %3316 = vmatprep.subr.mxu0 0.0
          %3317 = vmatpush1.msra.mxu0 %v3296
          %3318 = vmatprep.subr.mxu0 0.0
          %3319 = vmatpush1.msra.mxu0 %v3295
          %3320 = vmatprep.subr.mxu0 0.0
          %3321 = vmatpush1.msra.mxu0 %v3294
          %3322 = vmatprep.subr.mxu0 0.0
          %3323 = vmatpush1.msra.mxu0 %v3293
          %3324 = vmatprep.subr.mxu0 0.0
          %3325 = vmatpush1.msra.mxu0 %v3292
          %3326 = vmatprep.subr.mxu0 0.0
          %3327 = vmatpush1.msra.mxu0 %v3291
          %3328 = vmatprep.subr.mxu0 0.0
          %3329 = vmatpush1.msra.mxu0 %v3290
          %3330 = vmatprep.subr.mxu0 0.0
          %3331 = vmatpush1.msra.mxu0 %v3289
          %3332 = vmatprep.subr.mxu0 0.0
          %3333 = vmatpush1.msra.mxu0 %v3288
          %3334 = vmatprep.subr.mxu0 0.0
          %3335 = vmatpush1.msra.mxu0 %v3287
          %3336 = vmatprep.subr.mxu0 0.0
          %3337 = vmatpush1.msra.mxu0 %v3286
          %3338 = vmatprep.subr.mxu0 0.0
          %3339 = vmatpush1.msra.mxu0 %v3285
          %3340 = vmatprep.subr.mxu0 0.0
          %3341 = vmatpush2.msra.mxu0 0.0
          %3342 = vmatprep.subr.mxu0 0.0
          %3343 = vmatpush2.msra.mxu0 0.0
          %3344 = vmatprep.subr.mxu0 0.0
          %3345 = vmatpush2.msra.mxu0 0.0
          %3346 = vmatprep.subr.mxu0 0.0
          %3347 = vmatpush2.msra.mxu0 0.0
          %3348 = vmatprep.subr.mxu0 0.0
          %3349 = vmatpush2.msra.mxu0 0.0
          %3350 = vmatprep.subr.mxu0 0.0
          %3351 = vmatpush2.msra.mxu0 0.0
          %3352 = vmatprep.subr.mxu0 0.0
          %3353 = vmatpush2.msra.mxu0 0.0
          %3354 = vmatprep.subr.mxu0 0.0
          %3355 = vmatpush2.msra.mxu0 0.0
          %3356 = vmatprep.subr.mxu0 0.0
          %3357 = vmatpush2.msra.mxu0 0.0
          %3358 = vmatprep.subr.mxu0 0.0
          %3359 = vmatpush2.msra.mxu0 0.0
          %3360 = vmatprep.subr.mxu0 0.0
          %3361 = vmatpush2.msra.mxu0 0.0
          %3362 = vmatprep.subr.mxu0 0.0
          %3363 = vmatpush2.msra.mxu0 0.0
          %3364 = vmatprep.subr.mxu0 0.0
          %3365 = vmatpush2.msra.mxu0 0.0
          %3366 = vmatprep.subr.mxu0 0.0
          %3367 = vmatpush2.msra.mxu0 0.0
          %3368 = vmatprep.subr.mxu0 0.0
          %3369 = vmatpush2.msra.mxu0 0.0
          %3370 = vmatprep.subr.mxu0 0.0
          %3371 = vmatpush2.msra.mxu0 0.0
          %3372 = vmatprep.mubr.f32.mxu0 0.0
          %3373 = vmatmul.mubr.f32.gmra.mxu0 %v3127
          %v3374 = vpop.f32.mrf.mxu0
          %v3375 = vadd.f32 %v3306, %v3374
          %v3376 = vpop.f32.mrf.mxu0
          %3377 = vmatprep.mubr.f32.mxu0 0.0
          %3378 = vmatmul.mubr.f32.gmra.mxu0 %v3132
          %v3379 = vpop.f32.mrf.mxu0
          %v3380 = vadd.f32 %v3306, %v3379
          %v3381 = vpop.f32.mrf.mxu0
          %3382 = vmatprep.mubr.f32.mxu0 0.0
          %3383 = vmatmul.mubr.f32.gmra.mxu0 %v3137
          %v3384 = vpop.f32.mrf.mxu0
          %v3385 = vadd.f32 %v3306, %v3384
          %v3386 = vpop.f32.mrf.mxu0
          %3387 = vmatprep.mubr.f32.mxu0 0.0
          %3388 = vmatmul.mubr.f32.gmra.mxu0 %v3142
          %v3389 = vpop.f32.mrf.mxu0
          %v3390 = vadd.f32 %v3306, %v3389
          %v3391 = vpop.f32.mrf.mxu0
          %3392 = vmatprep.mubr.f32.mxu0 0.0
          %3393 = vmatmul.mubr.f32.gmra.mxu0 %v3147
          %v3394 = vpop.f32.mrf.mxu0
          %v3395 = vadd.f32 %v3306, %v3394
          %v3396 = vpop.f32.mrf.mxu0
          %3397 = vmatprep.mubr.f32.mxu0 0.0
          %3398 = vmatmul.mubr.f32.gmra.mxu0 %v3152
          %v3399 = vpop.f32.mrf.mxu0
          %v3400 = vadd.f32 %v3306, %v3399
          %v3401 = vpop.f32.mrf.mxu0
          %3402 = vmatprep.mubr.f32.mxu0 0.0
          %3403 = vmatmul.mubr.f32.gmra.mxu0 %v3157
          %v3404 = vpop.f32.mrf.mxu0
          %v3405 = vadd.f32 %v3306, %v3404
          %v3406 = vpop.f32.mrf.mxu0
          %3407 = vmatprep.mubr.f32.mxu0 0.0
          %3408 = vmatmul.mubr.f32.gmra.mxu0 %v3162
          %v3409 = vpop.f32.mrf.mxu0
          %v3410 = vadd.f32 %v3306, %v3409
          %v3411 = vpop.f32.mrf.mxu0
          %3412 = vmatprep.mubr.f32.mxu0 0.0
          %3413 = vmatmul.mubr.f32.gmra.mxu0 %v3167
          %v3414 = vpop.f32.mrf.mxu0
          %v3415 = vadd.f32 %v3306, %v3414
          %v3416 = vpop.f32.mrf.mxu0
          %3417 = vmatprep.mubr.f32.mxu0 0.0
          %3418 = vmatmul.mubr.f32.gmra.mxu0 %v3172
          %v3419 = vpop.f32.mrf.mxu0
          %v3420 = vadd.f32 %v3306, %v3419
          %v3421 = vpop.f32.mrf.mxu0
          %3422 = vmatprep.mubr.f32.mxu0 0.0
          %3423 = vmatmul.mubr.f32.gmra.mxu0 %v3177
          %v3424 = vpop.f32.mrf.mxu0
          %v3425 = vadd.f32 %v3306, %v3424
          %v3426 = vpop.f32.mrf.mxu0
          %3427 = vmatprep.mubr.f32.mxu0 0.0
          %3428 = vmatmul.mubr.f32.gmra.mxu0 %v3182
          %v3429 = vpop.f32.mrf.mxu0
          %v3430 = vadd.f32 %v3306, %v3429
          %v3431 = vpop.f32.mrf.mxu0
          %3432 = vmatprep.mubr.f32.mxu0 0.0
          %3433 = vmatmul.mubr.f32.gmra.mxu0 %v3187
          %v3434 = vpop.f32.mrf.mxu0
          %v3435 = vadd.f32 %v3306, %v3434
          %v3436 = vpop.f32.mrf.mxu0
          %3437 = vmatprep.mubr.f32.mxu0 0.0
          %3438 = vmatmul.mubr.f32.gmra.mxu0 %v3192
          %v3439 = vpop.f32.mrf.mxu0
          %v3440 = vadd.f32 %v3306, %v3439
          %v3441 = vpop.f32.mrf.mxu0
          %3442 = vmatprep.mubr.f32.mxu0 0.0
          %3443 = vmatmul.mubr.f32.gmra.mxu0 %v3197
          %v3444 = vpop.f32.mrf.mxu0
          %v3445 = vadd.f32 %v3306, %v3444
          %v3446 = vpop.f32.mrf.mxu0
          %3447 = vmatprep.mubr.f32.mxu0 0.0
          %3448 = vmatmul.mubr.f32.gmra.mxu0 %v3202
          %v3449 = vpop.f32.mrf.mxu0
          %v3450 = vadd.f32 %v3306, %v3449
          %v3451 = vpop.f32.mrf.mxu0
          %3452 = vmatprep.mubr.f32.mxu0 0.0
          %3453 = vmatmul.mubr.f32.gmra.mxu0 %v3207
          %v3454 = vpop.f32.mrf.mxu0
          %v3455 = vadd.f32 %v3306, %v3454
          %v3456 = vpop.f32.mrf.mxu0
          %3457 = vmatprep.mubr.f32.mxu0 0.0
          %3458 = vmatmul.mubr.f32.gmra.mxu0 %v3212
          %v3459 = vpop.f32.mrf.mxu0
          %v3460 = vadd.f32 %v3306, %v3459
          %v3461 = vpop.f32.mrf.mxu0
          %3462 = vmatprep.mubr.f32.mxu0 0.0
          %3463 = vmatmul.mubr.f32.gmra.mxu0 %v3217
          %v3464 = vpop.f32.mrf.mxu0
          %v3465 = vadd.f32 %v3306, %v3464
          %v3466 = vpop.f32.mrf.mxu0
          %3467 = vmatprep.mubr.f32.mxu0 0.0
          %3468 = vmatmul.mubr.f32.gmra.mxu0 %v3222
          %v3469 = vpop.f32.mrf.mxu0
          %v3470 = vadd.f32 %v3306, %v3469
          %v3471 = vpop.f32.mrf.mxu0
          %3472 = vmatprep.mubr.f32.mxu0 0.0
          %3473 = vmatmul.mubr.f32.gmra.mxu0 %v3227
          %v3474 = vpop.f32.mrf.mxu0
          %v3475 = vadd.f32 %v3306, %v3474
          %v3476 = vpop.f32.mrf.mxu0
          %3477 = vmatprep.mubr.f32.mxu0 0.0
          %3478 = vmatmul.mubr.f32.gmra.mxu0 %v3232
          %v3479 = vpop.f32.mrf.mxu0
          %v3480 = vadd.f32 %v3306, %v3479
          %v3481 = vpop.f32.mrf.mxu0
          %3482 = vmatprep.mubr.f32.mxu0 0.0
          %3483 = vmatmul.mubr.f32.gmra.mxu0 %v3237
          %v3484 = vpop.f32.mrf.mxu0
          %v3485 = vadd.f32 %v3306, %v3484
          %v3486 = vpop.f32.mrf.mxu0
          %3487 = vmatprep.mubr.f32.mxu0 0.0
          %3488 = vmatmul.mubr.f32.gmra.mxu0 %v3242
          %v3489 = vpop.f32.mrf.mxu0
          %v3490 = vadd.f32 %v3306, %v3489
          %v3491 = vpop.f32.mrf.mxu0
          %3492 = vmatprep.mubr.f32.mxu0 0.0
          %3493 = vmatmul.mubr.f32.gmra.mxu0 %v3247
          %v3494 = vpop.f32.mrf.mxu0
          %v3495 = vadd.f32 %v3306, %v3494
          %v3496 = vpop.f32.mrf.mxu0
          %3497 = vmatprep.mubr.f32.mxu0 0.0
          %3498 = vmatmul.mubr.f32.gmra.mxu0 %v3252
          %v3499 = vpop.f32.mrf.mxu0
          %v3500 = vadd.f32 %v3306, %v3499
          %v3501 = vpop.f32.mrf.mxu0
          %3502 = vmatprep.mubr.f32.mxu0 0.0
          %3503 = vmatmul.mubr.f32.gmra.mxu0 %v3257
          %v3504 = vpop.f32.mrf.mxu0
          %v3505 = vadd.f32 %v3306, %v3504
          %v3506 = vpop.f32.mrf.mxu0
          %3507 = vmatprep.mubr.f32.mxu0 0.0
          %3508 = vmatmul.mubr.f32.gmra.mxu0 %v3262
          %v3509 = vpop.f32.mrf.mxu0
          %v3510 = vadd.f32 %v3306, %v3509
          %v3511 = vpop.f32.mrf.mxu0
          %3512 = vmatprep.mubr.f32.mxu0 0.0
          %3513 = vmatmul.mubr.f32.gmra.mxu0 %v3267
          %v3514 = vpop.f32.mrf.mxu0
          %v3515 = vadd.f32 %v3306, %v3514
          %v3516 = vpop.f32.mrf.mxu0
          %3517 = vmatprep.mubr.f32.mxu0 0.0
          %3518 = vmatmul.mubr.f32.gmra.mxu0 %v3272
          %v3519 = vpop.f32.mrf.mxu0
          %v3520 = vadd.f32 %v3306, %v3519
          %v3521 = vpop.f32.mrf.mxu0
          %3522 = vmatprep.mubr.f32.mxu0 0.0
          %3523 = vmatmul.mubr.f32.gmra.mxu0 %v3277
          %v3524 = vpop.f32.mrf.mxu0
          %v3525 = vadd.f32 %v3306, %v3524
          %v3526 = vpop.f32.mrf.mxu0
          %3527 = vmatprep.mubr.f32.mxu0 0.0
          %3528 = vmatmul.mubr.f32.gmra.mxu0 %v3282
          %v3529 = vpop.f32.mrf.mxu0
          %v3530 = vadd.f32 %v3306, %v3529
          %v3531 = vpop.f32.mrf.mxu0
          %3532 = vdwg.mxu0
          %3533 = vst [vmem:[%s483] sm:$0xff] %v3375
          %3534 = vst [vmem:[%s483 + $0x8] sm:$0xff] %v3380
          %3535 = vst [vmem:[%s483 + $0x10] sm:$0xff] %v3385
          %3536 = vst [vmem:[%s483 + $0x18] sm:$0xff] %v3390
          %3537 = vst [vmem:[%s483 + $0x20] sm:$0xff] %v3395
          %3538 = vst [vmem:[%s483 + $0x28] sm:$0xff] %v3400
          %3539 = vst [vmem:[%s483 + $0x30] sm:$0xff] %v3405
          %3540 = vst [vmem:[%s483 + $0x38] sm:$0xff] %v3410
          %3541 = vst [vmem:[%s483 + $0x40] sm:$0xff] %v3415
          %3542 = vst [vmem:[%s483 + $0x48] sm:$0xff] %v3420
          %3543 = vst [vmem:[%s483 + $0x50] sm:$0xff] %v3425
          %3544 = vst [vmem:[%s483 + $0x58] sm:$0xff] %v3430
          %3545 = vst [vmem:[%s483 + $0x60] sm:$0xff] %v3435
          %3546 = vst [vmem:[%s483 + $0x68] sm:$0xff] %v3440
          %3547 = vst [vmem:[%s483 + $0x70] sm:$0xff] %v3445
          %3548 = vst [vmem:[%s483 + $0x78] sm:$0xff] %v3450
          %3549 = vst [vmem:[%s483 + $0x80] sm:$0xff] %v3455
          %3550 = vst [vmem:[%s483 + $0x88] sm:$0xff] %v3460
          %3551 = vst [vmem:[%s483 + $0x90] sm:$0xff] %v3465
          %3552 = vst [vmem:[%s483 + $0x98] sm:$0xff] %v3470
          %3553 = vst [vmem:[%s483 + $0xa0] sm:$0xff] %v3475
          %3554 = vst [vmem:[%s483 + $0xa8] sm:$0xff] %v3480
          %3555 = vst [vmem:[%s483 + $0xb0] sm:$0xff] %v3485
          %3556 = vst [vmem:[%s483 + $0xb8] sm:$0xff] %v3490
          %3557 = vst [vmem:[%s483 + $0xc0] sm:$0xff] %v3495
          %3558 = vst [vmem:[%s483 + $0xc8] sm:$0xff] %v3500
          %3559 = vst [vmem:[%s483 + $0xd0] sm:$0xff] %v3505
          %3560 = vst [vmem:[%s483 + $0xd8] sm:$0xff] %v3510
          %3561 = vst [vmem:[%s483 + $0xe0] sm:$0xff] %v3515
          %3562 = vst [vmem:[%s483 + $0xe8] sm:$0xff] %v3520
          %3563 = vst [vmem:[%s483 + $0xf0] sm:$0xff] %v3525
          %3564 = vst [vmem:[%s483 + $0xf8] sm:$0xff] %v3530
        $region108: #{tpu_custom_call.1} parent=67 // pred_fallthru
          _
        %s3565 = sand.u32 %s329, 1
        %s3566 = scalar_lea.sflag [#allocation13], %s3565
        %s3567 = sand.u32 %s329, 1
        %s3568 = smul.addr %s3567, 256
        %s3569 = scalar_lea.vmem [#allocation12], %s3568
        // Predicated region
        $region109: #{tpu_custom_call.1} parent=67 // pred_check
          %p3570 = pneg %p339
        $region110: #{tpu_custom_call.1} parent=67 // pred_check_branch
          %3572 = sbr.rel (%p3570) target = $region112
        $region111: #{tpu_custom_call.1} parent=67 // pred_region
          %p3573 = scmp.eq.s32.totalorder %s30, 4
          %s3574 = scalar_select %p3573, %s31, 0
          %s3575 = smul.u32 32, %s3574
          %s3577 = ssub.s32 4096, 4096
          %3578 = vsyncadd %s3566, %s3577
          %s3579 = smul.addr %s3575, 128
          %s3580 = scalar_lea.hbm %s12, %s3579
          %s3581 = sshll.u32 %s3569, 4
          %s3582 = int_to_ptr.vmem [resolvable:$true] %s3581
          %3587 = dma.vmem_to_hbm [thread:$0]  %s3582, 4096, %s3580, %s3566, 128, 128, 8
        $region112: #{tpu_custom_call.1} parent=67 // pred_fallthru
          _
      $region68: #{tpu_custom_call.1} parent=5 // pred_fallthru
        _
      %p3588 = scmp.le.s32.totalorder 2, %s21
      // Predicated region
      $region113: #{tpu_custom_call.1} parent=5 // pred_check
        %p3589 = pneg %p3588
      $region114: #{tpu_custom_call.1} parent=5 // pred_check_branch
        %3591 = sbr.rel (%p3589) target = $region116
      $region115: #{tpu_custom_call.1} parent=5 // pred_region
        %s3592 = ssub.s32 %s21, 2
        // Predicated region
        $region117: #{tpu_custom_call.1} parent=115 // pred_check
          %p3593 = pneg %p345
        $region118: #{tpu_custom_call.1} parent=115 // pred_check_branch
          %3595 = sbr.rel (%p3593) target = $region120
        $region119: #{tpu_custom_call.1} parent=115 // pred_region
          %s3596 = sand.u32 %s330, 1
          %s3597 = scalar_lea.sflag [#allocation13], %s3596
          %s3598 = sand.u32 %s330, 1
          %s3599 = smul.addr %s3598, 256
          %s3600 = scalar_lea.vmem [#allocation12], %s3599
          %3601 = dma.done %s3597, 4096
        $region120: #{tpu_custom_call.1} parent=115 // pred_fallthru
          _
      $region116: #{tpu_custom_call.1} parent=5 // pred_fallthru
        _
    $region6: #{tpu_custom_call.1} parent=1 // loop_footer
      %s25 = sadd.s32 1, %s21
    $region7: #{tpu_custom_call.1} parent=1 // loop_footer_branch
      %20 = sbr.rel target = $region3
    $region8: #{tpu_custom_call.1} parent=1 // loop_exit
      _
    %3602 = vsyncpa [#allocation13], 1
    %s3603 = scalar_lea.sflag [#allocation13], 1
    %3604 = vsyncpa %s3603, 1

</llo_original>
